<compile_context>
chip_gen: v5e
topology: v5e:2x2
jax: 0.10.0
libtpu: 0.0.40
codegen_flags: <defaults>
</compile_context>

<pallas_src>
import functools

import jax
import jax.numpy as jnp
import numpy as np
from jax import lax
from jax.experimental import pallas as pl
from jax.experimental.pallas import tpu as pltpu

F_NODE = 4     # node feature width
F_EDGE = 32    # edge feature width
HIDDEN = 32
D_OUT = 2


def _round_up(v, m):
    return ((v + m - 1) // m) * m


# ----------------------------------------------------------------------------
# Fused Pallas kernel
# ----------------------------------------------------------------------------
def _node_encoder_kernel(
    xr_ref, ea_ref, col_ref, xn_ref,
    w1a1_ref, w1b1_ref, b11_ref, w21_ref, b21_ref,
    w1a2_ref, w1b2_ref, b12_ref, w22_ref, b22_ref,
    out_ref,
    acc_ref,
    *, approx_recip: bool,
):
    ni = pl.program_id(0)                      # node tile (parallel)
    ei = pl.program_id(1)                      # edge tile (arbitrary / reduction)
    tile_n = acc_ref.shape[0]
    hid = acc_ref.shape[1] - 1                 # last accumulator column = counts
    mxu_dtype = w1a1_ref.dtype

    @pl.when(ei == 0)
    def _init():
        acc_ref[...] = jnp.zeros_like(acc_ref)

    # node_mlp_1: relu(cat([x[row], edge_attr]) @ W1 + b1) @ W2   (b21 hoisted to
    # finalize; W1 split so the concat is never materialized).  MXU operands are
    # mxu_dtype; accumulation and elementwise math are f32.
    h = jnp.dot(xr_ref[...], w1a1_ref[...], preferred_element_type=jnp.float32)
    h = h + jnp.dot(ea_ref[...], w1b1_ref[...], preferred_element_type=jnp.float32)
    h = jnp.maximum(h + b11_ref[...], 0.0)
    h = jnp.dot(h.astype(mxu_dtype), w21_ref[...],
                preferred_element_type=jnp.float32)

    # scatter_mean accumulation against THIS node tile only: transposed one-hot
    # (tile_n, tile_e) matmul on the MXU.  Counts folded in as a ones column.
    te = h.shape[0]
    seg_ids = lax.broadcasted_iota(jnp.int32, (tile_n, te), 0) + ni * tile_n
    ind_t = (col_ref[...] == seg_ids).astype(mxu_dtype)            # (tile_n, tile_e)
    h_aug = jnp.concatenate(
        [h.astype(mxu_dtype), jnp.ones((te, 1), mxu_dtype)], axis=1)   # (tile_e, hid+1)
    acc_ref[...] += jnp.dot(ind_t, h_aug, preferred_element_type=jnp.float32)

    @pl.when(ei == pl.num_programs(1) - 1)
    def _finalize():
        sums = acc_ref[:, 0:hid]                                    # (tile_n, hid)
        cnt = acc_ref[:, hid:hid + 1]                               # (tile_n, 1)
        inv = pl.reciprocal(jnp.maximum(cnt, 1.0), approx=approx_recip)
        # hoisted b21, masked so zero-degree nodes keep agg == 0 (scatter_mean).
        agg = sums * inv + jnp.where(cnt > 0.0, b21_ref[...], 0.0)
        # node_mlp_2 with split first-layer weights (no concat of [x, agg]); f32.
        g = jnp.dot(xn_ref[...], w1a2_ref[...], preferred_element_type=jnp.float32)
        g = g + jnp.dot(agg, w1b2_ref[...], preferred_element_type=jnp.float32)
        g = jnp.maximum(g + b12_ref[...], 0.0)
        out_ref[...] = (jnp.dot(g, w22_ref[...],
                                preferred_element_type=jnp.float32) + b22_ref[...])


def node_encoder_forward(split_params, x, edge_index, edge_attr, u=None,
                         batch=None, *, tile_e=1024, tile_n=None,
                         mxu_dtype=jnp.bfloat16):
    """Pallas NodeEncoder forward.  `u`/`batch` accepted for API parity (unused)."""
    del u, batch
    row, col = edge_index[0], edge_index[1]
    n, f_node = x.shape
    e_num, f_edge = edge_attr.shape

    (w1a1, w1b1, b11, w21, b21, w1a2, w1b2, b12, w22, b22) = split_params
    d_hid = w21.shape[1]
    d_out = w22.shape[1]

    # ---- node tiling: 2 tiles by default (v7x dual-TC parallel axis), capped at
    # 1024 rows so the (tile_n, tile_e) indicator stays bounded for large N.
    if tile_n is None:
        n8 = _round_up(max(n, 8), 8)
        tile_n = min(1024, max(8, _round_up(-(-n8 // 2), 8)))
    n_pad = _round_up(max(n, tile_n), tile_n)
    num_node_tiles = n_pad // tile_n

    # ---- edge tiling / padding (once).  Padded edges carry segment id == n_pad,
    # which matches no node row in any tile -> contributes nothing to sums/counts.
    e_pad = _round_up(max(e_num, tile_e), tile_e)
    pad_e = e_pad - e_num

    # x[row] gather stays as JAX glue (E x 4 values); no concat afterwards.
    xr = jnp.pad(jnp.take(x, row, axis=0), ((0, pad_e), (0, 0))).astype(mxu_dtype)
    ea = jnp.pad(edge_attr, ((0, pad_e), (0, 0))).astype(mxu_dtype)
    col_ids = jnp.pad(col.astype(jnp.int32), (0, pad_e),
                      constant_values=n_pad).reshape(1, e_pad)
    xn = jnp.pad(x, ((0, n_pad - n), (0, 0)))            # f32, used only at finalize

    # Edge-path (MXU-facing) weights in mxu_dtype; biases & finalize weights in f32.
    w1a1c = w1a1.astype(mxu_dtype)
    w1b1c = w1b1.astype(mxu_dtype)
    w21c = w21.astype(mxu_dtype)

    # Generation-split VMEM budget (~3/4 of physical, capped at 100 MiB).
    try:
        cap = pltpu.get_tpu_info().vmem_capacity_bytes
        vmem_limit = int(min((cap * 3) // 4, 100 * 1024 * 1024))
    except Exception:
        vmem_limit = 64 * 1024 * 1024

    grid = (num_node_tiles, e_pad // tile_e)
    full = lambda shape: pl.BlockSpec(shape, lambda ni, ei: (0, 0))

    itemsize = jnp.dtype(mxu_dtype).itemsize
    flops = int(
        2 * num_node_tiles * e_pad * d_hid * (f_node + f_edge + d_hid)
        + 2 * n_pad * e_pad * (d_hid + 1)
        + 2 * n_pad * (d_hid * (f_node + d_hid) + d_hid * d_out))
    bytes_accessed = int(
        num_node_tiles * e_pad * ((f_node + f_edge) * itemsize + 4)
        + n_pad * (f_node + d_out) * 4)

    out = pl.pallas_call(
        functools.partial(
            _node_encoder_kernel,
            approx_recip=(jnp.dtype(mxu_dtype) != jnp.dtype(jnp.float32))),
        out_shape=jax.ShapeDtypeStruct((n_pad, d_out), jnp.float32),
        grid=grid,
        in_specs=[
            pl.BlockSpec((tile_e, f_node), lambda ni, ei: (ei, 0)),   # x[row] tile
            pl.BlockSpec((tile_e, f_edge), lambda ni, ei: (ei, 0)),   # edge_attr tile
            pl.BlockSpec((1, tile_e), lambda ni, ei: (0, ei)),        # col segment ids
            pl.BlockSpec((tile_n, f_node), lambda ni, ei: (ni, 0)),   # node features
            full(w1a1c.shape), full(w1b1c.shape), full(b11.shape),
            full(w21c.shape), full(b21.shape),
            full(w1a2.shape), full(w1b2.shape), full(b12.shape),
            full(w22.shape), full(b22.shape),
        ],
        out_specs=pl.BlockSpec((tile_n, d_out), lambda ni, ei: (ni, 0)),
        scratch_shapes=[
            pltpu.VMEM((tile_n, d_hid + 1), jnp.float32),   # [segment sums | counts]
        ],
        compiler_params=pltpu.CompilerParams(
            dimension_semantics=("parallel", "arbitrary"),
            vmem_limit_bytes=vmem_limit,
        ),
        cost_estimate=pl.CostEstimate(
            flops=flops, transcendentals=0, bytes_accessed=bytes_accessed),
    )(xr, ea, col_ids, xn,
      w1a1c, w1b1c, b11, w21c, b21,
      w1a2, w1b2, b12, w22, b22)

    return out[:n]


# ----------------------------------------------------------------------------
# Parameters (deterministic, PyTorch-Linear-style uniform init)
# ----------------------------------------------------------------------------
def _linear_params(key, din, dout):
    k1, k2 = jax.random.split(key)
    bound = 1.0 / np.sqrt(din)
    w = jax.random.uniform(k1, (din, dout), jnp.float32, -bound, bound)
    b = jax.random.uniform(k2, (1, dout), jnp.float32, -bound, bound)
    return w, b


def init_node_encoder_params(key):
    k1, k2, k3, k4 = jax.random.split(key, 4)
    w1_1, b1_1 = _linear_params(k1, F_NODE + F_EDGE, HIDDEN)   # node_mlp_1 Lin(36,32)
    w2_1, b2_1 = _linear_params(k2, HIDDEN, HIDDEN)            # node_mlp_1 Lin(32,32)
    w1_2, b1_2 = _linear_params(k3, F_NODE + HIDDEN, HIDDEN)   # node_mlp_2 Lin(36,32)
    w2_2, b2_2 = _linear_params(k4, HIDDEN, D_OUT)             # node_mlp_2 Lin(32,2)
    full = (w1_1, b1_1, w2_1, b2_1, w1_2, b1_2, w2_2, b2_2)
    split = (w1_1[:F_NODE], w1_1[F_NODE:], b1_1, w2_1, b2_1,
             w1_2[:F_NODE], w1_2[F_NODE:], b1_2, w2_2, b2_2)
    return full, split


# ----------------------------------------------------------------------------
# Pure-JAX reference (silent correctness check)
# ----------------------------------------------------------------------------
def node_encoder_ref(full_params, x, edge_index, edge_attr):
    w1_1, b1_1, w2_1, b2_1, w1_2, b1_2, w2_2, b2_2 = full_params
    row, col = edge_index[0], edge_index[1]
    n = x.shape[0]
    out = jnp.concatenate([jnp.take(x, row, axis=0), edge_attr], axis=1)
    out = jnp.maximum(out @ w1_1 + b1_1, 0.0) @ w2_1 + b2_1
    sums = jax.ops.segment_sum(out, col, n)
    cnt = jax.ops.segment_sum(jnp.ones((out.shape[0],), jnp.float32), col, n)
    agg = sums / jnp.maximum(cnt, 1.0)[:, None]
    out = jnp.concatenate([x, agg], axis=1)
    return jnp.maximum(out @ w1_2 + b1_2, 0.0) @ w2_2 + b2_2


# ----------------------------------------------------------------------------
if __name__ == "__main__":
    N, E, B = 16, 24, 2
    key = jax.random.PRNGKey(0)
    kx, ke, kei, ku, kp = jax.random.split(key, 5)

    x = jax.random.normal(kx, (N, F_NODE), jnp.float32)
    edge_attr = jax.random.normal(ke, (E, F_EDGE), jnp.float32)
    edge_index = jax.random.randint(kei, (2, E), 0, N, dtype=jnp.int32)
    u = jax.random.normal(ku, (B, HIDDEN), jnp.float32)        # unused by NodeEncoder
    batch = jnp.concatenate([jnp.zeros(N // 2, jnp.int32),
                             jnp.ones(N - N // 2, jnp.int32)])  # unused by NodeEncoder

    full_params, split_params = init_node_encoder_params(kp)
    ref = node_encoder_ref(full_params, x, edge_index, edge_attr)

    # Production path: bf16 MXU operands, f32 accumulation (looser tolerance).
    fwd_bf16 = jax.jit(functools.partial(node_encoder_forward,
                                         mxu_dtype=jnp.bfloat16))
    out_bf16 = jax.block_until_ready(
        fwd_bf16(split_params, x, edge_index, edge_attr, u, batch))
    assert out_bf16.shape == (N, D_OUT) and out_bf16.dtype == jnp.float32
    np.testing.assert_allclose(np.asarray(out_bf16), np.asarray(ref),
                               rtol=5e-2, atol=5e-2)

    # Full-f32 MXU path: strict numeric check against the pure-JAX reference.
    fwd_f32 = jax.jit(functools.partial(node_encoder_forward,
                                        mxu_dtype=jnp.float32))
    out_f32 = jax.block_until_ready(
        fwd_f32(split_params, x, edge_index, edge_attr, u, batch))
    np.testing.assert_allclose(np.asarray(out_f32), np.asarray(ref),
                               rtol=1e-4, atol=1e-4)

    print("KERNEL_OK")
</pallas_src>

<mosaic_0001>
module attributes {stable_mosaic.version = 11 : i64} {
  func.func @_node_encoder_kernel(%arg0: i32, %arg1: i32, %arg2: memref<1024x4xbf16, #tpu.memory_space<vmem>>, %arg3: memref<1024x32xbf16, #tpu.memory_space<vmem>>, %arg4: memref<1x1024xi32, #tpu.memory_space<vmem>>, %arg5: memref<8x4xf32, #tpu.memory_space<vmem>>, %arg6: memref<4x32xbf16, #tpu.memory_space<vmem>>, %arg7: memref<32x32xbf16, #tpu.memory_space<vmem>>, %arg8: memref<1x32xf32, #tpu.memory_space<vmem>>, %arg9: memref<32x32xbf16, #tpu.memory_space<vmem>>, %arg10: memref<1x32xf32, #tpu.memory_space<vmem>>, %arg11: memref<4x32xf32, #tpu.memory_space<vmem>>, %arg12: memref<32x32xf32, #tpu.memory_space<vmem>>, %arg13: memref<1x32xf32, #tpu.memory_space<vmem>>, %arg14: memref<32x2xf32, #tpu.memory_space<vmem>>, %arg15: memref<1x2xf32, #tpu.memory_space<vmem>>, %arg16: memref<8x2xf32, #tpu.memory_space<vmem>>, %arg17: memref<8x33xf32, #tpu.memory_space<vmem>>) attributes {dimension_semantics = [#tpu.dimension_semantics<parallel>, #tpu.dimension_semantics<arbitrary>], iteration_bounds = array<i64: 2, 1>, scalar_prefetch = 0 : i64, scratch_operands = 1 : i64, tpu.core_type = #tpu.core_type<tc>, window_params = [{transform_indices = @transform_0, window_bounds = array<i64: 1024, 4>}, {transform_indices = @transform_1, window_bounds = array<i64: 1024, 32>}, {transform_indices = @transform_2, window_bounds = array<i64: 1, 1024>}, {transform_indices = @transform_3, window_bounds = array<i64: 8, 4>}, {pipeline_mode = #tpu.pipeline_mode<synchronous>, transform_indices = @transform_4, window_bounds = array<i64: 4, 32>}, {pipeline_mode = #tpu.pipeline_mode<synchronous>, transform_indices = @transform_5, window_bounds = array<i64: 32, 32>}, {pipeline_mode = #tpu.pipeline_mode<synchronous>, transform_indices = @transform_6, window_bounds = array<i64: 1, 32>}, {pipeline_mode = #tpu.pipeline_mode<synchronous>, transform_indices = @transform_7, window_bounds = array<i64: 32, 32>}, {pipeline_mode = #tpu.pipeline_mode<synchronous>, transform_indices = @transform_8, window_bounds = array<i64: 1, 32>}, {pipeline_mode = #tpu.pipeline_mode<synchronous>, transform_indices = @transform_9, window_bounds = array<i64: 4, 32>}, {pipeline_mode = #tpu.pipeline_mode<synchronous>, transform_indices = @transform_10, window_bounds = array<i64: 32, 32>}, {pipeline_mode = #tpu.pipeline_mode<synchronous>, transform_indices = @transform_11, window_bounds = array<i64: 1, 32>}, {pipeline_mode = #tpu.pipeline_mode<synchronous>, transform_indices = @transform_12, window_bounds = array<i64: 32, 2>}, {pipeline_mode = #tpu.pipeline_mode<synchronous>, transform_indices = @transform_13, window_bounds = array<i64: 1, 2>}, {transform_indices = @transform_14, window_bounds = array<i64: 8, 2>}]} {
    %c0_i32 = arith.constant 0 : i32
    %0 = arith.cmpi eq, %arg1, %c0_i32 : i32
    %1 = arith.extui %0 : i1 to i32
    %c0_i32_0 = arith.constant 0 : i32
    %2 = arith.cmpi ne, %1, %c0_i32_0 : i32
    scf.if %2 {
      %cst_25 = arith.constant 0.000000e+00 : f32
      %38 = vector.broadcast %cst_25 : f32 to vector<8x33xf32>
      %c0_26 = arith.constant 0 : index
      %c0_27 = arith.constant 0 : index
      %39 = vector.load %arg17[%c0_26, %c0_27] : memref<8x33xf32, #tpu.memory_space<vmem>>, vector<8x33xf32>
      tpu.vector_store %arg17[%c0_26, %c0_27], %38 {strides = array<i32>} : memref<8x33xf32, #tpu.memory_space<vmem>>, vector<8x33xf32>,
    } else {
    }
    %c0 = arith.constant 0 : index
    %c0_1 = arith.constant 0 : index
    %3 = vector.load %arg2[%c0, %c0_1] : memref<1024x4xbf16, #tpu.memory_space<vmem>>, vector<1024x4xbf16>
    %c0_2 = arith.constant 0 : index
    %c0_3 = arith.constant 0 : index
    %4 = vector.load %arg6[%c0_2, %c0_3] : memref<4x32xbf16, #tpu.memory_space<vmem>>, vector<4x32xbf16>
    %cst = arith.constant dense<0.000000e+00> : vector<1024x32xf32>
    %5 = tpu.matmul %3, %4, %cst {dimension_numbers = #tpu.dot_dimension_numbers<[1], [0], [0], [1], [0, 0, 1, 1], [], []>} : vector<1024x4xbf16>, vector<4x32xbf16>, vector<1024x32xf32> -> vector<1024x32xf32>
    %c0_4 = arith.constant 0 : index
    %c0_5 = arith.constant 0 : index
    %6 = vector.load %arg3[%c0_4, %c0_5] : memref<1024x32xbf16, #tpu.memory_space<vmem>>, vector<1024x32xbf16>
    %c0_6 = arith.constant 0 : index
    %c0_7 = arith.constant 0 : index
    %7 = vector.load %arg7[%c0_6, %c0_7] : memref<32x32xbf16, #tpu.memory_space<vmem>>, vector<32x32xbf16>
    %cst_8 = arith.constant dense<0.000000e+00> : vector<1024x32xf32>
    %8 = tpu.matmul %6, %7, %cst_8 {dimension_numbers = #tpu.dot_dimension_numbers<[1], [0], [0], [1], [0, 0, 1, 1], [], []>} : vector<1024x32xbf16>, vector<32x32xbf16>, vector<1024x32xf32> -> vector<1024x32xf32>
    %9 = arith.addf %5, %8 : vector<1024x32xf32>
    %c0_9 = arith.constant 0 : index
    %c0_10 = arith.constant 0 : index
    %10 = vector.load %arg8[%c0_9, %c0_10] : memref<1x32xf32, #tpu.memory_space<vmem>>, vector<1x32xf32>
    %11 = vector.broadcast %10 : vector<1x32xf32> to vector<1024x32xf32>
    %12 = arith.addf %9, %11 : vector<1024x32xf32>
    %cst_11 = arith.constant 0.000000e+00 : f32
    %13 = vector.broadcast %cst_11 : f32 to vector<1024x32xf32>
    %14 = arith.maximumf %12, %13 : vector<1024x32xf32>
    %15 = arith.truncf %14 : vector<1024x32xf32> to vector<1024x32xbf16>
    %c0_12 = arith.constant 0 : index
    %c0_13 = arith.constant 0 : index
    %16 = vector.load %arg9[%c0_12, %c0_13] : memref<32x32xbf16, #tpu.memory_space<vmem>>, vector<32x32xbf16>
    %cst_14 = arith.constant dense<0.000000e+00> : vector<1024x32xf32>
    %17 = tpu.matmul %15, %16, %cst_14 {dimension_numbers = #tpu.dot_dimension_numbers<[1], [0], [0], [1], [0, 0, 1, 1], [], []>} : vector<1024x32xbf16>, vector<32x32xbf16>, vector<1024x32xf32> -> vector<1024x32xf32>
    %18 = tpu.iota {dimensions = array<i32: 0>} : vector<8x1024xi32>
    %c8_i32 = arith.constant 8 : i32
    %19 = arith.muli %arg0, %c8_i32 : i32
    %20 = vector.broadcast %19 : i32 to vector<8x1024xi32>
    %21 = arith.addi %18, %20 : vector<8x1024xi32>
    %c0_15 = arith.constant 0 : index
    %c0_16 = arith.constant 0 : index
    %22 = vector.load %arg4[%c0_15, %c0_16] : memref<1x1024xi32, #tpu.memory_space<vmem>>, vector<1x1024xi32>
    %23 = vector.broadcast %22 : vector<1x1024xi32> to vector<8x1024xi32>
    %24 = arith.cmpi eq, %23, %21 : vector<8x1024xi32>
    %25 = arith.extui %24 : vector<8x1024xi1> to vector<8x1024xi32>
    %26 = arith.sitofp %25 : vector<8x1024xi32> to vector<8x1024xf32>
    %27 = arith.truncf %26 : vector<8x1024xf32> to vector<8x1024xbf16>
    %28 = arith.truncf %17 : vector<1024x32xf32> to vector<1024x32xbf16>
    %cst_17 = arith.constant 1.000000e+00 : bf16
    %29 = vector.broadcast %cst_17 : bf16 to vector<1024x1xbf16>
    %30 = tpu.concatenate %28, %29 in 1 : vector<1024x32xbf16>, vector<1024x1xbf16> -> vector<1024x33xbf16>
    %c0_18 = arith.constant 0 : index
    %c0_19 = arith.constant 0 : index
    %31 = vector.load %arg17[%c0_18, %c0_19] : memref<8x33xf32, #tpu.memory_space<vmem>>, vector<8x33xf32>
    %cst_20 = arith.constant dense<0.000000e+00> : vector<8x33xf32>
    %32 = tpu.matmul %27, %30, %cst_20 {dimension_numbers = #tpu.dot_dimension_numbers<[1], [0], [0], [1], [0, 0, 1, 1], [], []>} : vector<8x1024xbf16>, vector<1024x33xbf16>, vector<8x33xf32> -> vector<8x33xf32>
    %33 = arith.addf %31, %32 : vector<8x33xf32>
    %c0_21 = arith.constant 0 : index
    %c0_22 = arith.constant 0 : index
    %34 = vector.load %arg17[%c0_21, %c0_22] : memref<8x33xf32, #tpu.memory_space<vmem>>, vector<8x33xf32>
    tpu.vector_store %arg17[%c0_21, %c0_22], %33 {strides = array<i32>} : memref<8x33xf32, #tpu.memory_space<vmem>>, vector<8x33xf32>,
    %c0_i32_23 = arith.constant 0 : i32
    %35 = arith.cmpi eq, %arg1, %c0_i32_23 : i32
    %36 = arith.extui %35 : i1 to i32
    %c0_i32_24 = arith.constant 0 : i32
    %37 = arith.cmpi ne, %36, %c0_i32_24 : i32
    scf.if %37 {
      %c0_25 = arith.constant 0 : index
      %c0_26 = arith.constant 0 : index
      %38 = vector.load %arg17[%c0_25, %c0_26] : memref<8x33xf32, #tpu.memory_space<vmem>>, vector<8x32xf32>
      %c0_27 = arith.constant 0 : index
      %c32 = arith.constant 32 : index
      %39 = vector.load %arg17[%c0_27, %c32] : memref<8x33xf32, #tpu.memory_space<vmem>>, vector<8x1xf32>
      %cst_28 = arith.constant 1.000000e+00 : f32
      %40 = vector.broadcast %cst_28 : f32 to vector<8x1xf32>
      %41 = arith.maximumf %39, %40 : vector<8x1xf32>
      %42 = tpu.reciprocal %41 {approx = true} : vector<8x1xf32> -> vector<8x1xf32>
      %43 = vector.broadcast %42 : vector<8x1xf32> to vector<8x32xf32>
      %44 = arith.mulf %38, %43 : vector<8x32xf32>
      %cst_29 = arith.constant 0.000000e+00 : f32
      %45 = vector.broadcast %cst_29 : f32 to vector<8x1xf32>
      %46 = arith.cmpf ogt, %39, %45 : vector<8x1xf32>
      %c0_30 = arith.constant 0 : index
      %c0_31 = arith.constant 0 : index
      %47 = vector.load %arg10[%c0_30, %c0_31] : memref<1x32xf32, #tpu.memory_space<vmem>>, vector<1x32xf32>
      %cst_32 = arith.constant 0.000000e+00 : f32
      %48 = vector.shape_cast %46 : vector<8x1xi1> to vector<8x1xi1>
      %49 = vector.broadcast %48 : vector<8x1xi1> to vector<8x32xi1>
      %50 = vector.shape_cast %47 : vector<1x32xf32> to vector<1x32xf32>
      %51 = vector.broadcast %50 : vector<1x32xf32> to vector<8x32xf32>
      %52 = vector.broadcast %cst_32 : f32 to vector<8x32xf32>
      %53 = arith.select %49, %51, %52 : vector<8x32xi1>, vector<8x32xf32>
      %54 = arith.addf %44, %53 : vector<8x32xf32>
      %c0_33 = arith.constant 0 : index
      %c0_34 = arith.constant 0 : index
      %55 = vector.load %arg5[%c0_33, %c0_34] : memref<8x4xf32, #tpu.memory_space<vmem>>, vector<8x4xf32>
      %c0_35 = arith.constant 0 : index
      %c0_36 = arith.constant 0 : index
      %56 = vector.load %arg11[%c0_35, %c0_36] : memref<4x32xf32, #tpu.memory_space<vmem>>, vector<4x32xf32>
      %cst_37 = arith.constant dense<0.000000e+00> : vector<8x32xf32>
      %57 = tpu.matmul %55, %56, %cst_37 {dimension_numbers = #tpu.dot_dimension_numbers<[1], [0], [0], [1], [0, 0, 1, 1], [], []>} : vector<8x4xf32>, vector<4x32xf32>, vector<8x32xf32> -> vector<8x32xf32>
      %c0_38 = arith.constant 0 : index
      %c0_39 = arith.constant 0 : index
      %58 = vector.load %arg12[%c0_38, %c0_39] : memref<32x32xf32, #tpu.memory_space<vmem>>, vector<32x32xf32>
      %cst_40 = arith.constant dense<0.000000e+00> : vector<8x32xf32>
      %59 = tpu.matmul %54, %58, %cst_40 {dimension_numbers = #tpu.dot_dimension_numbers<[1], [0], [0], [1], [0, 0, 1, 1], [], []>} : vector<8x32xf32>, vector<32x32xf32>, vector<8x32xf32> -> vector<8x32xf32>
      %60 = arith.addf %57, %59 : vector<8x32xf32>
      %c0_41 = arith.constant 0 : index
      %c0_42 = arith.constant 0 : index
      %61 = vector.load %arg13[%c0_41, %c0_42] : memref<1x32xf32, #tpu.memory_space<vmem>>, vector<1x32xf32>
      %62 = vector.broadcast %61 : vector<1x32xf32> to vector<8x32xf32>
      %63 = arith.addf %60, %62 : vector<8x32xf32>
      %cst_43 = arith.constant 0.000000e+00 : f32
      %64 = vector.broadcast %cst_43 : f32 to vector<8x32xf32>
      %65 = arith.maximumf %63, %64 : vector<8x32xf32>
      %c0_44 = arith.constant 0 : index
      %c0_45 = arith.constant 0 : index
      %66 = vector.load %arg14[%c0_44, %c0_45] : memref<32x2xf32, #tpu.memory_space<vmem>>, vector<32x2xf32>
      %cst_46 = arith.constant dense<0.000000e+00> : vector<8x2xf32>
      %67 = tpu.matmul %65, %66, %cst_46 {dimension_numbers = #tpu.dot_dimension_numbers<[1], [0], [0], [1], [0, 0, 1, 1], [], []>} : vector<8x32xf32>, vector<32x2xf32>, vector<8x2xf32> -> vector<8x2xf32>
      %c0_47 = arith.constant 0 : index
      %c0_48 = arith.constant 0 : index
      %68 = vector.load %arg15[%c0_47, %c0_48] : memref<1x2xf32, #tpu.memory_space<vmem>>, vector<1x2xf32>
      %69 = vector.broadcast %68 : vector<1x2xf32> to vector<8x2xf32>
      %70 = arith.addf %67, %69 : vector<8x2xf32>
      %c0_49 = arith.constant 0 : index
      %c0_50 = arith.constant 0 : index
      %71 = vector.load %arg16[%c0_49, %c0_50] : memref<8x2xf32, #tpu.memory_space<vmem>>, vector<8x2xf32>
      tpu.vector_store %arg16[%c0_49, %c0_50], %70 {strides = array<i32>} : memref<8x2xf32, #tpu.memory_space<vmem>>, vector<8x2xf32>,
    } else {
    }
    return
  }
  func.func @transform_0(%arg0: i32, %arg1: i32) -> (i32, i32) {
    %c0_i32 = arith.constant 0 : i32
    %c0_i32_0 = arith.constant 0 : i32
    return %arg1, %c0_i32 : i32, i32
  }
  func.func @transform_1(%arg0: i32, %arg1: i32) -> (i32, i32) {
    %c0_i32 = arith.constant 0 : i32
    %c0_i32_0 = arith.constant 0 : i32
    return %arg1, %c0_i32 : i32, i32
  }
  func.func @transform_2(%arg0: i32, %arg1: i32) -> (i32, i32) {
    %c0_i32 = arith.constant 0 : i32
    %c0_i32_0 = arith.constant 0 : i32
    return %c0_i32, %arg1 : i32, i32
  }
  func.func @transform_3(%arg0: i32, %arg1: i32) -> (i32, i32) {
    %c0_i32 = arith.constant 0 : i32
    %c0_i32_0 = arith.constant 0 : i32
    return %arg0, %c0_i32 : i32, i32
  }
  func.func @transform_4(%arg0: i32, %arg1: i32) -> (i32, i32) {
    %c0_i32 = arith.constant 0 : i32
    %c0_i32_0 = arith.constant 0 : i32
    %c0_i32_1 = arith.constant 0 : i32
    return %c0_i32, %c0_i32_0 : i32, i32
  }
  func.func @transform_5(%arg0: i32, %arg1: i32) -> (i32, i32) {
    %c0_i32 = arith.constant 0 : i32
    %c0_i32_0 = arith.constant 0 : i32
    %c0_i32_1 = arith.constant 0 : i32
    return %c0_i32, %c0_i32_0 : i32, i32
  }
  func.func @transform_6(%arg0: i32, %arg1: i32) -> (i32, i32) {
    %c0_i32 = arith.constant 0 : i32
    %c0_i32_0 = arith.constant 0 : i32
    %c0_i32_1 = arith.constant 0 : i32
    return %c0_i32, %c0_i32_0 : i32, i32
  }
  func.func @transform_7(%arg0: i32, %arg1: i32) -> (i32, i32) {
    %c0_i32 = arith.constant 0 : i32
    %c0_i32_0 = arith.constant 0 : i32
    %c0_i32_1 = arith.constant 0 : i32
    return %c0_i32, %c0_i32_0 : i32, i32
  }
  func.func @transform_8(%arg0: i32, %arg1: i32) -> (i32, i32) {
    %c0_i32 = arith.constant 0 : i32
    %c0_i32_0 = arith.constant 0 : i32
    %c0_i32_1 = arith.constant 0 : i32
    return %c0_i32, %c0_i32_0 : i32, i32
  }
  func.func @transform_9(%arg0: i32, %arg1: i32) -> (i32, i32) {
    %c0_i32 = arith.constant 0 : i32
    %c0_i32_0 = arith.constant 0 : i32
    %c0_i32_1 = arith.constant 0 : i32
    return %c0_i32, %c0_i32_0 : i32, i32
  }
  func.func @transform_10(%arg0: i32, %arg1: i32) -> (i32, i32) {
    %c0_i32 = arith.constant 0 : i32
    %c0_i32_0 = arith.constant 0 : i32
    %c0_i32_1 = arith.constant 0 : i32
    return %c0_i32, %c0_i32_0 : i32, i32
  }
  func.func @transform_11(%arg0: i32, %arg1: i32) -> (i32, i32) {
    %c0_i32 = arith.constant 0 : i32
    %c0_i32_0 = arith.constant 0 : i32
    %c0_i32_1 = arith.constant 0 : i32
    return %c0_i32, %c0_i32_0 : i32, i32
  }
  func.func @transform_12(%arg0: i32, %arg1: i32) -> (i32, i32) {
    %c0_i32 = arith.constant 0 : i32
    %c0_i32_0 = arith.constant 0 : i32
    %c0_i32_1 = arith.constant 0 : i32
    return %c0_i32, %c0_i32_0 : i32, i32
  }
  func.func @transform_13(%arg0: i32, %arg1: i32) -> (i32, i32) {
    %c0_i32 = arith.constant 0 : i32
    %c0_i32_0 = arith.constant 0 : i32
    %c0_i32_1 = arith.constant 0 : i32
    return %c0_i32, %c0_i32_0 : i32, i32
  }
  func.func @transform_14(%arg0: i32, %arg1: i32) -> (i32, i32) {
    %c0_i32 = arith.constant 0 : i32
    %c0_i32_0 = arith.constant 0 : i32
    return %arg0, %c0_i32 : i32, i32
  }
}

</mosaic_0001>

<llo_original>
// kernel: node_encoder_forward.1
$region0: #{node_encoder_forward.1}
  #allocation0 [shape = 'u32[]', space=smem, size = 0x4, offset = 0x4, fixed_abs, tag = 'smem constant byte address 0x4 - core index']
  #allocation1 [shape = 'u32[72,128]{1,0:T(1,128)}', space=vmem, size = 0x9000, scoped, tag = 'internal scratch']
  #allocation2 [shape = 'f32[8,33]{1,0:T(8,128)}', space=vmem, size = 0x1000, scoped, tag = 'scratch operand']
  %s0 = inlined_call_operand.vmem [shape: bf16[1024,4], index: 0, kind: input, shape index: {}]
  %s1 = inlined_call_operand.vmem [shape: bf16[1024,32], index: 1, kind: input, shape index: {}]
  %s2 = inlined_call_operand.vmem [shape: s32[1,1024], index: 2, kind: input, shape index: {}]
  %s3 = inlined_call_operand.vmem [shape: f32[16,4], index: 3, kind: input, shape index: {}]
  %s4 = inlined_call_operand.vmem [shape: bf16[4,32], index: 4, kind: input, shape index: {}]
  %s5 = inlined_call_operand.vmem [shape: bf16[32,32], index: 5, kind: input, shape index: {}]
  %s6 = inlined_call_operand.vmem [shape: f32[1,32], index: 6, kind: input, shape index: {}]
  %s7 = inlined_call_operand.vmem [shape: bf16[32,32], index: 7, kind: input, shape index: {}]
  %s8 = inlined_call_operand.vmem [shape: f32[1,32], index: 8, kind: input, shape index: {}]
  %s9 = inlined_call_operand.vmem [shape: f32[4,32], index: 9, kind: input, shape index: {}]
  %s10 = inlined_call_operand.vmem [shape: f32[32,32], index: 10, kind: input, shape index: {}]
  %s11 = inlined_call_operand.vmem [shape: f32[1,32], index: 11, kind: input, shape index: {}]
  %s12 = inlined_call_operand.vmem [shape: f32[32,2], index: 12, kind: input, shape index: {}]
  %s13 = inlined_call_operand.vmem [shape: f32[1,2], index: 13, kind: input, shape index: {}]
  %s14 = inlined_call_operand.vmem [shape: f32[16,2], index: 14, kind: output, shape index: {}]
  %s15 = sld [smem:[#allocation0]]
  $region97: #{node_encoder_forward.1} parent=0
    _
  %s17 = ssub.s32 1, %s15
  %s18 = scalar_select 0, %s17, %s15
  loop: start=0, step=1, limit=4
  $region2: #{node_encoder_forward.1} parent=0 // loop_pre_header
    _
  $region3: #{node_encoder_forward.1} parent=0 // loop_header
    %s20 = sphi 0, %s24
    %p21 = scmp.ge.s32.totalorder %s20, 4
    %s27 = sphi 0, %s39
    %s28 = sphi 0, %s35
    %s29 = sphi 0, %s27
    %s30 = sphi 0, %s28
    %s31 = sphi 0, %s29
    %s32 = sphi 0, %s30
    %s42 = sphi 0, %s44
    %s45 = sphi 0, %s42
    %s46 = sphi 0, %s45
    %s62 = sphi 0, %s46
    %s68 = sphi 0, %s70
    %s71 = sphi 0, %s68
    %s72 = sphi 0, %s71
    %s88 = sphi 0, %s72
    %s94 = sphi 0, %s96
    %s97 = sphi 0, %s94
    %s98 = sphi 0, %s97
    %s114 = sphi 0, %s98
    %s120 = sphi 0, %s122
    %s123 = sphi 0, %s120
    %s124 = sphi 0, %s123
    %s140 = sphi 0, %s124
    %s144 = sphi 0, %s144
    %s146 = sphi 0, %s144
    %s147 = sphi 0, %s146
    %s161 = sphi 0, %s147
    %s165 = sphi 0, %s165
    %s167 = sphi 0, %s165
    %s168 = sphi 0, %s167
    %s182 = sphi 0, %s168
    %s186 = sphi 0, %s186
    %s188 = sphi 0, %s186
    %s189 = sphi 0, %s188
    %s203 = sphi 0, %s189
    %s207 = sphi 0, %s207
    %s209 = sphi 0, %s207
    %s210 = sphi 0, %s209
    %s224 = sphi 0, %s210
    %s228 = sphi 0, %s228
    %s230 = sphi 0, %s228
    %s231 = sphi 0, %s230
    %s245 = sphi 0, %s231
    %s249 = sphi 0, %s249
    %s251 = sphi 0, %s249
    %s252 = sphi 0, %s251
    %s266 = sphi 0, %s252
    %s270 = sphi 0, %s270
    %s272 = sphi 0, %s270
    %s273 = sphi 0, %s272
    %s287 = sphi 0, %s273
    %s291 = sphi 0, %s291
    %s293 = sphi 0, %s291
    %s294 = sphi 0, %s293
    %s308 = sphi 0, %s294
    %s312 = sphi 0, %s312
    %s314 = sphi 0, %s312
    %s315 = sphi 0, %s314
    %s329 = sphi 0, %s315
    %s333 = sphi 0, %s333
    %s335 = sphi 0, %s333
    %s336 = sphi 0, %s335
    %s350 = sphi 0, %s336
    %s356 = sphi 0, %s358
    %s359 = sphi 0, %s356
    %s360 = sphi 0, %s359
    %s376 = sphi 0, %s360
  $region4: #{node_encoder_forward.1} parent=0 // loop_header_branch
    %23 = sbr.rel (%p21) target = $region8
  $region5: #{node_encoder_forward.1} parent=0 // loop_body
    %s25 = ssub.s32 %s20, 1
    %s26 = ssub.s32 %s20, 2
    %s33 = sadd.s32 1, %s28
    %p34 = scmp.ge.s32.totalorder %s33, 1
    %s35 = scalar_select %p34, 0, %s33
    %s36 = sadd.s32 1, %s27
    %s37 = scalar_select %p34, %s36, %s27
    %p38 = scmp.ge.s32.totalorder %s37, 2
    %s39 = scalar_select %p38, 0, %s37
    %s40 = ssub.s32 %s28, %s35
    %p41 = scmp.eq.s32.totalorder %s40, 0
    %s43 = sadd.s32 %s42, 1
    %s44 = scalar_select %p41, %s42, %s43
    %p47 = pneg %p41
    %p48 = scmp.eq.s32.totalorder %s20, 1
    %p49 = por %p47, %p48
    %p50 = scmp.ne.s32.totalorder %s42, %s45
    %p51 = scmp.eq.s32.totalorder %s20, 0
    %p52 = por %p50, %p51
    %p53 = scmp.ne.s32.totalorder %s42, %s45
    %p54 = scmp.eq.s32.totalorder %s25, 1
    %p55 = por %p53, %p54
    %p56 = scmp.ne.s32.totalorder %s45, %s46
    %p57 = scmp.eq.s32.totalorder %s25, 0
    %p58 = por %p56, %p57
    %p59 = scmp.ne.s32.totalorder %s45, %s46
    %p60 = scmp.eq.s32.totalorder %s26, 1
    %p61 = por %p59, %p60
    %p63 = scmp.ne.s32.totalorder %s46, %s62
    %p64 = scmp.eq.s32.totalorder %s26, 0
    %p65 = por %p63, %p64
    %s66 = ssub.s32 %s28, %s35
    %p67 = scmp.eq.s32.totalorder %s66, 0
    %s69 = sadd.s32 %s68, 1
    %s70 = scalar_select %p67, %s68, %s69
    %p73 = pneg %p67
    %p74 = scmp.eq.s32.totalorder %s20, 1
    %p75 = por %p73, %p74
    %p76 = scmp.ne.s32.totalorder %s68, %s71
    %p77 = scmp.eq.s32.totalorder %s20, 0
    %p78 = por %p76, %p77
    %p79 = scmp.ne.s32.totalorder %s68, %s71
    %p80 = scmp.eq.s32.totalorder %s25, 1
    %p81 = por %p79, %p80
    %p82 = scmp.ne.s32.totalorder %s71, %s72
    %p83 = scmp.eq.s32.totalorder %s25, 0
    %p84 = por %p82, %p83
    %p85 = scmp.ne.s32.totalorder %s71, %s72
    %p86 = scmp.eq.s32.totalorder %s26, 1
    %p87 = por %p85, %p86
    %p89 = scmp.ne.s32.totalorder %s72, %s88
    %p90 = scmp.eq.s32.totalorder %s26, 0
    %p91 = por %p89, %p90
    %s92 = ssub.s32 %s28, %s35
    %p93 = scmp.eq.s32.totalorder %s92, 0
    %s95 = sadd.s32 %s94, 1
    %s96 = scalar_select %p93, %s94, %s95
    %p99 = pneg %p93
    %p100 = scmp.eq.s32.totalorder %s20, 1
    %p101 = por %p99, %p100
    %p102 = scmp.ne.s32.totalorder %s94, %s97
    %p103 = scmp.eq.s32.totalorder %s20, 0
    %p104 = por %p102, %p103
    %p105 = scmp.ne.s32.totalorder %s94, %s97
    %p106 = scmp.eq.s32.totalorder %s25, 1
    %p107 = por %p105, %p106
    %p108 = scmp.ne.s32.totalorder %s97, %s98
    %p109 = scmp.eq.s32.totalorder %s25, 0
    %p110 = por %p108, %p109
    %p111 = scmp.ne.s32.totalorder %s97, %s98
    %p112 = scmp.eq.s32.totalorder %s26, 1
    %p113 = por %p111, %p112
    %p115 = scmp.ne.s32.totalorder %s98, %s114
    %p116 = scmp.eq.s32.totalorder %s26, 0
    %p117 = por %p115, %p116
    %s118 = ssub.s32 %s27, %s39
    %p119 = scmp.eq.s32.totalorder %s118, 0
    %s121 = sadd.s32 %s120, 1
    %s122 = scalar_select %p119, %s120, %s121
    %p125 = pneg %p119
    %p126 = scmp.eq.s32.totalorder %s20, 1
    %p127 = por %p125, %p126
    %p128 = scmp.ne.s32.totalorder %s120, %s123
    %p129 = scmp.eq.s32.totalorder %s20, 0
    %p130 = por %p128, %p129
    %p131 = scmp.ne.s32.totalorder %s120, %s123
    %p132 = scmp.eq.s32.totalorder %s25, 1
    %p133 = por %p131, %p132
    %p134 = scmp.ne.s32.totalorder %s123, %s124
    %p135 = scmp.eq.s32.totalorder %s25, 0
    %p136 = por %p134, %p135
    %p137 = scmp.ne.s32.totalorder %s123, %s124
    %p138 = scmp.eq.s32.totalorder %s26, 1
    %p139 = por %p137, %p138
    %p141 = scmp.ne.s32.totalorder %s124, %s140
    %p142 = scmp.eq.s32.totalorder %s26, 0
    %p143 = por %p141, %p142
    %s145 = sadd.s32 %s144, 1
    %p148 = scmp.eq.s32.totalorder %s20, 1
    %p149 = scmp.ne.s32.totalorder %s144, %s146
    %p150 = scmp.eq.s32.totalorder %s20, 0
    %p151 = por %p149, %p150
    %p152 = scmp.ne.s32.totalorder %s144, %s146
    %p153 = scmp.eq.s32.totalorder %s25, 1
    %p154 = por %p152, %p153
    %p155 = scmp.ne.s32.totalorder %s146, %s147
    %p156 = scmp.eq.s32.totalorder %s25, 0
    %p157 = por %p155, %p156
    %p158 = scmp.ne.s32.totalorder %s146, %s147
    %p159 = scmp.eq.s32.totalorder %s26, 1
    %p160 = por %p158, %p159
    %p162 = scmp.ne.s32.totalorder %s147, %s161
    %p163 = scmp.eq.s32.totalorder %s26, 0
    %p164 = por %p162, %p163
    %s166 = sadd.s32 %s165, 1
    %p169 = scmp.eq.s32.totalorder %s20, 1
    %p170 = scmp.ne.s32.totalorder %s165, %s167
    %p171 = scmp.eq.s32.totalorder %s20, 0
    %p172 = por %p170, %p171
    %p173 = scmp.ne.s32.totalorder %s165, %s167
    %p174 = scmp.eq.s32.totalorder %s25, 1
    %p175 = por %p173, %p174
    %p176 = scmp.ne.s32.totalorder %s167, %s168
    %p177 = scmp.eq.s32.totalorder %s25, 0
    %p178 = por %p176, %p177
    %p179 = scmp.ne.s32.totalorder %s167, %s168
    %p180 = scmp.eq.s32.totalorder %s26, 1
    %p181 = por %p179, %p180
    %p183 = scmp.ne.s32.totalorder %s168, %s182
    %p184 = scmp.eq.s32.totalorder %s26, 0
    %p185 = por %p183, %p184
    %s187 = sadd.s32 %s186, 1
    %p190 = scmp.eq.s32.totalorder %s20, 1
    %p191 = scmp.ne.s32.totalorder %s186, %s188
    %p192 = scmp.eq.s32.totalorder %s20, 0
    %p193 = por %p191, %p192
    %p194 = scmp.ne.s32.totalorder %s186, %s188
    %p195 = scmp.eq.s32.totalorder %s25, 1
    %p196 = por %p194, %p195
    %p197 = scmp.ne.s32.totalorder %s188, %s189
    %p198 = scmp.eq.s32.totalorder %s25, 0
    %p199 = por %p197, %p198
    %p200 = scmp.ne.s32.totalorder %s188, %s189
    %p201 = scmp.eq.s32.totalorder %s26, 1
    %p202 = por %p200, %p201
    %p204 = scmp.ne.s32.totalorder %s189, %s203
    %p205 = scmp.eq.s32.totalorder %s26, 0
    %p206 = por %p204, %p205
    %s208 = sadd.s32 %s207, 1
    %p211 = scmp.eq.s32.totalorder %s20, 1
    %p212 = scmp.ne.s32.totalorder %s207, %s209
    %p213 = scmp.eq.s32.totalorder %s20, 0
    %p214 = por %p212, %p213
    %p215 = scmp.ne.s32.totalorder %s207, %s209
    %p216 = scmp.eq.s32.totalorder %s25, 1
    %p217 = por %p215, %p216
    %p218 = scmp.ne.s32.totalorder %s209, %s210
    %p219 = scmp.eq.s32.totalorder %s25, 0
    %p220 = por %p218, %p219
    %p221 = scmp.ne.s32.totalorder %s209, %s210
    %p222 = scmp.eq.s32.totalorder %s26, 1
    %p223 = por %p221, %p222
    %p225 = scmp.ne.s32.totalorder %s210, %s224
    %p226 = scmp.eq.s32.totalorder %s26, 0
    %p227 = por %p225, %p226
    %s229 = sadd.s32 %s228, 1
    %p232 = scmp.eq.s32.totalorder %s20, 1
    %p233 = scmp.ne.s32.totalorder %s228, %s230
    %p234 = scmp.eq.s32.totalorder %s20, 0
    %p235 = por %p233, %p234
    %p236 = scmp.ne.s32.totalorder %s228, %s230
    %p237 = scmp.eq.s32.totalorder %s25, 1
    %p238 = por %p236, %p237
    %p239 = scmp.ne.s32.totalorder %s230, %s231
    %p240 = scmp.eq.s32.totalorder %s25, 0
    %p241 = por %p239, %p240
    %p242 = scmp.ne.s32.totalorder %s230, %s231
    %p243 = scmp.eq.s32.totalorder %s26, 1
    %p244 = por %p242, %p243
    %p246 = scmp.ne.s32.totalorder %s231, %s245
    %p247 = scmp.eq.s32.totalorder %s26, 0
    %p248 = por %p246, %p247
    %s250 = sadd.s32 %s249, 1
    %p253 = scmp.eq.s32.totalorder %s20, 1
    %p254 = scmp.ne.s32.totalorder %s249, %s251
    %p255 = scmp.eq.s32.totalorder %s20, 0
    %p256 = por %p254, %p255
    %p257 = scmp.ne.s32.totalorder %s249, %s251
    %p258 = scmp.eq.s32.totalorder %s25, 1
    %p259 = por %p257, %p258
    %p260 = scmp.ne.s32.totalorder %s251, %s252
    %p261 = scmp.eq.s32.totalorder %s25, 0
    %p262 = por %p260, %p261
    %p263 = scmp.ne.s32.totalorder %s251, %s252
    %p264 = scmp.eq.s32.totalorder %s26, 1
    %p265 = por %p263, %p264
    %p267 = scmp.ne.s32.totalorder %s252, %s266
    %p268 = scmp.eq.s32.totalorder %s26, 0
    %p269 = por %p267, %p268
    %s271 = sadd.s32 %s270, 1
    %p274 = scmp.eq.s32.totalorder %s20, 1
    %p275 = scmp.ne.s32.totalorder %s270, %s272
    %p276 = scmp.eq.s32.totalorder %s20, 0
    %p277 = por %p275, %p276
    %p278 = scmp.ne.s32.totalorder %s270, %s272
    %p279 = scmp.eq.s32.totalorder %s25, 1
    %p280 = por %p278, %p279
    %p281 = scmp.ne.s32.totalorder %s272, %s273
    %p282 = scmp.eq.s32.totalorder %s25, 0
    %p283 = por %p281, %p282
    %p284 = scmp.ne.s32.totalorder %s272, %s273
    %p285 = scmp.eq.s32.totalorder %s26, 1
    %p286 = por %p284, %p285
    %p288 = scmp.ne.s32.totalorder %s273, %s287
    %p289 = scmp.eq.s32.totalorder %s26, 0
    %p290 = por %p288, %p289
    %s292 = sadd.s32 %s291, 1
    %p295 = scmp.eq.s32.totalorder %s20, 1
    %p296 = scmp.ne.s32.totalorder %s291, %s293
    %p297 = scmp.eq.s32.totalorder %s20, 0
    %p298 = por %p296, %p297
    %p299 = scmp.ne.s32.totalorder %s291, %s293
    %p300 = scmp.eq.s32.totalorder %s25, 1
    %p301 = por %p299, %p300
    %p302 = scmp.ne.s32.totalorder %s293, %s294
    %p303 = scmp.eq.s32.totalorder %s25, 0
    %p304 = por %p302, %p303
    %p305 = scmp.ne.s32.totalorder %s293, %s294
    %p306 = scmp.eq.s32.totalorder %s26, 1
    %p307 = por %p305, %p306
    %p309 = scmp.ne.s32.totalorder %s294, %s308
    %p310 = scmp.eq.s32.totalorder %s26, 0
    %p311 = por %p309, %p310
    %s313 = sadd.s32 %s312, 1
    %p316 = scmp.eq.s32.totalorder %s20, 1
    %p317 = scmp.ne.s32.totalorder %s312, %s314
    %p318 = scmp.eq.s32.totalorder %s20, 0
    %p319 = por %p317, %p318
    %p320 = scmp.ne.s32.totalorder %s312, %s314
    %p321 = scmp.eq.s32.totalorder %s25, 1
    %p322 = por %p320, %p321
    %p323 = scmp.ne.s32.totalorder %s314, %s315
    %p324 = scmp.eq.s32.totalorder %s25, 0
    %p325 = por %p323, %p324
    %p326 = scmp.ne.s32.totalorder %s314, %s315
    %p327 = scmp.eq.s32.totalorder %s26, 1
    %p328 = por %p326, %p327
    %p330 = scmp.ne.s32.totalorder %s315, %s329
    %p331 = scmp.eq.s32.totalorder %s26, 0
    %p332 = por %p330, %p331
    %s334 = sadd.s32 %s333, 1
    %p337 = scmp.eq.s32.totalorder %s20, 1
    %p338 = scmp.ne.s32.totalorder %s333, %s335
    %p339 = scmp.eq.s32.totalorder %s20, 0
    %p340 = por %p338, %p339
    %p341 = scmp.ne.s32.totalorder %s333, %s335
    %p342 = scmp.eq.s32.totalorder %s25, 1
    %p343 = por %p341, %p342
    %p344 = scmp.ne.s32.totalorder %s335, %s336
    %p345 = scmp.eq.s32.totalorder %s25, 0
    %p346 = por %p344, %p345
    %p347 = scmp.ne.s32.totalorder %s335, %s336
    %p348 = scmp.eq.s32.totalorder %s26, 1
    %p349 = por %p347, %p348
    %p351 = scmp.ne.s32.totalorder %s336, %s350
    %p352 = scmp.eq.s32.totalorder %s26, 0
    %p353 = por %p351, %p352
    %s354 = ssub.s32 %s27, %s39
    %p355 = scmp.eq.s32.totalorder %s354, 0
    %s357 = sadd.s32 %s356, 1
    %s358 = scalar_select %p355, %s356, %s357
    %p361 = pneg %p355
    %p362 = scmp.eq.s32.totalorder %s20, 1
    %p363 = por %p361, %p362
    %p364 = scmp.ne.s32.totalorder %s356, %s359
    %p365 = scmp.eq.s32.totalorder %s20, 0
    %p366 = por %p364, %p365
    %p367 = scmp.ne.s32.totalorder %s356, %s359
    %p368 = scmp.eq.s32.totalorder %s25, 1
    %p369 = por %p367, %p368
    %p370 = scmp.ne.s32.totalorder %s359, %s360
    %p371 = scmp.eq.s32.totalorder %s25, 0
    %p372 = por %p370, %p371
    %p373 = scmp.ne.s32.totalorder %s359, %s360
    %p374 = scmp.eq.s32.totalorder %s26, 1
    %p375 = por %p373, %p374
    %p377 = scmp.ne.s32.totalorder %s360, %s376
    %p378 = scmp.eq.s32.totalorder %s26, 0
    %p379 = por %p377, %p378
    %p380 = scmp.le.s32.totalorder 1, %s20
    %p381 = scmp.lt.s32.totalorder %s20, 3
    %p382 = pnand %p380, %p381
    %p383 = pneg %p382
    // Predicated region
    $region9: #{node_encoder_forward.1} parent=5 // pred_check
      _
    $region10: #{node_encoder_forward.1} parent=5 // pred_check_branch
      %385 = sbr.rel (%p382) target = $region12
    $region11: #{node_encoder_forward.1} parent=5 // pred_region
      %s386 = ssub.s32 %s20, 1
      // Predicated region
      $region13: #{node_encoder_forward.1} parent=11 // pred_check
        %p387 = pneg %p58
      $region14: #{node_encoder_forward.1} parent=11 // pred_check_branch
        %389 = sbr.rel (%p387) target = $region16
      $region15: #{node_encoder_forward.1} parent=11 // pred_region
        %s390 = smul.u32 128, %s30
        %p391 = scmp.lt.s32.totalorder %s390, 127
        %s392 = scalar_select %p391, %s390, 127
        %s393 = smul.addr %s392, 4
        %s394 = scalar_lea.vmem %s0, %s393
        %s395 = smul.u32 128, %s30
      $region16: #{node_encoder_forward.1} parent=11 // pred_fallthru
        _
      // Predicated region
      $region17: #{node_encoder_forward.1} parent=11 // pred_check
        %p396 = pneg %p84
      $region18: #{node_encoder_forward.1} parent=11 // pred_check_branch
        %398 = sbr.rel (%p396) target = $region20
      $region19: #{node_encoder_forward.1} parent=11 // pred_region
        %s399 = smul.u32 128, %s30
        %p400 = scmp.lt.s32.totalorder %s399, 127
        %s401 = scalar_select %p400, %s399, 127
        %s402 = smul.addr %s401, 4
        %s403 = scalar_lea.vmem %s1, %s402
        %s404 = smul.u32 128, %s30
      $region20: #{node_encoder_forward.1} parent=11 // pred_fallthru
        _
      // Predicated region
      $region21: #{node_encoder_forward.1} parent=11 // pred_check
        %p405 = pneg %p110
      $region22: #{node_encoder_forward.1} parent=11 // pred_check_branch
        %407 = sbr.rel (%p405) target = $region24
      $region23: #{node_encoder_forward.1} parent=11 // pred_region
        %s408 = smul.u32 8, %s30
        %p409 = scmp.lt.s32.totalorder %s408, 7
        %s410 = scalar_select %p409, %s408, 7
        %s411 = scalar_lea.vmem %s2, %s410
        %s412 = smul.u32 8, %s30
      $region24: #{node_encoder_forward.1} parent=11 // pred_fallthru
        _
      // Predicated region
      $region25: #{node_encoder_forward.1} parent=11 // pred_check
        %p413 = pneg %p157
      $region26: #{node_encoder_forward.1} parent=11 // pred_check_branch
        %415 = sbr.rel (%p413) target = $region28
      $region27: #{node_encoder_forward.1} parent=11 // pred_region
        _
      $region28: #{node_encoder_forward.1} parent=11 // pred_fallthru
        _
      // Predicated region
      $region29: #{node_encoder_forward.1} parent=11 // pred_check
        %p416 = pneg %p178
      $region30: #{node_encoder_forward.1} parent=11 // pred_check_branch
        %418 = sbr.rel (%p416) target = $region32
      $region31: #{node_encoder_forward.1} parent=11 // pred_region
        _
      $region32: #{node_encoder_forward.1} parent=11 // pred_fallthru
        _
      // Predicated region
      $region33: #{node_encoder_forward.1} parent=11 // pred_check
        %p419 = pneg %p199
      $region34: #{node_encoder_forward.1} parent=11 // pred_check_branch
        %421 = sbr.rel (%p419) target = $region36
      $region35: #{node_encoder_forward.1} parent=11 // pred_region
        _
      $region36: #{node_encoder_forward.1} parent=11 // pred_fallthru
        _
      // Predicated region
      $region37: #{node_encoder_forward.1} parent=11 // pred_check
        %p422 = pneg %p220
      $region38: #{node_encoder_forward.1} parent=11 // pred_check_branch
        %424 = sbr.rel (%p422) target = $region40
      $region39: #{node_encoder_forward.1} parent=11 // pred_region
        _
      $region40: #{node_encoder_forward.1} parent=11 // pred_fallthru
        _
      // Predicated region
      $region41: #{node_encoder_forward.1} parent=11 // pred_check
        %p425 = pneg %p241
      $region42: #{node_encoder_forward.1} parent=11 // pred_check_branch
        %427 = sbr.rel (%p425) target = $region44
      $region43: #{node_encoder_forward.1} parent=11 // pred_region
        _
      $region44: #{node_encoder_forward.1} parent=11 // pred_fallthru
        _
      // Predicated region
      $region45: #{node_encoder_forward.1} parent=11 // pred_check
        %p428 = pneg %p262
      $region46: #{node_encoder_forward.1} parent=11 // pred_check_branch
        %430 = sbr.rel (%p428) target = $region48
      $region47: #{node_encoder_forward.1} parent=11 // pred_region
        _
      $region48: #{node_encoder_forward.1} parent=11 // pred_fallthru
        _
      // Predicated region
      $region49: #{node_encoder_forward.1} parent=11 // pred_check
        %p431 = pneg %p283
      $region50: #{node_encoder_forward.1} parent=11 // pred_check_branch
        %433 = sbr.rel (%p431) target = $region52
      $region51: #{node_encoder_forward.1} parent=11 // pred_region
        _
      $region52: #{node_encoder_forward.1} parent=11 // pred_fallthru
        _
      // Predicated region
      $region53: #{node_encoder_forward.1} parent=11 // pred_check
        %p434 = pneg %p304
      $region54: #{node_encoder_forward.1} parent=11 // pred_check_branch
        %436 = sbr.rel (%p434) target = $region56
      $region55: #{node_encoder_forward.1} parent=11 // pred_region
        _
      $region56: #{node_encoder_forward.1} parent=11 // pred_fallthru
        _
      // Predicated region
      $region57: #{node_encoder_forward.1} parent=11 // pred_check
        %p437 = pneg %p325
      $region58: #{node_encoder_forward.1} parent=11 // pred_check_branch
        %439 = sbr.rel (%p437) target = $region60
      $region59: #{node_encoder_forward.1} parent=11 // pred_region
        _
      $region60: #{node_encoder_forward.1} parent=11 // pred_fallthru
        _
      // Predicated region
      $region61: #{node_encoder_forward.1} parent=11 // pred_check
        %p440 = pneg %p346
      $region62: #{node_encoder_forward.1} parent=11 // pred_check_branch
        %442 = sbr.rel (%p440) target = $region64
      $region63: #{node_encoder_forward.1} parent=11 // pred_region
        _
      $region64: #{node_encoder_forward.1} parent=11 // pred_fallthru
        _
    $region12: #{node_encoder_forward.1} parent=5 // pred_fallthru
      _
    %p443 = scmp.lt.s32.totalorder %s20, 2
    // Predicated region
    $region65: #{node_encoder_forward.1} parent=5 // pred_check
      %p444 = pneg %p443
    $region66: #{node_encoder_forward.1} parent=5 // pred_check_branch
      %446 = sbr.rel (%p444) target = $region68
    $region67: #{node_encoder_forward.1} parent=5 // pred_region
      // Predicated region
      $region69: #{node_encoder_forward.1} parent=67 // pred_check
        %p447 = pneg %p130
      $region70: #{node_encoder_forward.1} parent=67 // pred_check_branch
        %449 = sbr.rel (%p447) target = $region72
      $region71: #{node_encoder_forward.1} parent=67 // pred_region
        %p450 = scmp.lt.s32.totalorder %s27, 1
        %s451 = scalar_select %p450, %s27, 1
        %s452 = smul.addr %s451, 8
        %s453 = scalar_lea.vmem %s3, %s452
      $region72: #{node_encoder_forward.1} parent=67 // pred_fallthru
        _
    $region68: #{node_encoder_forward.1} parent=5 // pred_fallthru
      _
    %p454 = scmp.le.s32.totalorder 1, %s20
    %p455 = scmp.lt.s32.totalorder %s20, 3
    %p456 = pnand %p454, %p455
    %p457 = pneg %p456
    // Predicated region
    $region73: #{node_encoder_forward.1} parent=5 // pred_check
      _
    $region74: #{node_encoder_forward.1} parent=5 // pred_check_branch
      %459 = sbr.rel (%p456) target = $region76
    $region75: #{node_encoder_forward.1} parent=5 // pred_region
      %s460 = ssub.s32 %s20, 1
      %s461 = smul.u32 128, %s30
      %p462 = scmp.lt.s32.totalorder %s461, 127
      %s463 = scalar_select %p462, %s461, 127
      %s464 = smul.addr %s463, 4
      %s465 = scalar_lea.vmem %s0, %s464
      %p466 = pneg %p58
      %p467 = pneg %p55
      %s468 = smul.u32 128, %s30
      %p469 = scmp.lt.s32.totalorder %s468, 127
      %s470 = scalar_select %p469, %s468, 127
      %s471 = smul.addr %s470, 4
      %s472 = scalar_lea.vmem %s1, %s471
      %p473 = pneg %p84
      %p474 = pneg %p81
      %s475 = smul.u32 8, %s30
      %p476 = scmp.lt.s32.totalorder %s475, 7
      %s477 = scalar_select %p476, %s475, 7
      %s478 = scalar_lea.vmem %s2, %s477
      %p479 = pneg %p110
      %p480 = pneg %p107
      %p481 = scmp.lt.s32.totalorder %s29, 1
      %s482 = scalar_select %p481, %s29, 1
      %s483 = smul.addr %s482, 8
      %s484 = scalar_lea.vmem %s3, %s483
      %p485 = pneg %p136
      %p486 = pneg %p133
      %p487 = pneg %p157
      %p488 = pneg %p154
      %p489 = pneg %p178
      %p490 = pneg %p175
      %p491 = pneg %p199
      %p492 = pneg %p196
      %p493 = pneg %p220
      %p494 = pneg %p217
      %p495 = pneg %p241
      %p496 = pneg %p238
      %p497 = pneg %p262
      %p498 = pneg %p259
      %p499 = pneg %p283
      %p500 = pneg %p280
      %p501 = pneg %p304
      %p502 = pneg %p301
      %p503 = pneg %p325
      %p504 = pneg %p322
      %p505 = pneg %p346
      %p506 = pneg %p343
      %p507 = pneg %p372
      %p508 = pneg %p369
      %p509 = scmp.lt.s32.totalorder %s29, 1
      %s510 = scalar_select %p509, %s29, 1
      %s511 = smul.addr %s510, 8
      %s512 = scalar_lea.vmem %s14, %s511
      %s513 = smul.u32 128, %s30
      %p514 = scmp.lt.s32.totalorder %s513, 127
      %s515 = scalar_select %p514, %s513, 127
      %s516 = smul.addr %s515, 4
      %s517 = scalar_lea.vmem %s0, %s516
      %s518 = smul.u32 128, %s30
      %s519 = smul.u32 128, %s30
      %p520 = scmp.lt.s32.totalorder %s519, 127
      %s521 = scalar_select %p520, %s519, 127
      %s522 = smul.addr %s521, 4
      %s523 = scalar_lea.vmem %s1, %s522
      %s524 = smul.u32 128, %s30
      %s525 = smul.u32 8, %s30
      %p526 = scmp.lt.s32.totalorder %s525, 7
      %s527 = scalar_select %p526, %s525, 7
      %s528 = scalar_lea.vmem %s2, %s527
      %s529 = smul.u32 8, %s30
      %p530 = scmp.lt.s32.totalorder %s29, 1
      %s531 = scalar_select %p530, %s29, 1
      %s532 = smul.addr %s531, 8
      %s533 = scalar_lea.vmem %s3, %s532
      %p534 = scmp.lt.s32.totalorder %s29, 1
      %s535 = scalar_select %p534, %s29, 1
      %s536 = smul.addr %s535, 8
      %s537 = scalar_lea.vmem %s14, %s536
      %p540 = scmp.eq.s32.totalorder %s30, 0
      // Predicated region
      $region77: #{node_encoder_forward.1} parent=75 // pred_check
        %p541 = pneg %p540
      $region78: #{node_encoder_forward.1} parent=75 // pred_check_branch
        %543 = sbr.rel (%p541) target = $region80
      $region79: #{node_encoder_forward.1} parent=75 // pred_region
        %vm544 = vcmask 269312
        %545 = vst.msk [vmem:[#allocation2] sm:$0xff] %vm544, 0.0
      $region80: #{node_encoder_forward.1} parent=75 // pred_fallthru
        _
      %v546 = vld [vmem:[%s517] sm:$0xf]
      %v547 = vld [vmem:[%s517 + $0x4] sm:$0xf]
      %v548 = vld [vmem:[%s517 + $0x8] sm:$0xf]
      %v549 = vld [vmem:[%s517 + $0xc] sm:$0xf]
      %v550 = vld [vmem:[%s517 + $0x10] sm:$0xf]
      %v551 = vld [vmem:[%s517 + $0x14] sm:$0xf]
      %v552 = vld [vmem:[%s517 + $0x18] sm:$0xf]
      %v553 = vld [vmem:[%s517 + $0x1c] sm:$0xf]
      %v554 = vld [vmem:[%s517 + $0x20] sm:$0xf]
      %v555 = vld [vmem:[%s517 + $0x24] sm:$0xf]
      %v556 = vld [vmem:[%s517 + $0x28] sm:$0xf]
      %v557 = vld [vmem:[%s517 + $0x2c] sm:$0xf]
      %v558 = vld [vmem:[%s517 + $0x30] sm:$0xf]
      %v559 = vld [vmem:[%s517 + $0x34] sm:$0xf]
      %v560 = vld [vmem:[%s517 + $0x38] sm:$0xf]
      %v561 = vld [vmem:[%s517 + $0x3c] sm:$0xf]
      %v562 = vld [vmem:[%s517 + $0x40] sm:$0xf]
      %v563 = vld [vmem:[%s517 + $0x44] sm:$0xf]
      %v564 = vld [vmem:[%s517 + $0x48] sm:$0xf]
      %v565 = vld [vmem:[%s517 + $0x4c] sm:$0xf]
      %v566 = vld [vmem:[%s517 + $0x50] sm:$0xf]
      %v567 = vld [vmem:[%s517 + $0x54] sm:$0xf]
      %v568 = vld [vmem:[%s517 + $0x58] sm:$0xf]
      %v569 = vld [vmem:[%s517 + $0x5c] sm:$0xf]
      %v570 = vld [vmem:[%s517 + $0x60] sm:$0xf]
      %v571 = vld [vmem:[%s517 + $0x64] sm:$0xf]
      %v572 = vld [vmem:[%s517 + $0x68] sm:$0xf]
      %v573 = vld [vmem:[%s517 + $0x6c] sm:$0xf]
      %v574 = vld [vmem:[%s517 + $0x70] sm:$0xf]
      %v575 = vld [vmem:[%s517 + $0x74] sm:$0xf]
      %v576 = vld [vmem:[%s517 + $0x78] sm:$0xf]
      %v577 = vld [vmem:[%s517 + $0x7c] sm:$0xf]
      %v578 = vld [vmem:[%s517 + $0x80] sm:$0xf]
      %v579 = vld [vmem:[%s517 + $0x84] sm:$0xf]
      %v580 = vld [vmem:[%s517 + $0x88] sm:$0xf]
      %v581 = vld [vmem:[%s517 + $0x8c] sm:$0xf]
      %v582 = vld [vmem:[%s517 + $0x90] sm:$0xf]
      %v583 = vld [vmem:[%s517 + $0x94] sm:$0xf]
      %v584 = vld [vmem:[%s517 + $0x98] sm:$0xf]
      %v585 = vld [vmem:[%s517 + $0x9c] sm:$0xf]
      %v586 = vld [vmem:[%s517 + $0xa0] sm:$0xf]
      %v587 = vld [vmem:[%s517 + $0xa4] sm:$0xf]
      %v588 = vld [vmem:[%s517 + $0xa8] sm:$0xf]
      %v589 = vld [vmem:[%s517 + $0xac] sm:$0xf]
      %v590 = vld [vmem:[%s517 + $0xb0] sm:$0xf]
      %v591 = vld [vmem:[%s517 + $0xb4] sm:$0xf]
      %v592 = vld [vmem:[%s517 + $0xb8] sm:$0xf]
      %v593 = vld [vmem:[%s517 + $0xbc] sm:$0xf]
      %v594 = vld [vmem:[%s517 + $0xc0] sm:$0xf]
      %v595 = vld [vmem:[%s517 + $0xc4] sm:$0xf]
      %v596 = vld [vmem:[%s517 + $0xc8] sm:$0xf]
      %v597 = vld [vmem:[%s517 + $0xcc] sm:$0xf]
      %v598 = vld [vmem:[%s517 + $0xd0] sm:$0xf]
      %v599 = vld [vmem:[%s517 + $0xd4] sm:$0xf]
      %v600 = vld [vmem:[%s517 + $0xd8] sm:$0xf]
      %v601 = vld [vmem:[%s517 + $0xdc] sm:$0xf]
      %v602 = vld [vmem:[%s517 + $0xe0] sm:$0xf]
      %v603 = vld [vmem:[%s517 + $0xe4] sm:$0xf]
      %v604 = vld [vmem:[%s517 + $0xe8] sm:$0xf]
      %v605 = vld [vmem:[%s517 + $0xec] sm:$0xf]
      %v606 = vld [vmem:[%s517 + $0xf0] sm:$0xf]
      %v607 = vld [vmem:[%s517 + $0xf4] sm:$0xf]
      %v608 = vld [vmem:[%s517 + $0xf8] sm:$0xf]
      %v609 = vld [vmem:[%s517 + $0xfc] sm:$0xf]
      %v610 = vld [vmem:[%s517 + $0x100] sm:$0xf]
      %v611 = vld [vmem:[%s517 + $0x104] sm:$0xf]
      %v612 = vld [vmem:[%s517 + $0x108] sm:$0xf]
      %v613 = vld [vmem:[%s517 + $0x10c] sm:$0xf]
      %v614 = vld [vmem:[%s517 + $0x110] sm:$0xf]
      %v615 = vld [vmem:[%s517 + $0x114] sm:$0xf]
      %v616 = vld [vmem:[%s517 + $0x118] sm:$0xf]
      %v617 = vld [vmem:[%s517 + $0x11c] sm:$0xf]
      %v618 = vld [vmem:[%s517 + $0x120] sm:$0xf]
      %v619 = vld [vmem:[%s517 + $0x124] sm:$0xf]
      %v620 = vld [vmem:[%s517 + $0x128] sm:$0xf]
      %v621 = vld [vmem:[%s517 + $0x12c] sm:$0xf]
      %v622 = vld [vmem:[%s517 + $0x130] sm:$0xf]
      %v623 = vld [vmem:[%s517 + $0x134] sm:$0xf]
      %v624 = vld [vmem:[%s517 + $0x138] sm:$0xf]
      %v625 = vld [vmem:[%s517 + $0x13c] sm:$0xf]
      %v626 = vld [vmem:[%s517 + $0x140] sm:$0xf]
      %v627 = vld [vmem:[%s517 + $0x144] sm:$0xf]
      %v628 = vld [vmem:[%s517 + $0x148] sm:$0xf]
      %v629 = vld [vmem:[%s517 + $0x14c] sm:$0xf]
      %v630 = vld [vmem:[%s517 + $0x150] sm:$0xf]
      %v631 = vld [vmem:[%s517 + $0x154] sm:$0xf]
      %v632 = vld [vmem:[%s517 + $0x158] sm:$0xf]
      %v633 = vld [vmem:[%s517 + $0x15c] sm:$0xf]
      %v634 = vld [vmem:[%s517 + $0x160] sm:$0xf]
      %v635 = vld [vmem:[%s517 + $0x164] sm:$0xf]
      %v636 = vld [vmem:[%s517 + $0x168] sm:$0xf]
      %v637 = vld [vmem:[%s517 + $0x16c] sm:$0xf]
      %v638 = vld [vmem:[%s517 + $0x170] sm:$0xf]
      %v639 = vld [vmem:[%s517 + $0x174] sm:$0xf]
      %v640 = vld [vmem:[%s517 + $0x178] sm:$0xf]
      %v641 = vld [vmem:[%s517 + $0x17c] sm:$0xf]
      %v642 = vld [vmem:[%s517 + $0x180] sm:$0xf]
      %v643 = vld [vmem:[%s517 + $0x184] sm:$0xf]
      %v644 = vld [vmem:[%s517 + $0x188] sm:$0xf]
      %v645 = vld [vmem:[%s517 + $0x18c] sm:$0xf]
      %v646 = vld [vmem:[%s517 + $0x190] sm:$0xf]
      %v647 = vld [vmem:[%s517 + $0x194] sm:$0xf]
      %v648 = vld [vmem:[%s517 + $0x198] sm:$0xf]
      %v649 = vld [vmem:[%s517 + $0x19c] sm:$0xf]
      %v650 = vld [vmem:[%s517 + $0x1a0] sm:$0xf]
      %v651 = vld [vmem:[%s517 + $0x1a4] sm:$0xf]
      %v652 = vld [vmem:[%s517 + $0x1a8] sm:$0xf]
      %v653 = vld [vmem:[%s517 + $0x1ac] sm:$0xf]
      %v654 = vld [vmem:[%s517 + $0x1b0] sm:$0xf]
      %v655 = vld [vmem:[%s517 + $0x1b4] sm:$0xf]
      %v656 = vld [vmem:[%s517 + $0x1b8] sm:$0xf]
      %v657 = vld [vmem:[%s517 + $0x1bc] sm:$0xf]
      %v658 = vld [vmem:[%s517 + $0x1c0] sm:$0xf]
      %v659 = vld [vmem:[%s517 + $0x1c4] sm:$0xf]
      %v660 = vld [vmem:[%s517 + $0x1c8] sm:$0xf]
      %v661 = vld [vmem:[%s517 + $0x1cc] sm:$0xf]
      %v662 = vld [vmem:[%s517 + $0x1d0] sm:$0xf]
      %v663 = vld [vmem:[%s517 + $0x1d4] sm:$0xf]
      %v664 = vld [vmem:[%s517 + $0x1d8] sm:$0xf]
      %v665 = vld [vmem:[%s517 + $0x1dc] sm:$0xf]
      %v666 = vld [vmem:[%s517 + $0x1e0] sm:$0xf]
      %v667 = vld [vmem:[%s517 + $0x1e4] sm:$0xf]
      %v668 = vld [vmem:[%s517 + $0x1e8] sm:$0xf]
      %v669 = vld [vmem:[%s517 + $0x1ec] sm:$0xf]
      %v670 = vld [vmem:[%s517 + $0x1f0] sm:$0xf]
      %v671 = vld [vmem:[%s517 + $0x1f4] sm:$0xf]
      %v672 = vld [vmem:[%s517 + $0x1f8] sm:$0xf]
      %v673 = vld [vmem:[%s517 + $0x1fc] sm:$0xf]
      %v674 = vld [vmem:[%s4] sm:$0x3]
      %v675 = vld [vmem:[%s523] sm:$0xf]
      %v676 = vld [vmem:[%s523 + $0x4] sm:$0xf]
      %v677 = vld [vmem:[%s523 + $0x8] sm:$0xf]
      %v678 = vld [vmem:[%s523 + $0xc] sm:$0xf]
      %v679 = vld [vmem:[%s523 + $0x10] sm:$0xf]
      %v680 = vld [vmem:[%s523 + $0x14] sm:$0xf]
      %v681 = vld [vmem:[%s523 + $0x18] sm:$0xf]
      %v682 = vld [vmem:[%s523 + $0x1c] sm:$0xf]
      %v683 = vld [vmem:[%s523 + $0x20] sm:$0xf]
      %v684 = vld [vmem:[%s523 + $0x24] sm:$0xf]
      %v685 = vld [vmem:[%s523 + $0x28] sm:$0xf]
      %v686 = vld [vmem:[%s523 + $0x2c] sm:$0xf]
      %v687 = vld [vmem:[%s523 + $0x30] sm:$0xf]
      %v688 = vld [vmem:[%s523 + $0x34] sm:$0xf]
      %v689 = vld [vmem:[%s523 + $0x38] sm:$0xf]
      %v690 = vld [vmem:[%s523 + $0x3c] sm:$0xf]
      %v691 = vld [vmem:[%s523 + $0x40] sm:$0xf]
      %v692 = vld [vmem:[%s523 + $0x44] sm:$0xf]
      %v693 = vld [vmem:[%s523 + $0x48] sm:$0xf]
      %v694 = vld [vmem:[%s523 + $0x4c] sm:$0xf]
      %v695 = vld [vmem:[%s523 + $0x50] sm:$0xf]
      %v696 = vld [vmem:[%s523 + $0x54] sm:$0xf]
      %v697 = vld [vmem:[%s523 + $0x58] sm:$0xf]
      %v698 = vld [vmem:[%s523 + $0x5c] sm:$0xf]
      %v699 = vld [vmem:[%s523 + $0x60] sm:$0xf]
      %v700 = vld [vmem:[%s523 + $0x64] sm:$0xf]
      %v701 = vld [vmem:[%s523 + $0x68] sm:$0xf]
      %v702 = vld [vmem:[%s523 + $0x6c] sm:$0xf]
      %v703 = vld [vmem:[%s523 + $0x70] sm:$0xf]
      %v704 = vld [vmem:[%s523 + $0x74] sm:$0xf]
      %v705 = vld [vmem:[%s523 + $0x78] sm:$0xf]
      %v706 = vld [vmem:[%s523 + $0x7c] sm:$0xf]
      %v707 = vld [vmem:[%s523 + $0x80] sm:$0xf]
      %v708 = vld [vmem:[%s523 + $0x84] sm:$0xf]
      %v709 = vld [vmem:[%s523 + $0x88] sm:$0xf]
      %v710 = vld [vmem:[%s523 + $0x8c] sm:$0xf]
      %v711 = vld [vmem:[%s523 + $0x90] sm:$0xf]
      %v712 = vld [vmem:[%s523 + $0x94] sm:$0xf]
      %v713 = vld [vmem:[%s523 + $0x98] sm:$0xf]
      %v714 = vld [vmem:[%s523 + $0x9c] sm:$0xf]
      %v715 = vld [vmem:[%s523 + $0xa0] sm:$0xf]
      %v716 = vld [vmem:[%s523 + $0xa4] sm:$0xf]
      %v717 = vld [vmem:[%s523 + $0xa8] sm:$0xf]
      %v718 = vld [vmem:[%s523 + $0xac] sm:$0xf]
      %v719 = vld [vmem:[%s523 + $0xb0] sm:$0xf]
      %v720 = vld [vmem:[%s523 + $0xb4] sm:$0xf]
      %v721 = vld [vmem:[%s523 + $0xb8] sm:$0xf]
      %v722 = vld [vmem:[%s523 + $0xbc] sm:$0xf]
      %v723 = vld [vmem:[%s523 + $0xc0] sm:$0xf]
      %v724 = vld [vmem:[%s523 + $0xc4] sm:$0xf]
      %v725 = vld [vmem:[%s523 + $0xc8] sm:$0xf]
      %v726 = vld [vmem:[%s523 + $0xcc] sm:$0xf]
      %v727 = vld [vmem:[%s523 + $0xd0] sm:$0xf]
      %v728 = vld [vmem:[%s523 + $0xd4] sm:$0xf]
      %v729 = vld [vmem:[%s523 + $0xd8] sm:$0xf]
      %v730 = vld [vmem:[%s523 + $0xdc] sm:$0xf]
      %v731 = vld [vmem:[%s523 + $0xe0] sm:$0xf]
      %v732 = vld [vmem:[%s523 + $0xe4] sm:$0xf]
      %v733 = vld [vmem:[%s523 + $0xe8] sm:$0xf]
      %v734 = vld [vmem:[%s523 + $0xec] sm:$0xf]
      %v735 = vld [vmem:[%s523 + $0xf0] sm:$0xf]
      %v736 = vld [vmem:[%s523 + $0xf4] sm:$0xf]
      %v737 = vld [vmem:[%s523 + $0xf8] sm:$0xf]
      %v738 = vld [vmem:[%s523 + $0xfc] sm:$0xf]
      %v739 = vld [vmem:[%s523 + $0x100] sm:$0xf]
      %v740 = vld [vmem:[%s523 + $0x104] sm:$0xf]
      %v741 = vld [vmem:[%s523 + $0x108] sm:$0xf]
      %v742 = vld [vmem:[%s523 + $0x10c] sm:$0xf]
      %v743 = vld [vmem:[%s523 + $0x110] sm:$0xf]
      %v744 = vld [vmem:[%s523 + $0x114] sm:$0xf]
      %v745 = vld [vmem:[%s523 + $0x118] sm:$0xf]
      %v746 = vld [vmem:[%s523 + $0x11c] sm:$0xf]
      %v747 = vld [vmem:[%s523 + $0x120] sm:$0xf]
      %v748 = vld [vmem:[%s523 + $0x124] sm:$0xf]
      %v749 = vld [vmem:[%s523 + $0x128] sm:$0xf]
      %v750 = vld [vmem:[%s523 + $0x12c] sm:$0xf]
      %v751 = vld [vmem:[%s523 + $0x130] sm:$0xf]
      %v752 = vld [vmem:[%s523 + $0x134] sm:$0xf]
      %v753 = vld [vmem:[%s523 + $0x138] sm:$0xf]
      %v754 = vld [vmem:[%s523 + $0x13c] sm:$0xf]
      %v755 = vld [vmem:[%s523 + $0x140] sm:$0xf]
      %v756 = vld [vmem:[%s523 + $0x144] sm:$0xf]
      %v757 = vld [vmem:[%s523 + $0x148] sm:$0xf]
      %v758 = vld [vmem:[%s523 + $0x14c] sm:$0xf]
      %v759 = vld [vmem:[%s523 + $0x150] sm:$0xf]
      %v760 = vld [vmem:[%s523 + $0x154] sm:$0xf]
      %v761 = vld [vmem:[%s523 + $0x158] sm:$0xf]
      %v762 = vld [vmem:[%s523 + $0x15c] sm:$0xf]
      %v763 = vld [vmem:[%s523 + $0x160] sm:$0xf]
      %v764 = vld [vmem:[%s523 + $0x164] sm:$0xf]
      %v765 = vld [vmem:[%s523 + $0x168] sm:$0xf]
      %v766 = vld [vmem:[%s523 + $0x16c] sm:$0xf]
      %v767 = vld [vmem:[%s523 + $0x170] sm:$0xf]
      %v768 = vld [vmem:[%s523 + $0x174] sm:$0xf]
      %v769 = vld [vmem:[%s523 + $0x178] sm:$0xf]
      %v770 = vld [vmem:[%s523 + $0x17c] sm:$0xf]
      %v771 = vld [vmem:[%s523 + $0x180] sm:$0xf]
      %v772 = vld [vmem:[%s523 + $0x184] sm:$0xf]
      %v773 = vld [vmem:[%s523 + $0x188] sm:$0xf]
      %v774 = vld [vmem:[%s523 + $0x18c] sm:$0xf]
      %v775 = vld [vmem:[%s523 + $0x190] sm:$0xf]
      %v776 = vld [vmem:[%s523 + $0x194] sm:$0xf]
      %v777 = vld [vmem:[%s523 + $0x198] sm:$0xf]
      %v778 = vld [vmem:[%s523 + $0x19c] sm:$0xf]
      %v779 = vld [vmem:[%s523 + $0x1a0] sm:$0xf]
      %v780 = vld [vmem:[%s523 + $0x1a4] sm:$0xf]
      %v781 = vld [vmem:[%s523 + $0x1a8] sm:$0xf]
      %v782 = vld [vmem:[%s523 + $0x1ac] sm:$0xf]
      %v783 = vld [vmem:[%s523 + $0x1b0] sm:$0xf]
      %v784 = vld [vmem:[%s523 + $0x1b4] sm:$0xf]
      %v785 = vld [vmem:[%s523 + $0x1b8] sm:$0xf]
      %v786 = vld [vmem:[%s523 + $0x1bc] sm:$0xf]
      %v787 = vld [vmem:[%s523 + $0x1c0] sm:$0xf]
      %v788 = vld [vmem:[%s523 + $0x1c4] sm:$0xf]
      %v789 = vld [vmem:[%s523 + $0x1c8] sm:$0xf]
      %v790 = vld [vmem:[%s523 + $0x1cc] sm:$0xf]
      %v791 = vld [vmem:[%s523 + $0x1d0] sm:$0xf]
      %v792 = vld [vmem:[%s523 + $0x1d4] sm:$0xf]
      %v793 = vld [vmem:[%s523 + $0x1d8] sm:$0xf]
      %v794 = vld [vmem:[%s523 + $0x1dc] sm:$0xf]
      %v795 = vld [vmem:[%s523 + $0x1e0] sm:$0xf]
      %v796 = vld [vmem:[%s523 + $0x1e4] sm:$0xf]
      %v797 = vld [vmem:[%s523 + $0x1e8] sm:$0xf]
      %v798 = vld [vmem:[%s523 + $0x1ec] sm:$0xf]
      %v799 = vld [vmem:[%s523 + $0x1f0] sm:$0xf]
      %v800 = vld [vmem:[%s523 + $0x1f4] sm:$0xf]
      %v801 = vld [vmem:[%s523 + $0x1f8] sm:$0xf]
      %v802 = vld [vmem:[%s523 + $0x1fc] sm:$0xf]
      %v803 = vld [vmem:[%s5] sm:$0xf]
      %v804 = vld [vmem:[%s5 + $0x4] sm:$0xf]
      %v805 = vld [vmem:[%s5 + $0x8] sm:$0xf]
      %v806 = vld [vmem:[%s5 + $0xc] sm:$0xf]
      %v935 = vunpack.c.l.b16 %v675
      %v936 = vunpack.c.l.b16 %v676
      %v937 = vunpack.c.l.b16 %v677
      %v938 = vunpack.c.l.b16 %v678
      %v939 = vunpack.c.l.b16 %v679
      %v940 = vunpack.c.l.b16 %v680
      %v941 = vunpack.c.l.b16 %v681
      %v942 = vunpack.c.l.b16 %v682
      %v943 = vunpack.c.l.b16 %v683
      %v944 = vunpack.c.l.b16 %v684
      %v945 = vunpack.c.l.b16 %v685
      %v946 = vunpack.c.l.b16 %v686
      %v947 = vunpack.c.l.b16 %v687
      %v948 = vunpack.c.l.b16 %v688
      %v949 = vunpack.c.l.b16 %v689
      %v950 = vunpack.c.l.b16 %v690
      %v951 = vunpack.c.l.b16 %v691
      %v952 = vunpack.c.l.b16 %v692
      %v953 = vunpack.c.l.b16 %v693
      %v954 = vunpack.c.l.b16 %v694
      %v955 = vunpack.c.l.b16 %v695
      %v956 = vunpack.c.l.b16 %v696
      %v957 = vunpack.c.l.b16 %v697
      %v958 = vunpack.c.l.b16 %v698
      %v959 = vunpack.c.l.b16 %v699
      %v960 = vunpack.c.l.b16 %v700
      %v961 = vunpack.c.l.b16 %v701
      %v962 = vunpack.c.l.b16 %v702
      %v963 = vunpack.c.l.b16 %v703
      %v964 = vunpack.c.l.b16 %v704
      %v965 = vunpack.c.l.b16 %v705
      %v966 = vunpack.c.l.b16 %v706
      %v967 = vunpack.c.l.b16 %v707
      %v968 = vunpack.c.l.b16 %v708
      %v969 = vunpack.c.l.b16 %v709
      %v970 = vunpack.c.l.b16 %v710
      %v971 = vunpack.c.l.b16 %v711
      %v972 = vunpack.c.l.b16 %v712
      %v973 = vunpack.c.l.b16 %v713
      %v974 = vunpack.c.l.b16 %v714
      %v975 = vunpack.c.l.b16 %v715
      %v976 = vunpack.c.l.b16 %v716
      %v977 = vunpack.c.l.b16 %v717
      %v978 = vunpack.c.l.b16 %v718
      %v979 = vunpack.c.l.b16 %v719
      %v980 = vunpack.c.l.b16 %v720
      %v981 = vunpack.c.l.b16 %v721
      %v982 = vunpack.c.l.b16 %v722
      %v983 = vunpack.c.l.b16 %v723
      %v984 = vunpack.c.l.b16 %v724
      %v985 = vunpack.c.l.b16 %v725
      %v986 = vunpack.c.l.b16 %v726
      %v987 = vunpack.c.l.b16 %v727
      %v988 = vunpack.c.l.b16 %v728
      %v989 = vunpack.c.l.b16 %v729
      %v990 = vunpack.c.l.b16 %v730
      %v991 = vunpack.c.l.b16 %v731
      %v992 = vunpack.c.l.b16 %v732
      %v993 = vunpack.c.l.b16 %v733
      %v994 = vunpack.c.l.b16 %v734
      %v995 = vunpack.c.l.b16 %v735
      %v996 = vunpack.c.l.b16 %v736
      %v997 = vunpack.c.l.b16 %v737
      %v998 = vunpack.c.l.b16 %v738
      %v999 = vunpack.c.l.b16 %v739
      %v1000 = vunpack.c.l.b16 %v740
      %v1001 = vunpack.c.l.b16 %v741
      %v1002 = vunpack.c.l.b16 %v742
      %v1003 = vunpack.c.l.b16 %v743
      %v1004 = vunpack.c.l.b16 %v744
      %v1005 = vunpack.c.l.b16 %v745
      %v1006 = vunpack.c.l.b16 %v746
      %v1007 = vunpack.c.l.b16 %v747
      %v1008 = vunpack.c.l.b16 %v748
      %v1009 = vunpack.c.l.b16 %v749
      %v1010 = vunpack.c.l.b16 %v750
      %v1011 = vunpack.c.l.b16 %v751
      %v1012 = vunpack.c.l.b16 %v752
      %v1013 = vunpack.c.l.b16 %v753
      %v1014 = vunpack.c.l.b16 %v754
      %v1015 = vunpack.c.l.b16 %v755
      %v1016 = vunpack.c.l.b16 %v756
      %v1017 = vunpack.c.l.b16 %v757
      %v1018 = vunpack.c.l.b16 %v758
      %v1019 = vunpack.c.l.b16 %v759
      %v1020 = vunpack.c.l.b16 %v760
      %v1021 = vunpack.c.l.b16 %v761
      %v1022 = vunpack.c.l.b16 %v762
      %v1023 = vunpack.c.l.b16 %v763
      %v1024 = vunpack.c.l.b16 %v764
      %v1025 = vunpack.c.l.b16 %v765
      %v1026 = vunpack.c.l.b16 %v766
      %v1027 = vunpack.c.l.b16 %v767
      %v1028 = vunpack.c.l.b16 %v768
      %v1029 = vunpack.c.l.b16 %v769
      %v1030 = vunpack.c.l.b16 %v770
      %v1031 = vunpack.c.l.b16 %v771
      %v1032 = vunpack.c.l.b16 %v772
      %v1033 = vunpack.c.l.b16 %v773
      %v1034 = vunpack.c.l.b16 %v774
      %v1035 = vunpack.c.l.b16 %v775
      %v1036 = vunpack.c.l.b16 %v776
      %v1037 = vunpack.c.l.b16 %v777
      %v1038 = vunpack.c.l.b16 %v778
      %v1039 = vunpack.c.l.b16 %v779
      %v1040 = vunpack.c.l.b16 %v780
      %v1041 = vunpack.c.l.b16 %v781
      %v1042 = vunpack.c.l.b16 %v782
      %v1043 = vunpack.c.l.b16 %v783
      %v1044 = vunpack.c.l.b16 %v784
      %v1045 = vunpack.c.l.b16 %v785
      %v1046 = vunpack.c.l.b16 %v786
      %v1047 = vunpack.c.l.b16 %v787
      %v1048 = vunpack.c.l.b16 %v788
      %v1049 = vunpack.c.l.b16 %v789
      %v1050 = vunpack.c.l.b16 %v790
      %v1051 = vunpack.c.l.b16 %v791
      %v1052 = vunpack.c.l.b16 %v792
      %v1053 = vunpack.c.l.b16 %v793
      %v1054 = vunpack.c.l.b16 %v794
      %v1055 = vunpack.c.l.b16 %v795
      %v1056 = vunpack.c.l.b16 %v796
      %v1057 = vunpack.c.l.b16 %v797
      %v1058 = vunpack.c.l.b16 %v798
      %v1059 = vunpack.c.l.b16 %v799
      %v1060 = vunpack.c.l.b16 %v800
      %v1061 = vunpack.c.l.b16 %v801
      %v1062 = vunpack.c.l.b16 %v802
      %v1063 = vpack.c.b16 %v936, %v935
      %v1064 = vpack.c.b16 %v938, %v937
      %v1065 = vpack.c.b16 %v940, %v939
      %v1066 = vpack.c.b16 %v942, %v941
      %v1067 = vpack.c.b16 %v944, %v943
      %v1068 = vpack.c.b16 %v946, %v945
      %v1069 = vpack.c.b16 %v948, %v947
      %v1070 = vpack.c.b16 %v950, %v949
      %v1071 = vpack.c.b16 %v952, %v951
      %v1072 = vpack.c.b16 %v954, %v953
      %v1073 = vpack.c.b16 %v956, %v955
      %v1074 = vpack.c.b16 %v958, %v957
      %v1075 = vpack.c.b16 %v960, %v959
      %v1076 = vpack.c.b16 %v962, %v961
      %v1077 = vpack.c.b16 %v964, %v963
      %v1078 = vpack.c.b16 %v966, %v965
      %v1079 = vpack.c.b16 %v968, %v967
      %v1080 = vpack.c.b16 %v970, %v969
      %v1081 = vpack.c.b16 %v972, %v971
      %v1082 = vpack.c.b16 %v974, %v973
      %v1083 = vpack.c.b16 %v976, %v975
      %v1084 = vpack.c.b16 %v978, %v977
      %v1085 = vpack.c.b16 %v980, %v979
      %v1086 = vpack.c.b16 %v982, %v981
      %v1087 = vpack.c.b16 %v984, %v983
      %v1088 = vpack.c.b16 %v986, %v985
      %v1089 = vpack.c.b16 %v988, %v987
      %v1090 = vpack.c.b16 %v990, %v989
      %v1091 = vpack.c.b16 %v992, %v991
      %v1092 = vpack.c.b16 %v994, %v993
      %v1093 = vpack.c.b16 %v996, %v995
      %v1094 = vpack.c.b16 %v998, %v997
      %v1095 = vpack.c.b16 %v1000, %v999
      %v1096 = vpack.c.b16 %v1002, %v1001
      %v1097 = vpack.c.b16 %v1004, %v1003
      %v1098 = vpack.c.b16 %v1006, %v1005
      %v1099 = vpack.c.b16 %v1008, %v1007
      %v1100 = vpack.c.b16 %v1010, %v1009
      %v1101 = vpack.c.b16 %v1012, %v1011
      %v1102 = vpack.c.b16 %v1014, %v1013
      %v1103 = vpack.c.b16 %v1016, %v1015
      %v1104 = vpack.c.b16 %v1018, %v1017
      %v1105 = vpack.c.b16 %v1020, %v1019
      %v1106 = vpack.c.b16 %v1022, %v1021
      %v1107 = vpack.c.b16 %v1024, %v1023
      %v1108 = vpack.c.b16 %v1026, %v1025
      %v1109 = vpack.c.b16 %v1028, %v1027
      %v1110 = vpack.c.b16 %v1030, %v1029
      %v1111 = vpack.c.b16 %v1032, %v1031
      %v1112 = vpack.c.b16 %v1034, %v1033
      %v1113 = vpack.c.b16 %v1036, %v1035
      %v1114 = vpack.c.b16 %v1038, %v1037
      %v1115 = vpack.c.b16 %v1040, %v1039
      %v1116 = vpack.c.b16 %v1042, %v1041
      %v1117 = vpack.c.b16 %v1044, %v1043
      %v1118 = vpack.c.b16 %v1046, %v1045
      %v1119 = vpack.c.b16 %v1048, %v1047
      %v1120 = vpack.c.b16 %v1050, %v1049
      %v1121 = vpack.c.b16 %v1052, %v1051
      %v1122 = vpack.c.b16 %v1054, %v1053
      %v1123 = vpack.c.b16 %v1056, %v1055
      %v1124 = vpack.c.b16 %v1058, %v1057
      %v1125 = vpack.c.b16 %v1060, %v1059
      %v1126 = vpack.c.b16 %v1062, %v1061
      %v1131 = vunpack.c.l.b16 %v803
      %v1132 = vunpack.c.l.b16 %v804
      %v1133 = vunpack.c.l.b16 %v805
      %v1134 = vunpack.c.l.b16 %v806
      %v1135 = vpack.c.b16 %v1132, %v1131
      %v1136 = vpack.c.b16 %v1134, %v1133
      %vm1139 = vcmask 261120
      %v1141 = vsel %vm1139, %v1063, 0
      %v1144 = vsel %vm1139, %v1064, 0
      %v1147 = vsel %vm1139, %v1065, 0
      %v1150 = vsel %vm1139, %v1066, 0
      %v1153 = vsel %vm1139, %v1067, 0
      %v1156 = vsel %vm1139, %v1068, 0
      %v1159 = vsel %vm1139, %v1069, 0
      %v1162 = vsel %vm1139, %v1070, 0
      %v1165 = vsel %vm1139, %v1071, 0
      %v1168 = vsel %vm1139, %v1072, 0
      %v1171 = vsel %vm1139, %v1073, 0
      %v1174 = vsel %vm1139, %v1074, 0
      %v1177 = vsel %vm1139, %v1075, 0
      %v1180 = vsel %vm1139, %v1076, 0
      %v1183 = vsel %vm1139, %v1077, 0
      %v1186 = vsel %vm1139, %v1078, 0
      %v1189 = vsel %vm1139, %v1079, 0
      %v1192 = vsel %vm1139, %v1080, 0
      %v1195 = vsel %vm1139, %v1081, 0
      %v1198 = vsel %vm1139, %v1082, 0
      %v1201 = vsel %vm1139, %v1083, 0
      %v1204 = vsel %vm1139, %v1084, 0
      %v1207 = vsel %vm1139, %v1085, 0
      %v1210 = vsel %vm1139, %v1086, 0
      %v1213 = vsel %vm1139, %v1087, 0
      %v1216 = vsel %vm1139, %v1088, 0
      %v1219 = vsel %vm1139, %v1089, 0
      %v1222 = vsel %vm1139, %v1090, 0
      %v1225 = vsel %vm1139, %v1091, 0
      %v1228 = vsel %vm1139, %v1092, 0
      %v1231 = vsel %vm1139, %v1093, 0
      %v1234 = vsel %vm1139, %v1094, 0
      %v1237 = vsel %vm1139, %v1095, 0
      %v1240 = vsel %vm1139, %v1096, 0
      %v1243 = vsel %vm1139, %v1097, 0
      %v1246 = vsel %vm1139, %v1098, 0
      %v1249 = vsel %vm1139, %v1099, 0
      %v1252 = vsel %vm1139, %v1100, 0
      %v1255 = vsel %vm1139, %v1101, 0
      %v1258 = vsel %vm1139, %v1102, 0
      %v1261 = vsel %vm1139, %v1103, 0
      %v1264 = vsel %vm1139, %v1104, 0
      %v1267 = vsel %vm1139, %v1105, 0
      %v1270 = vsel %vm1139, %v1106, 0
      %v1273 = vsel %vm1139, %v1107, 0
      %v1276 = vsel %vm1139, %v1108, 0
      %v1279 = vsel %vm1139, %v1109, 0
      %v1282 = vsel %vm1139, %v1110, 0
      %v1285 = vsel %vm1139, %v1111, 0
      %v1288 = vsel %vm1139, %v1112, 0
      %v1291 = vsel %vm1139, %v1113, 0
      %v1294 = vsel %vm1139, %v1114, 0
      %v1297 = vsel %vm1139, %v1115, 0
      %v1300 = vsel %vm1139, %v1116, 0
      %v1303 = vsel %vm1139, %v1117, 0
      %v1306 = vsel %vm1139, %v1118, 0
      %v1309 = vsel %vm1139, %v1119, 0
      %v1312 = vsel %vm1139, %v1120, 0
      %v1315 = vsel %vm1139, %v1121, 0
      %v1318 = vsel %vm1139, %v1122, 0
      %v1321 = vsel %vm1139, %v1123, 0
      %v1324 = vsel %vm1139, %v1124, 0
      %v1327 = vsel %vm1139, %v1125, 0
      %v1330 = vsel %vm1139, %v1126, 0
      %1332 = vmatpush.bf16.msra.mxu0 0
      %1333 = vmatpush.bf16.msra.mxu0 0
      %1334 = vmatpush.bf16.msra.mxu0 0
      %1335 = vmatpush.bf16.msra.mxu0 0
      %1336 = vmatpush.bf16.msra.mxu0 0
      %1337 = vmatpush.bf16.msra.mxu0 0
      %1338 = vmatpush.bf16.msra.mxu0 %v1136
      %1339 = vmatpush.bf16.msra.mxu0 %v1135
      %1340 = vmatmul.bf16.gmra.mxu0 %v1141
      %v1341 = vpop.f32.mrf.mxu0
      %v1342 = vadd.f32 0.0, %v1341
      %v1343 = vpop.f32.mrf.mxu0
      %v1344 = vadd.f32 0.0, %v1343
      %1345 = vmatmul.bf16.gmra.mxu0 %v1144
      %v1346 = vpop.f32.mrf.mxu0
      %v1347 = vadd.f32 0.0, %v1346
      %v1348 = vpop.f32.mrf.mxu0
      %v1349 = vadd.f32 0.0, %v1348
      %1350 = vmatmul.bf16.gmra.mxu0 %v1147
      %v1351 = vpop.f32.mrf.mxu0
      %v1352 = vadd.f32 0.0, %v1351
      %v1353 = vpop.f32.mrf.mxu0
      %v1354 = vadd.f32 0.0, %v1353
      %1355 = vmatmul.bf16.gmra.mxu0 %v1150
      %v1356 = vpop.f32.mrf.mxu0
      %v1357 = vadd.f32 0.0, %v1356
      %v1358 = vpop.f32.mrf.mxu0
      %v1359 = vadd.f32 0.0, %v1358
      %1360 = vmatmul.bf16.gmra.mxu0 %v1153
      %v1361 = vpop.f32.mrf.mxu0
      %v1362 = vadd.f32 0.0, %v1361
      %v1363 = vpop.f32.mrf.mxu0
      %v1364 = vadd.f32 0.0, %v1363
      %1365 = vmatmul.bf16.gmra.mxu0 %v1156
      %v1366 = vpop.f32.mrf.mxu0
      %v1367 = vadd.f32 0.0, %v1366
      %v1368 = vpop.f32.mrf.mxu0
      %v1369 = vadd.f32 0.0, %v1368
      %1370 = vmatmul.bf16.gmra.mxu0 %v1159
      %v1371 = vpop.f32.mrf.mxu0
      %v1372 = vadd.f32 0.0, %v1371
      %v1373 = vpop.f32.mrf.mxu0
      %v1374 = vadd.f32 0.0, %v1373
      %1375 = vmatmul.bf16.gmra.mxu0 %v1162
      %v1376 = vpop.f32.mrf.mxu0
      %v1377 = vadd.f32 0.0, %v1376
      %v1378 = vpop.f32.mrf.mxu0
      %v1379 = vadd.f32 0.0, %v1378
      %1380 = vmatmul.bf16.gmra.mxu0 %v1165
      %v1381 = vpop.f32.mrf.mxu0
      %v1382 = vadd.f32 0.0, %v1381
      %v1383 = vpop.f32.mrf.mxu0
      %v1384 = vadd.f32 0.0, %v1383
      %1385 = vmatmul.bf16.gmra.mxu0 %v1168
      %v1386 = vpop.f32.mrf.mxu0
      %v1387 = vadd.f32 0.0, %v1386
      %v1388 = vpop.f32.mrf.mxu0
      %v1389 = vadd.f32 0.0, %v1388
      %1390 = vmatmul.bf16.gmra.mxu0 %v1171
      %v1391 = vpop.f32.mrf.mxu0
      %v1392 = vadd.f32 0.0, %v1391
      %v1393 = vpop.f32.mrf.mxu0
      %v1394 = vadd.f32 0.0, %v1393
      %1395 = vmatmul.bf16.gmra.mxu0 %v1174
      %v1396 = vpop.f32.mrf.mxu0
      %v1397 = vadd.f32 0.0, %v1396
      %v1398 = vpop.f32.mrf.mxu0
      %v1399 = vadd.f32 0.0, %v1398
      %1400 = vmatmul.bf16.gmra.mxu0 %v1177
      %v1401 = vpop.f32.mrf.mxu0
      %v1402 = vadd.f32 0.0, %v1401
      %v1403 = vpop.f32.mrf.mxu0
      %v1404 = vadd.f32 0.0, %v1403
      %1405 = vmatmul.bf16.gmra.mxu0 %v1180
      %v1406 = vpop.f32.mrf.mxu0
      %v1407 = vadd.f32 0.0, %v1406
      %v1408 = vpop.f32.mrf.mxu0
      %v1409 = vadd.f32 0.0, %v1408
      %1410 = vmatmul.bf16.gmra.mxu0 %v1183
      %v1411 = vpop.f32.mrf.mxu0
      %v1412 = vadd.f32 0.0, %v1411
      %v1413 = vpop.f32.mrf.mxu0
      %v1414 = vadd.f32 0.0, %v1413
      %1415 = vmatmul.bf16.gmra.mxu0 %v1186
      %v1416 = vpop.f32.mrf.mxu0
      %v1417 = vadd.f32 0.0, %v1416
      %v1418 = vpop.f32.mrf.mxu0
      %v1419 = vadd.f32 0.0, %v1418
      %1420 = vmatmul.bf16.gmra.mxu0 %v1189
      %v1421 = vpop.f32.mrf.mxu0
      %v1422 = vadd.f32 0.0, %v1421
      %v1423 = vpop.f32.mrf.mxu0
      %v1424 = vadd.f32 0.0, %v1423
      %1425 = vmatmul.bf16.gmra.mxu0 %v1192
      %v1426 = vpop.f32.mrf.mxu0
      %v1427 = vadd.f32 0.0, %v1426
      %v1428 = vpop.f32.mrf.mxu0
      %v1429 = vadd.f32 0.0, %v1428
      %1430 = vmatmul.bf16.gmra.mxu0 %v1195
      %v1431 = vpop.f32.mrf.mxu0
      %v1432 = vadd.f32 0.0, %v1431
      %v1433 = vpop.f32.mrf.mxu0
      %v1434 = vadd.f32 0.0, %v1433
      %1435 = vmatmul.bf16.gmra.mxu0 %v1198
      %v1436 = vpop.f32.mrf.mxu0
      %v1437 = vadd.f32 0.0, %v1436
      %v1438 = vpop.f32.mrf.mxu0
      %v1439 = vadd.f32 0.0, %v1438
      %1440 = vmatmul.bf16.gmra.mxu0 %v1201
      %v1441 = vpop.f32.mrf.mxu0
      %v1442 = vadd.f32 0.0, %v1441
      %v1443 = vpop.f32.mrf.mxu0
      %v1444 = vadd.f32 0.0, %v1443
      %1445 = vmatmul.bf16.gmra.mxu0 %v1204
      %v1446 = vpop.f32.mrf.mxu0
      %v1447 = vadd.f32 0.0, %v1446
      %v1448 = vpop.f32.mrf.mxu0
      %v1449 = vadd.f32 0.0, %v1448
      %1450 = vmatmul.bf16.gmra.mxu0 %v1207
      %v1451 = vpop.f32.mrf.mxu0
      %v1452 = vadd.f32 0.0, %v1451
      %v1453 = vpop.f32.mrf.mxu0
      %v1454 = vadd.f32 0.0, %v1453
      %1455 = vmatmul.bf16.gmra.mxu0 %v1210
      %v1456 = vpop.f32.mrf.mxu0
      %v1457 = vadd.f32 0.0, %v1456
      %v1458 = vpop.f32.mrf.mxu0
      %v1459 = vadd.f32 0.0, %v1458
      %1460 = vmatmul.bf16.gmra.mxu0 %v1213
      %v1461 = vpop.f32.mrf.mxu0
      %v1462 = vadd.f32 0.0, %v1461
      %v1463 = vpop.f32.mrf.mxu0
      %v1464 = vadd.f32 0.0, %v1463
      %1465 = vmatmul.bf16.gmra.mxu0 %v1216
      %v1466 = vpop.f32.mrf.mxu0
      %v1467 = vadd.f32 0.0, %v1466
      %v1468 = vpop.f32.mrf.mxu0
      %v1469 = vadd.f32 0.0, %v1468
      %1470 = vmatmul.bf16.gmra.mxu0 %v1219
      %v1471 = vpop.f32.mrf.mxu0
      %v1472 = vadd.f32 0.0, %v1471
      %v1473 = vpop.f32.mrf.mxu0
      %v1474 = vadd.f32 0.0, %v1473
      %1475 = vmatmul.bf16.gmra.mxu0 %v1222
      %v1476 = vpop.f32.mrf.mxu0
      %v1477 = vadd.f32 0.0, %v1476
      %v1478 = vpop.f32.mrf.mxu0
      %v1479 = vadd.f32 0.0, %v1478
      %1480 = vmatmul.bf16.gmra.mxu0 %v1225
      %v1481 = vpop.f32.mrf.mxu0
      %v1482 = vadd.f32 0.0, %v1481
      %v1483 = vpop.f32.mrf.mxu0
      %v1484 = vadd.f32 0.0, %v1483
      %1485 = vmatmul.bf16.gmra.mxu0 %v1228
      %v1486 = vpop.f32.mrf.mxu0
      %v1487 = vadd.f32 0.0, %v1486
      %v1488 = vpop.f32.mrf.mxu0
      %v1489 = vadd.f32 0.0, %v1488
      %1490 = vmatmul.bf16.gmra.mxu0 %v1231
      %v1491 = vpop.f32.mrf.mxu0
      %v1492 = vadd.f32 0.0, %v1491
      %v1493 = vpop.f32.mrf.mxu0
      %v1494 = vadd.f32 0.0, %v1493
      %1495 = vmatmul.bf16.gmra.mxu0 %v1234
      %v1496 = vpop.f32.mrf.mxu0
      %v1497 = vadd.f32 0.0, %v1496
      %v1498 = vpop.f32.mrf.mxu0
      %v1499 = vadd.f32 0.0, %v1498
      %1500 = vmatmul.bf16.gmra.mxu0 %v1237
      %v1501 = vpop.f32.mrf.mxu0
      %v1502 = vadd.f32 0.0, %v1501
      %v1503 = vpop.f32.mrf.mxu0
      %v1504 = vadd.f32 0.0, %v1503
      %1505 = vmatmul.bf16.gmra.mxu0 %v1240
      %v1506 = vpop.f32.mrf.mxu0
      %v1507 = vadd.f32 0.0, %v1506
      %v1508 = vpop.f32.mrf.mxu0
      %v1509 = vadd.f32 0.0, %v1508
      %1510 = vmatmul.bf16.gmra.mxu0 %v1243
      %v1511 = vpop.f32.mrf.mxu0
      %v1512 = vadd.f32 0.0, %v1511
      %v1513 = vpop.f32.mrf.mxu0
      %v1514 = vadd.f32 0.0, %v1513
      %1515 = vmatmul.bf16.gmra.mxu0 %v1246
      %v1516 = vpop.f32.mrf.mxu0
      %v1517 = vadd.f32 0.0, %v1516
      %v1518 = vpop.f32.mrf.mxu0
      %v1519 = vadd.f32 0.0, %v1518
      %1520 = vmatmul.bf16.gmra.mxu0 %v1249
      %v1521 = vpop.f32.mrf.mxu0
      %v1522 = vadd.f32 0.0, %v1521
      %v1523 = vpop.f32.mrf.mxu0
      %v1524 = vadd.f32 0.0, %v1523
      %1525 = vmatmul.bf16.gmra.mxu0 %v1252
      %v1526 = vpop.f32.mrf.mxu0
      %v1527 = vadd.f32 0.0, %v1526
      %v1528 = vpop.f32.mrf.mxu0
      %v1529 = vadd.f32 0.0, %v1528
      %1530 = vmatmul.bf16.gmra.mxu0 %v1255
      %v1531 = vpop.f32.mrf.mxu0
      %v1532 = vadd.f32 0.0, %v1531
      %v1533 = vpop.f32.mrf.mxu0
      %v1534 = vadd.f32 0.0, %v1533
      %1535 = vmatmul.bf16.gmra.mxu0 %v1258
      %v1536 = vpop.f32.mrf.mxu0
      %v1537 = vadd.f32 0.0, %v1536
      %v1538 = vpop.f32.mrf.mxu0
      %v1539 = vadd.f32 0.0, %v1538
      %1540 = vmatmul.bf16.gmra.mxu0 %v1261
      %v1541 = vpop.f32.mrf.mxu0
      %v1542 = vadd.f32 0.0, %v1541
      %v1543 = vpop.f32.mrf.mxu0
      %v1544 = vadd.f32 0.0, %v1543
      %1545 = vmatmul.bf16.gmra.mxu0 %v1264
      %v1546 = vpop.f32.mrf.mxu0
      %v1547 = vadd.f32 0.0, %v1546
      %v1548 = vpop.f32.mrf.mxu0
      %v1549 = vadd.f32 0.0, %v1548
      %1550 = vmatmul.bf16.gmra.mxu0 %v1267
      %v1551 = vpop.f32.mrf.mxu0
      %v1552 = vadd.f32 0.0, %v1551
      %v1553 = vpop.f32.mrf.mxu0
      %v1554 = vadd.f32 0.0, %v1553
      %1555 = vmatmul.bf16.gmra.mxu0 %v1270
      %v1556 = vpop.f32.mrf.mxu0
      %v1557 = vadd.f32 0.0, %v1556
      %v1558 = vpop.f32.mrf.mxu0
      %v1559 = vadd.f32 0.0, %v1558
      %1560 = vmatmul.bf16.gmra.mxu0 %v1273
      %v1561 = vpop.f32.mrf.mxu0
      %v1562 = vadd.f32 0.0, %v1561
      %v1563 = vpop.f32.mrf.mxu0
      %v1564 = vadd.f32 0.0, %v1563
      %1565 = vmatmul.bf16.gmra.mxu0 %v1276
      %v1566 = vpop.f32.mrf.mxu0
      %v1567 = vadd.f32 0.0, %v1566
      %v1568 = vpop.f32.mrf.mxu0
      %v1569 = vadd.f32 0.0, %v1568
      %1570 = vmatmul.bf16.gmra.mxu0 %v1279
      %v1571 = vpop.f32.mrf.mxu0
      %v1572 = vadd.f32 0.0, %v1571
      %v1573 = vpop.f32.mrf.mxu0
      %v1574 = vadd.f32 0.0, %v1573
      %1575 = vmatmul.bf16.gmra.mxu0 %v1282
      %v1576 = vpop.f32.mrf.mxu0
      %v1577 = vadd.f32 0.0, %v1576
      %v1578 = vpop.f32.mrf.mxu0
      %v1579 = vadd.f32 0.0, %v1578
      %1580 = vmatmul.bf16.gmra.mxu0 %v1285
      %v1581 = vpop.f32.mrf.mxu0
      %v1582 = vadd.f32 0.0, %v1581
      %v1583 = vpop.f32.mrf.mxu0
      %v1584 = vadd.f32 0.0, %v1583
      %1585 = vmatmul.bf16.gmra.mxu0 %v1288
      %v1586 = vpop.f32.mrf.mxu0
      %v1587 = vadd.f32 0.0, %v1586
      %v1588 = vpop.f32.mrf.mxu0
      %v1589 = vadd.f32 0.0, %v1588
      %1590 = vmatmul.bf16.gmra.mxu0 %v1291
      %v1591 = vpop.f32.mrf.mxu0
      %v1592 = vadd.f32 0.0, %v1591
      %v1593 = vpop.f32.mrf.mxu0
      %v1594 = vadd.f32 0.0, %v1593
      %1595 = vmatmul.bf16.gmra.mxu0 %v1294
      %v1596 = vpop.f32.mrf.mxu0
      %v1597 = vadd.f32 0.0, %v1596
      %v1598 = vpop.f32.mrf.mxu0
      %v1599 = vadd.f32 0.0, %v1598
      %1600 = vmatmul.bf16.gmra.mxu0 %v1297
      %v1601 = vpop.f32.mrf.mxu0
      %v1602 = vadd.f32 0.0, %v1601
      %v1603 = vpop.f32.mrf.mxu0
      %v1604 = vadd.f32 0.0, %v1603
      %1605 = vmatmul.bf16.gmra.mxu0 %v1300
      %v1606 = vpop.f32.mrf.mxu0
      %v1607 = vadd.f32 0.0, %v1606
      %v1608 = vpop.f32.mrf.mxu0
      %v1609 = vadd.f32 0.0, %v1608
      %1610 = vmatmul.bf16.gmra.mxu0 %v1303
      %v1611 = vpop.f32.mrf.mxu0
      %v1612 = vadd.f32 0.0, %v1611
      %v1613 = vpop.f32.mrf.mxu0
      %v1614 = vadd.f32 0.0, %v1613
      %1615 = vmatmul.bf16.gmra.mxu0 %v1306
      %v1616 = vpop.f32.mrf.mxu0
      %v1617 = vadd.f32 0.0, %v1616
      %v1618 = vpop.f32.mrf.mxu0
      %v1619 = vadd.f32 0.0, %v1618
      %1620 = vmatmul.bf16.gmra.mxu0 %v1309
      %v1621 = vpop.f32.mrf.mxu0
      %v1622 = vadd.f32 0.0, %v1621
      %v1623 = vpop.f32.mrf.mxu0
      %v1624 = vadd.f32 0.0, %v1623
      %1625 = vmatmul.bf16.gmra.mxu0 %v1312
      %v1626 = vpop.f32.mrf.mxu0
      %v1627 = vadd.f32 0.0, %v1626
      %v1628 = vpop.f32.mrf.mxu0
      %v1629 = vadd.f32 0.0, %v1628
      %1630 = vmatmul.bf16.gmra.mxu0 %v1315
      %v1631 = vpop.f32.mrf.mxu0
      %v1632 = vadd.f32 0.0, %v1631
      %v1633 = vpop.f32.mrf.mxu0
      %v1634 = vadd.f32 0.0, %v1633
      %1635 = vmatmul.bf16.gmra.mxu0 %v1318
      %v1636 = vpop.f32.mrf.mxu0
      %v1637 = vadd.f32 0.0, %v1636
      %v1638 = vpop.f32.mrf.mxu0
      %v1639 = vadd.f32 0.0, %v1638
      %1640 = vmatmul.bf16.gmra.mxu0 %v1321
      %v1641 = vpop.f32.mrf.mxu0
      %v1642 = vadd.f32 0.0, %v1641
      %v1643 = vpop.f32.mrf.mxu0
      %v1644 = vadd.f32 0.0, %v1643
      %1645 = vmatmul.bf16.gmra.mxu0 %v1324
      %v1646 = vpop.f32.mrf.mxu0
      %v1647 = vadd.f32 0.0, %v1646
      %v1648 = vpop.f32.mrf.mxu0
      %v1649 = vadd.f32 0.0, %v1648
      %1650 = vmatmul.bf16.gmra.mxu0 %v1327
      %v1651 = vpop.f32.mrf.mxu0
      %v1652 = vadd.f32 0.0, %v1651
      %v1653 = vpop.f32.mrf.mxu0
      %v1654 = vadd.f32 0.0, %v1653
      %1655 = vmatmul.bf16.gmra.mxu0 %v1330
      %v1656 = vpop.f32.mrf.mxu0
      %v1657 = vadd.f32 0.0, %v1656
      %v1658 = vpop.f32.mrf.mxu0
      %v1659 = vadd.f32 0.0, %v1658
      %1660 = vdwg.mxu0
      %v1789 = vunpack.c.l.b16 %v546
      %v1790 = vunpack.c.l.b16 %v547
      %v1791 = vunpack.c.l.b16 %v548
      %v1792 = vunpack.c.l.b16 %v549
      %v1793 = vunpack.c.l.b16 %v550
      %v1794 = vunpack.c.l.b16 %v551
      %v1795 = vunpack.c.l.b16 %v552
      %v1796 = vunpack.c.l.b16 %v553
      %v1797 = vunpack.c.l.b16 %v554
      %v1798 = vunpack.c.l.b16 %v555
      %v1799 = vunpack.c.l.b16 %v556
      %v1800 = vunpack.c.l.b16 %v557
      %v1801 = vunpack.c.l.b16 %v558
      %v1802 = vunpack.c.l.b16 %v559
      %v1803 = vunpack.c.l.b16 %v560
      %v1804 = vunpack.c.l.b16 %v561
      %v1805 = vunpack.c.l.b16 %v562
      %v1806 = vunpack.c.l.b16 %v563
      %v1807 = vunpack.c.l.b16 %v564
      %v1808 = vunpack.c.l.b16 %v565
      %v1809 = vunpack.c.l.b16 %v566
      %v1810 = vunpack.c.l.b16 %v567
      %v1811 = vunpack.c.l.b16 %v568
      %v1812 = vunpack.c.l.b16 %v569
      %v1813 = vunpack.c.l.b16 %v570
      %v1814 = vunpack.c.l.b16 %v571
      %v1815 = vunpack.c.l.b16 %v572
      %v1816 = vunpack.c.l.b16 %v573
      %v1817 = vunpack.c.l.b16 %v574
      %v1818 = vunpack.c.l.b16 %v575
      %v1819 = vunpack.c.l.b16 %v576
      %v1820 = vunpack.c.l.b16 %v577
      %v1821 = vunpack.c.l.b16 %v578
      %v1822 = vunpack.c.l.b16 %v579
      %v1823 = vunpack.c.l.b16 %v580
      %v1824 = vunpack.c.l.b16 %v581
      %v1825 = vunpack.c.l.b16 %v582
      %v1826 = vunpack.c.l.b16 %v583
      %v1827 = vunpack.c.l.b16 %v584
      %v1828 = vunpack.c.l.b16 %v585
      %v1829 = vunpack.c.l.b16 %v586
      %v1830 = vunpack.c.l.b16 %v587
      %v1831 = vunpack.c.l.b16 %v588
      %v1832 = vunpack.c.l.b16 %v589
      %v1833 = vunpack.c.l.b16 %v590
      %v1834 = vunpack.c.l.b16 %v591
      %v1835 = vunpack.c.l.b16 %v592
      %v1836 = vunpack.c.l.b16 %v593
      %v1837 = vunpack.c.l.b16 %v594
      %v1838 = vunpack.c.l.b16 %v595
      %v1839 = vunpack.c.l.b16 %v596
      %v1840 = vunpack.c.l.b16 %v597
      %v1841 = vunpack.c.l.b16 %v598
      %v1842 = vunpack.c.l.b16 %v599
      %v1843 = vunpack.c.l.b16 %v600
      %v1844 = vunpack.c.l.b16 %v601
      %v1845 = vunpack.c.l.b16 %v602
      %v1846 = vunpack.c.l.b16 %v603
      %v1847 = vunpack.c.l.b16 %v604
      %v1848 = vunpack.c.l.b16 %v605
      %v1849 = vunpack.c.l.b16 %v606
      %v1850 = vunpack.c.l.b16 %v607
      %v1851 = vunpack.c.l.b16 %v608
      %v1852 = vunpack.c.l.b16 %v609
      %v1853 = vunpack.c.l.b16 %v610
      %v1854 = vunpack.c.l.b16 %v611
      %v1855 = vunpack.c.l.b16 %v612
      %v1856 = vunpack.c.l.b16 %v613
      %v1857 = vunpack.c.l.b16 %v614
      %v1858 = vunpack.c.l.b16 %v615
      %v1859 = vunpack.c.l.b16 %v616
      %v1860 = vunpack.c.l.b16 %v617
      %v1861 = vunpack.c.l.b16 %v618
      %v1862 = vunpack.c.l.b16 %v619
      %v1863 = vunpack.c.l.b16 %v620
      %v1864 = vunpack.c.l.b16 %v621
      %v1865 = vunpack.c.l.b16 %v622
      %v1866 = vunpack.c.l.b16 %v623
      %v1867 = vunpack.c.l.b16 %v624
      %v1868 = vunpack.c.l.b16 %v625
      %v1869 = vunpack.c.l.b16 %v626
      %v1870 = vunpack.c.l.b16 %v627
      %v1871 = vunpack.c.l.b16 %v628
      %v1872 = vunpack.c.l.b16 %v629
      %v1873 = vunpack.c.l.b16 %v630
      %v1874 = vunpack.c.l.b16 %v631
      %v1875 = vunpack.c.l.b16 %v632
      %v1876 = vunpack.c.l.b16 %v633
      %v1877 = vunpack.c.l.b16 %v634
      %v1878 = vunpack.c.l.b16 %v635
      %v1879 = vunpack.c.l.b16 %v636
      %v1880 = vunpack.c.l.b16 %v637
      %v1881 = vunpack.c.l.b16 %v638
      %v1882 = vunpack.c.l.b16 %v639
      %v1883 = vunpack.c.l.b16 %v640
      %v1884 = vunpack.c.l.b16 %v641
      %v1885 = vunpack.c.l.b16 %v642
      %v1886 = vunpack.c.l.b16 %v643
      %v1887 = vunpack.c.l.b16 %v644
      %v1888 = vunpack.c.l.b16 %v645
      %v1889 = vunpack.c.l.b16 %v646
      %v1890 = vunpack.c.l.b16 %v647
      %v1891 = vunpack.c.l.b16 %v648
      %v1892 = vunpack.c.l.b16 %v649
      %v1893 = vunpack.c.l.b16 %v650
      %v1894 = vunpack.c.l.b16 %v651
      %v1895 = vunpack.c.l.b16 %v652
      %v1896 = vunpack.c.l.b16 %v653
      %v1897 = vunpack.c.l.b16 %v654
      %v1898 = vunpack.c.l.b16 %v655
      %v1899 = vunpack.c.l.b16 %v656
      %v1900 = vunpack.c.l.b16 %v657
      %v1901 = vunpack.c.l.b16 %v658
      %v1902 = vunpack.c.l.b16 %v659
      %v1903 = vunpack.c.l.b16 %v660
      %v1904 = vunpack.c.l.b16 %v661
      %v1905 = vunpack.c.l.b16 %v662
      %v1906 = vunpack.c.l.b16 %v663
      %v1907 = vunpack.c.l.b16 %v664
      %v1908 = vunpack.c.l.b16 %v665
      %v1909 = vunpack.c.l.b16 %v666
      %v1910 = vunpack.c.l.b16 %v667
      %v1911 = vunpack.c.l.b16 %v668
      %v1912 = vunpack.c.l.b16 %v669
      %v1913 = vunpack.c.l.b16 %v670
      %v1914 = vunpack.c.l.b16 %v671
      %v1915 = vunpack.c.l.b16 %v672
      %v1916 = vunpack.c.l.b16 %v673
      %v1917 = vpack.c.b16 %v1790, %v1789
      %v1918 = vpack.c.b16 %v1792, %v1791
      %v1919 = vpack.c.b16 %v1794, %v1793
      %v1920 = vpack.c.b16 %v1796, %v1795
      %v1921 = vpack.c.b16 %v1798, %v1797
      %v1922 = vpack.c.b16 %v1800, %v1799
      %v1923 = vpack.c.b16 %v1802, %v1801
      %v1924 = vpack.c.b16 %v1804, %v1803
      %v1925 = vpack.c.b16 %v1806, %v1805
      %v1926 = vpack.c.b16 %v1808, %v1807
      %v1927 = vpack.c.b16 %v1810, %v1809
      %v1928 = vpack.c.b16 %v1812, %v1811
      %v1929 = vpack.c.b16 %v1814, %v1813
      %v1930 = vpack.c.b16 %v1816, %v1815
      %v1931 = vpack.c.b16 %v1818, %v1817
      %v1932 = vpack.c.b16 %v1820, %v1819
      %v1933 = vpack.c.b16 %v1822, %v1821
      %v1934 = vpack.c.b16 %v1824, %v1823
      %v1935 = vpack.c.b16 %v1826, %v1825
      %v1936 = vpack.c.b16 %v1828, %v1827
      %v1937 = vpack.c.b16 %v1830, %v1829
      %v1938 = vpack.c.b16 %v1832, %v1831
      %v1939 = vpack.c.b16 %v1834, %v1833
      %v1940 = vpack.c.b16 %v1836, %v1835
      %v1941 = vpack.c.b16 %v1838, %v1837
      %v1942 = vpack.c.b16 %v1840, %v1839
      %v1943 = vpack.c.b16 %v1842, %v1841
      %v1944 = vpack.c.b16 %v1844, %v1843
      %v1945 = vpack.c.b16 %v1846, %v1845
      %v1946 = vpack.c.b16 %v1848, %v1847
      %v1947 = vpack.c.b16 %v1850, %v1849
      %v1948 = vpack.c.b16 %v1852, %v1851
      %v1949 = vpack.c.b16 %v1854, %v1853
      %v1950 = vpack.c.b16 %v1856, %v1855
      %v1951 = vpack.c.b16 %v1858, %v1857
      %v1952 = vpack.c.b16 %v1860, %v1859
      %v1953 = vpack.c.b16 %v1862, %v1861
      %v1954 = vpack.c.b16 %v1864, %v1863
      %v1955 = vpack.c.b16 %v1866, %v1865
      %v1956 = vpack.c.b16 %v1868, %v1867
      %v1957 = vpack.c.b16 %v1870, %v1869
      %v1958 = vpack.c.b16 %v1872, %v1871
      %v1959 = vpack.c.b16 %v1874, %v1873
      %v1960 = vpack.c.b16 %v1876, %v1875
      %v1961 = vpack.c.b16 %v1878, %v1877
      %v1962 = vpack.c.b16 %v1880, %v1879
      %v1963 = vpack.c.b16 %v1882, %v1881
      %v1964 = vpack.c.b16 %v1884, %v1883
      %v1965 = vpack.c.b16 %v1886, %v1885
      %v1966 = vpack.c.b16 %v1888, %v1887
      %v1967 = vpack.c.b16 %v1890, %v1889
      %v1968 = vpack.c.b16 %v1892, %v1891
      %v1969 = vpack.c.b16 %v1894, %v1893
      %v1970 = vpack.c.b16 %v1896, %v1895
      %v1971 = vpack.c.b16 %v1898, %v1897
      %v1972 = vpack.c.b16 %v1900, %v1899
      %v1973 = vpack.c.b16 %v1902, %v1901
      %v1974 = vpack.c.b16 %v1904, %v1903
      %v1975 = vpack.c.b16 %v1906, %v1905
      %v1976 = vpack.c.b16 %v1908, %v1907
      %v1977 = vpack.c.b16 %v1910, %v1909
      %v1978 = vpack.c.b16 %v1912, %v1911
      %v1979 = vpack.c.b16 %v1914, %v1913
      %v1980 = vpack.c.b16 %v1916, %v1915
      %vm1981 = vcmask 31744
      %v1983 = vsel %vm1981, %v1917, 0
      %v1986 = vsel %vm1981, %v1918, 0
      %v1989 = vsel %vm1981, %v1919, 0
      %v1992 = vsel %vm1981, %v1920, 0
      %v1995 = vsel %vm1981, %v1921, 0
      %v1998 = vsel %vm1981, %v1922, 0
      %v2001 = vsel %vm1981, %v1923, 0
      %v2004 = vsel %vm1981, %v1924, 0
      %v2007 = vsel %vm1981, %v1925, 0
      %v2010 = vsel %vm1981, %v1926, 0
      %v2013 = vsel %vm1981, %v1927, 0
      %v2016 = vsel %vm1981, %v1928, 0
      %v2019 = vsel %vm1981, %v1929, 0
      %v2022 = vsel %vm1981, %v1930, 0
      %v2025 = vsel %vm1981, %v1931, 0
      %v2028 = vsel %vm1981, %v1932, 0
      %v2031 = vsel %vm1981, %v1933, 0
      %v2034 = vsel %vm1981, %v1934, 0
      %v2037 = vsel %vm1981, %v1935, 0
      %v2040 = vsel %vm1981, %v1936, 0
      %v2043 = vsel %vm1981, %v1937, 0
      %v2046 = vsel %vm1981, %v1938, 0
      %v2049 = vsel %vm1981, %v1939, 0
      %v2052 = vsel %vm1981, %v1940, 0
      %v2055 = vsel %vm1981, %v1941, 0
      %v2058 = vsel %vm1981, %v1942, 0
      %v2061 = vsel %vm1981, %v1943, 0
      %v2064 = vsel %vm1981, %v1944, 0
      %v2067 = vsel %vm1981, %v1945, 0
      %v2070 = vsel %vm1981, %v1946, 0
      %v2073 = vsel %vm1981, %v1947, 0
      %v2076 = vsel %vm1981, %v1948, 0
      %v2079 = vsel %vm1981, %v1949, 0
      %v2082 = vsel %vm1981, %v1950, 0
      %v2085 = vsel %vm1981, %v1951, 0
      %v2088 = vsel %vm1981, %v1952, 0
      %v2091 = vsel %vm1981, %v1953, 0
      %v2094 = vsel %vm1981, %v1954, 0
      %v2097 = vsel %vm1981, %v1955, 0
      %v2100 = vsel %vm1981, %v1956, 0
      %v2103 = vsel %vm1981, %v1957, 0
      %v2106 = vsel %vm1981, %v1958, 0
      %v2109 = vsel %vm1981, %v1959, 0
      %v2112 = vsel %vm1981, %v1960, 0
      %v2115 = vsel %vm1981, %v1961, 0
      %v2118 = vsel %vm1981, %v1962, 0
      %v2121 = vsel %vm1981, %v1963, 0
      %v2124 = vsel %vm1981, %v1964, 0
      %v2127 = vsel %vm1981, %v1965, 0
      %v2130 = vsel %vm1981, %v1966, 0
      %v2133 = vsel %vm1981, %v1967, 0
      %v2136 = vsel %vm1981, %v1968, 0
      %v2139 = vsel %vm1981, %v1969, 0
      %v2142 = vsel %vm1981, %v1970, 0
      %v2145 = vsel %vm1981, %v1971, 0
      %v2148 = vsel %vm1981, %v1972, 0
      %v2151 = vsel %vm1981, %v1973, 0
      %v2154 = vsel %vm1981, %v1974, 0
      %v2157 = vsel %vm1981, %v1975, 0
      %v2160 = vsel %vm1981, %v1976, 0
      %v2163 = vsel %vm1981, %v1977, 0
      %v2166 = vsel %vm1981, %v1978, 0
      %v2169 = vsel %vm1981, %v1979, 0
      %v2172 = vsel %vm1981, %v1980, 0
      %vm2174 = vcmask 1041408
      %v2176 = vsel %vm2174, %v674, 0
      %2178 = vmatpush.bf16.msra.mxu0 0
      %2179 = vmatpush.bf16.msra.mxu0 0
      %2180 = vmatpush.bf16.msra.mxu0 0
      %2181 = vmatpush.bf16.msra.mxu0 0
      %2182 = vmatpush.bf16.msra.mxu0 0
      %2183 = vmatpush.bf16.msra.mxu0 0
      %2184 = vmatpush.bf16.msra.mxu0 0
      %2185 = vmatpush.bf16.msra.mxu0 %v2176
      %2186 = vmatmul.bf16.gmra.mxu0 %v1983
      %v2187 = vpop.f32.mrf.mxu0
      %v2188 = vadd.f32 %v1342, %v2187
      %v2189 = vpop.f32.mrf.mxu0
      %v2190 = vadd.f32 %v1344, %v2189
      %2191 = vmatmul.bf16.gmra.mxu0 %v1986
      %v2192 = vpop.f32.mrf.mxu0
      %v2193 = vadd.f32 %v1347, %v2192
      %v2194 = vpop.f32.mrf.mxu0
      %v2195 = vadd.f32 %v1349, %v2194
      %2196 = vmatmul.bf16.gmra.mxu0 %v1989
      %v2197 = vpop.f32.mrf.mxu0
      %v2198 = vadd.f32 %v1352, %v2197
      %v2199 = vpop.f32.mrf.mxu0
      %v2200 = vadd.f32 %v1354, %v2199
      %2201 = vmatmul.bf16.gmra.mxu0 %v1992
      %v2202 = vpop.f32.mrf.mxu0
      %v2203 = vadd.f32 %v1357, %v2202
      %v2204 = vpop.f32.mrf.mxu0
      %v2205 = vadd.f32 %v1359, %v2204
      %2206 = vmatmul.bf16.gmra.mxu0 %v1995
      %v2207 = vpop.f32.mrf.mxu0
      %v2208 = vadd.f32 %v1362, %v2207
      %v2209 = vpop.f32.mrf.mxu0
      %v2210 = vadd.f32 %v1364, %v2209
      %2211 = vmatmul.bf16.gmra.mxu0 %v1998
      %v2212 = vpop.f32.mrf.mxu0
      %v2213 = vadd.f32 %v1367, %v2212
      %v2214 = vpop.f32.mrf.mxu0
      %v2215 = vadd.f32 %v1369, %v2214
      %2216 = vmatmul.bf16.gmra.mxu0 %v2001
      %v2217 = vpop.f32.mrf.mxu0
      %v2218 = vadd.f32 %v1372, %v2217
      %v2219 = vpop.f32.mrf.mxu0
      %v2220 = vadd.f32 %v1374, %v2219
      %2221 = vmatmul.bf16.gmra.mxu0 %v2004
      %v2222 = vpop.f32.mrf.mxu0
      %v2223 = vadd.f32 %v1377, %v2222
      %v2224 = vpop.f32.mrf.mxu0
      %v2225 = vadd.f32 %v1379, %v2224
      %2226 = vmatmul.bf16.gmra.mxu0 %v2007
      %v2227 = vpop.f32.mrf.mxu0
      %v2228 = vadd.f32 %v1382, %v2227
      %v2229 = vpop.f32.mrf.mxu0
      %v2230 = vadd.f32 %v1384, %v2229
      %2231 = vmatmul.bf16.gmra.mxu0 %v2010
      %v2232 = vpop.f32.mrf.mxu0
      %v2233 = vadd.f32 %v1387, %v2232
      %v2234 = vpop.f32.mrf.mxu0
      %v2235 = vadd.f32 %v1389, %v2234
      %2236 = vmatmul.bf16.gmra.mxu0 %v2013
      %v2237 = vpop.f32.mrf.mxu0
      %v2238 = vadd.f32 %v1392, %v2237
      %v2239 = vpop.f32.mrf.mxu0
      %v2240 = vadd.f32 %v1394, %v2239
      %2241 = vmatmul.bf16.gmra.mxu0 %v2016
      %v2242 = vpop.f32.mrf.mxu0
      %v2243 = vadd.f32 %v1397, %v2242
      %v2244 = vpop.f32.mrf.mxu0
      %v2245 = vadd.f32 %v1399, %v2244
      %2246 = vmatmul.bf16.gmra.mxu0 %v2019
      %v2247 = vpop.f32.mrf.mxu0
      %v2248 = vadd.f32 %v1402, %v2247
      %v2249 = vpop.f32.mrf.mxu0
      %v2250 = vadd.f32 %v1404, %v2249
      %2251 = vmatmul.bf16.gmra.mxu0 %v2022
      %v2252 = vpop.f32.mrf.mxu0
      %v2253 = vadd.f32 %v1407, %v2252
      %v2254 = vpop.f32.mrf.mxu0
      %v2255 = vadd.f32 %v1409, %v2254
      %2256 = vmatmul.bf16.gmra.mxu0 %v2025
      %v2257 = vpop.f32.mrf.mxu0
      %v2258 = vadd.f32 %v1412, %v2257
      %v2259 = vpop.f32.mrf.mxu0
      %v2260 = vadd.f32 %v1414, %v2259
      %2261 = vmatmul.bf16.gmra.mxu0 %v2028
      %v2262 = vpop.f32.mrf.mxu0
      %v2263 = vadd.f32 %v1417, %v2262
      %v2264 = vpop.f32.mrf.mxu0
      %v2265 = vadd.f32 %v1419, %v2264
      %2266 = vmatmul.bf16.gmra.mxu0 %v2031
      %v2267 = vpop.f32.mrf.mxu0
      %v2268 = vadd.f32 %v1422, %v2267
      %v2269 = vpop.f32.mrf.mxu0
      %v2270 = vadd.f32 %v1424, %v2269
      %2271 = vmatmul.bf16.gmra.mxu0 %v2034
      %v2272 = vpop.f32.mrf.mxu0
      %v2273 = vadd.f32 %v1427, %v2272
      %v2274 = vpop.f32.mrf.mxu0
      %v2275 = vadd.f32 %v1429, %v2274
      %2276 = vmatmul.bf16.gmra.mxu0 %v2037
      %v2277 = vpop.f32.mrf.mxu0
      %v2278 = vadd.f32 %v1432, %v2277
      %v2279 = vpop.f32.mrf.mxu0
      %v2280 = vadd.f32 %v1434, %v2279
      %2281 = vmatmul.bf16.gmra.mxu0 %v2040
      %v2282 = vpop.f32.mrf.mxu0
      %v2283 = vadd.f32 %v1437, %v2282
      %v2284 = vpop.f32.mrf.mxu0
      %v2285 = vadd.f32 %v1439, %v2284
      %2286 = vmatmul.bf16.gmra.mxu0 %v2043
      %v2287 = vpop.f32.mrf.mxu0
      %v2288 = vadd.f32 %v1442, %v2287
      %v2289 = vpop.f32.mrf.mxu0
      %v2290 = vadd.f32 %v1444, %v2289
      %2291 = vmatmul.bf16.gmra.mxu0 %v2046
      %v2292 = vpop.f32.mrf.mxu0
      %v2293 = vadd.f32 %v1447, %v2292
      %v2294 = vpop.f32.mrf.mxu0
      %v2295 = vadd.f32 %v1449, %v2294
      %2296 = vmatmul.bf16.gmra.mxu0 %v2049
      %v2297 = vpop.f32.mrf.mxu0
      %v2298 = vadd.f32 %v1452, %v2297
      %v2299 = vpop.f32.mrf.mxu0
      %v2300 = vadd.f32 %v1454, %v2299
      %2301 = vmatmul.bf16.gmra.mxu0 %v2052
      %v2302 = vpop.f32.mrf.mxu0
      %v2303 = vadd.f32 %v1457, %v2302
      %v2304 = vpop.f32.mrf.mxu0
      %v2305 = vadd.f32 %v1459, %v2304
      %2306 = vmatmul.bf16.gmra.mxu0 %v2055
      %v2307 = vpop.f32.mrf.mxu0
      %v2308 = vadd.f32 %v1462, %v2307
      %v2309 = vpop.f32.mrf.mxu0
      %v2310 = vadd.f32 %v1464, %v2309
      %2311 = vmatmul.bf16.gmra.mxu0 %v2058
      %v2312 = vpop.f32.mrf.mxu0
      %v2313 = vadd.f32 %v1467, %v2312
      %v2314 = vpop.f32.mrf.mxu0
      %v2315 = vadd.f32 %v1469, %v2314
      %2316 = vmatmul.bf16.gmra.mxu0 %v2061
      %v2317 = vpop.f32.mrf.mxu0
      %v2318 = vadd.f32 %v1472, %v2317
      %v2319 = vpop.f32.mrf.mxu0
      %v2320 = vadd.f32 %v1474, %v2319
      %2321 = vmatmul.bf16.gmra.mxu0 %v2064
      %v2322 = vpop.f32.mrf.mxu0
      %v2323 = vadd.f32 %v1477, %v2322
      %v2324 = vpop.f32.mrf.mxu0
      %v2325 = vadd.f32 %v1479, %v2324
      %2326 = vmatmul.bf16.gmra.mxu0 %v2067
      %v2327 = vpop.f32.mrf.mxu0
      %v2328 = vadd.f32 %v1482, %v2327
      %v2329 = vpop.f32.mrf.mxu0
      %v2330 = vadd.f32 %v1484, %v2329
      %2331 = vmatmul.bf16.gmra.mxu0 %v2070
      %v2332 = vpop.f32.mrf.mxu0
      %v2333 = vadd.f32 %v1487, %v2332
      %v2334 = vpop.f32.mrf.mxu0
      %v2335 = vadd.f32 %v1489, %v2334
      %2336 = vmatmul.bf16.gmra.mxu0 %v2073
      %v2337 = vpop.f32.mrf.mxu0
      %v2338 = vadd.f32 %v1492, %v2337
      %v2339 = vpop.f32.mrf.mxu0
      %v2340 = vadd.f32 %v1494, %v2339
      %2341 = vmatmul.bf16.gmra.mxu0 %v2076
      %v2342 = vpop.f32.mrf.mxu0
      %v2343 = vadd.f32 %v1497, %v2342
      %v2344 = vpop.f32.mrf.mxu0
      %v2345 = vadd.f32 %v1499, %v2344
      %2346 = vmatmul.bf16.gmra.mxu0 %v2079
      %v2347 = vpop.f32.mrf.mxu0
      %v2348 = vadd.f32 %v1502, %v2347
      %v2349 = vpop.f32.mrf.mxu0
      %v2350 = vadd.f32 %v1504, %v2349
      %2351 = vmatmul.bf16.gmra.mxu0 %v2082
      %v2352 = vpop.f32.mrf.mxu0
      %v2353 = vadd.f32 %v1507, %v2352
      %v2354 = vpop.f32.mrf.mxu0
      %v2355 = vadd.f32 %v1509, %v2354
      %2356 = vmatmul.bf16.gmra.mxu0 %v2085
      %v2357 = vpop.f32.mrf.mxu0
      %v2358 = vadd.f32 %v1512, %v2357
      %v2359 = vpop.f32.mrf.mxu0
      %v2360 = vadd.f32 %v1514, %v2359
      %2361 = vmatmul.bf16.gmra.mxu0 %v2088
      %v2362 = vpop.f32.mrf.mxu0
      %v2363 = vadd.f32 %v1517, %v2362
      %v2364 = vpop.f32.mrf.mxu0
      %v2365 = vadd.f32 %v1519, %v2364
      %2366 = vmatmul.bf16.gmra.mxu0 %v2091
      %v2367 = vpop.f32.mrf.mxu0
      %v2368 = vadd.f32 %v1522, %v2367
      %v2369 = vpop.f32.mrf.mxu0
      %v2370 = vadd.f32 %v1524, %v2369
      %2371 = vmatmul.bf16.gmra.mxu0 %v2094
      %v2372 = vpop.f32.mrf.mxu0
      %v2373 = vadd.f32 %v1527, %v2372
      %v2374 = vpop.f32.mrf.mxu0
      %v2375 = vadd.f32 %v1529, %v2374
      %2376 = vmatmul.bf16.gmra.mxu0 %v2097
      %v2377 = vpop.f32.mrf.mxu0
      %v2378 = vadd.f32 %v1532, %v2377
      %v2379 = vpop.f32.mrf.mxu0
      %v2380 = vadd.f32 %v1534, %v2379
      %2381 = vmatmul.bf16.gmra.mxu0 %v2100
      %v2382 = vpop.f32.mrf.mxu0
      %v2383 = vadd.f32 %v1537, %v2382
      %v2384 = vpop.f32.mrf.mxu0
      %v2385 = vadd.f32 %v1539, %v2384
      %2386 = vmatmul.bf16.gmra.mxu0 %v2103
      %v2387 = vpop.f32.mrf.mxu0
      %v2388 = vadd.f32 %v1542, %v2387
      %v2389 = vpop.f32.mrf.mxu0
      %v2390 = vadd.f32 %v1544, %v2389
      %2391 = vmatmul.bf16.gmra.mxu0 %v2106
      %v2392 = vpop.f32.mrf.mxu0
      %v2393 = vadd.f32 %v1547, %v2392
      %v2394 = vpop.f32.mrf.mxu0
      %v2395 = vadd.f32 %v1549, %v2394
      %2396 = vmatmul.bf16.gmra.mxu0 %v2109
      %v2397 = vpop.f32.mrf.mxu0
      %v2398 = vadd.f32 %v1552, %v2397
      %v2399 = vpop.f32.mrf.mxu0
      %v2400 = vadd.f32 %v1554, %v2399
      %2401 = vmatmul.bf16.gmra.mxu0 %v2112
      %v2402 = vpop.f32.mrf.mxu0
      %v2403 = vadd.f32 %v1557, %v2402
      %v2404 = vpop.f32.mrf.mxu0
      %v2405 = vadd.f32 %v1559, %v2404
      %2406 = vmatmul.bf16.gmra.mxu0 %v2115
      %v2407 = vpop.f32.mrf.mxu0
      %v2408 = vadd.f32 %v1562, %v2407
      %v2409 = vpop.f32.mrf.mxu0
      %v2410 = vadd.f32 %v1564, %v2409
      %2411 = vmatmul.bf16.gmra.mxu0 %v2118
      %v2412 = vpop.f32.mrf.mxu0
      %v2413 = vadd.f32 %v1567, %v2412
      %v2414 = vpop.f32.mrf.mxu0
      %v2415 = vadd.f32 %v1569, %v2414
      %2416 = vmatmul.bf16.gmra.mxu0 %v2121
      %v2417 = vpop.f32.mrf.mxu0
      %v2418 = vadd.f32 %v1572, %v2417
      %v2419 = vpop.f32.mrf.mxu0
      %v2420 = vadd.f32 %v1574, %v2419
      %2421 = vmatmul.bf16.gmra.mxu0 %v2124
      %v2422 = vpop.f32.mrf.mxu0
      %v2423 = vadd.f32 %v1577, %v2422
      %v2424 = vpop.f32.mrf.mxu0
      %v2425 = vadd.f32 %v1579, %v2424
      %2426 = vmatmul.bf16.gmra.mxu0 %v2127
      %v2427 = vpop.f32.mrf.mxu0
      %v2428 = vadd.f32 %v1582, %v2427
      %v2429 = vpop.f32.mrf.mxu0
      %v2430 = vadd.f32 %v1584, %v2429
      %2431 = vmatmul.bf16.gmra.mxu0 %v2130
      %v2432 = vpop.f32.mrf.mxu0
      %v2433 = vadd.f32 %v1587, %v2432
      %v2434 = vpop.f32.mrf.mxu0
      %v2435 = vadd.f32 %v1589, %v2434
      %2436 = vmatmul.bf16.gmra.mxu0 %v2133
      %v2437 = vpop.f32.mrf.mxu0
      %v2438 = vadd.f32 %v1592, %v2437
      %v2439 = vpop.f32.mrf.mxu0
      %v2440 = vadd.f32 %v1594, %v2439
      %2441 = vmatmul.bf16.gmra.mxu0 %v2136
      %v2442 = vpop.f32.mrf.mxu0
      %v2443 = vadd.f32 %v1597, %v2442
      %v2444 = vpop.f32.mrf.mxu0
      %v2445 = vadd.f32 %v1599, %v2444
      %2446 = vmatmul.bf16.gmra.mxu0 %v2139
      %v2447 = vpop.f32.mrf.mxu0
      %v2448 = vadd.f32 %v1602, %v2447
      %v2449 = vpop.f32.mrf.mxu0
      %v2450 = vadd.f32 %v1604, %v2449
      %2451 = vmatmul.bf16.gmra.mxu0 %v2142
      %v2452 = vpop.f32.mrf.mxu0
      %v2453 = vadd.f32 %v1607, %v2452
      %v2454 = vpop.f32.mrf.mxu0
      %v2455 = vadd.f32 %v1609, %v2454
      %2456 = vmatmul.bf16.gmra.mxu0 %v2145
      %v2457 = vpop.f32.mrf.mxu0
      %v2458 = vadd.f32 %v1612, %v2457
      %v2459 = vpop.f32.mrf.mxu0
      %v2460 = vadd.f32 %v1614, %v2459
      %2461 = vmatmul.bf16.gmra.mxu0 %v2148
      %v2462 = vpop.f32.mrf.mxu0
      %v2463 = vadd.f32 %v1617, %v2462
      %v2464 = vpop.f32.mrf.mxu0
      %v2465 = vadd.f32 %v1619, %v2464
      %2466 = vmatmul.bf16.gmra.mxu0 %v2151
      %v2467 = vpop.f32.mrf.mxu0
      %v2468 = vadd.f32 %v1622, %v2467
      %v2469 = vpop.f32.mrf.mxu0
      %v2470 = vadd.f32 %v1624, %v2469
      %2471 = vmatmul.bf16.gmra.mxu0 %v2154
      %v2472 = vpop.f32.mrf.mxu0
      %v2473 = vadd.f32 %v1627, %v2472
      %v2474 = vpop.f32.mrf.mxu0
      %v2475 = vadd.f32 %v1629, %v2474
      %2476 = vmatmul.bf16.gmra.mxu0 %v2157
      %v2477 = vpop.f32.mrf.mxu0
      %v2478 = vadd.f32 %v1632, %v2477
      %v2479 = vpop.f32.mrf.mxu0
      %v2480 = vadd.f32 %v1634, %v2479
      %2481 = vmatmul.bf16.gmra.mxu0 %v2160
      %v2482 = vpop.f32.mrf.mxu0
      %v2483 = vadd.f32 %v1637, %v2482
      %v2484 = vpop.f32.mrf.mxu0
      %v2485 = vadd.f32 %v1639, %v2484
      %2486 = vmatmul.bf16.gmra.mxu0 %v2163
      %v2487 = vpop.f32.mrf.mxu0
      %v2488 = vadd.f32 %v1642, %v2487
      %v2489 = vpop.f32.mrf.mxu0
      %v2490 = vadd.f32 %v1644, %v2489
      %2491 = vmatmul.bf16.gmra.mxu0 %v2166
      %v2492 = vpop.f32.mrf.mxu0
      %v2493 = vadd.f32 %v1647, %v2492
      %v2494 = vpop.f32.mrf.mxu0
      %v2495 = vadd.f32 %v1649, %v2494
      %2496 = vmatmul.bf16.gmra.mxu0 %v2169
      %v2497 = vpop.f32.mrf.mxu0
      %v2498 = vadd.f32 %v1652, %v2497
      %v2499 = vpop.f32.mrf.mxu0
      %v2500 = vadd.f32 %v1654, %v2499
      %2501 = vmatmul.bf16.gmra.mxu0 %v2172
      %v2502 = vpop.f32.mrf.mxu0
      %v2503 = vadd.f32 %v1657, %v2502
      %v2504 = vpop.f32.mrf.mxu0
      %v2505 = vadd.f32 %v1659, %v2504
      %2506 = vdwg.mxu0
      %v2507 = vld [vmem:[%s6] sm:$0x1]
      %v2509 = vperm.slane %v2507, 0
      %v2511 = vadd.f32 %v2188, %v2509
      %v2512 = vadd.f32 %v2190, %v2509
      %v2513 = vadd.f32 %v2193, %v2509
      %v2514 = vadd.f32 %v2195, %v2509
      %v2515 = vadd.f32 %v2198, %v2509
      %v2516 = vadd.f32 %v2200, %v2509
      %v2517 = vadd.f32 %v2203, %v2509
      %v2518 = vadd.f32 %v2205, %v2509
      %v2519 = vadd.f32 %v2208, %v2509
      %v2520 = vadd.f32 %v2210, %v2509
      %v2521 = vadd.f32 %v2213, %v2509
      %v2522 = vadd.f32 %v2215, %v2509
      %v2523 = vadd.f32 %v2218, %v2509
      %v2524 = vadd.f32 %v2220, %v2509
      %v2525 = vadd.f32 %v2223, %v2509
      %v2526 = vadd.f32 %v2225, %v2509
      %v2527 = vadd.f32 %v2228, %v2509
      %v2528 = vadd.f32 %v2230, %v2509
      %v2529 = vadd.f32 %v2233, %v2509
      %v2530 = vadd.f32 %v2235, %v2509
      %v2531 = vadd.f32 %v2238, %v2509
      %v2532 = vadd.f32 %v2240, %v2509
      %v2533 = vadd.f32 %v2243, %v2509
      %v2534 = vadd.f32 %v2245, %v2509
      %v2535 = vadd.f32 %v2248, %v2509
      %v2536 = vadd.f32 %v2250, %v2509
      %v2537 = vadd.f32 %v2253, %v2509
      %v2538 = vadd.f32 %v2255, %v2509
      %v2539 = vadd.f32 %v2258, %v2509
      %v2540 = vadd.f32 %v2260, %v2509
      %v2541 = vadd.f32 %v2263, %v2509
      %v2542 = vadd.f32 %v2265, %v2509
      %v2543 = vadd.f32 %v2268, %v2509
      %v2544 = vadd.f32 %v2270, %v2509
      %v2545 = vadd.f32 %v2273, %v2509
      %v2546 = vadd.f32 %v2275, %v2509
      %v2547 = vadd.f32 %v2278, %v2509
      %v2548 = vadd.f32 %v2280, %v2509
      %v2549 = vadd.f32 %v2283, %v2509
      %v2550 = vadd.f32 %v2285, %v2509
      %v2551 = vadd.f32 %v2288, %v2509
      %v2552 = vadd.f32 %v2290, %v2509
      %v2553 = vadd.f32 %v2293, %v2509
      %v2554 = vadd.f32 %v2295, %v2509
      %v2555 = vadd.f32 %v2298, %v2509
      %v2556 = vadd.f32 %v2300, %v2509
      %v2557 = vadd.f32 %v2303, %v2509
      %v2558 = vadd.f32 %v2305, %v2509
      %v2559 = vadd.f32 %v2308, %v2509
      %v2560 = vadd.f32 %v2310, %v2509
      %v2561 = vadd.f32 %v2313, %v2509
      %v2562 = vadd.f32 %v2315, %v2509
      %v2563 = vadd.f32 %v2318, %v2509
      %v2564 = vadd.f32 %v2320, %v2509
      %v2565 = vadd.f32 %v2323, %v2509
      %v2566 = vadd.f32 %v2325, %v2509
      %v2567 = vadd.f32 %v2328, %v2509
      %v2568 = vadd.f32 %v2330, %v2509
      %v2569 = vadd.f32 %v2333, %v2509
      %v2570 = vadd.f32 %v2335, %v2509
      %v2571 = vadd.f32 %v2338, %v2509
      %v2572 = vadd.f32 %v2340, %v2509
      %v2573 = vadd.f32 %v2343, %v2509
      %v2574 = vadd.f32 %v2345, %v2509
      %v2575 = vadd.f32 %v2348, %v2509
      %v2576 = vadd.f32 %v2350, %v2509
      %v2577 = vadd.f32 %v2353, %v2509
      %v2578 = vadd.f32 %v2355, %v2509
      %v2579 = vadd.f32 %v2358, %v2509
      %v2580 = vadd.f32 %v2360, %v2509
      %v2581 = vadd.f32 %v2363, %v2509
      %v2582 = vadd.f32 %v2365, %v2509
      %v2583 = vadd.f32 %v2368, %v2509
      %v2584 = vadd.f32 %v2370, %v2509
      %v2585 = vadd.f32 %v2373, %v2509
      %v2586 = vadd.f32 %v2375, %v2509
      %v2587 = vadd.f32 %v2378, %v2509
      %v2588 = vadd.f32 %v2380, %v2509
      %v2589 = vadd.f32 %v2383, %v2509
      %v2590 = vadd.f32 %v2385, %v2509
      %v2591 = vadd.f32 %v2388, %v2509
      %v2592 = vadd.f32 %v2390, %v2509
      %v2593 = vadd.f32 %v2393, %v2509
      %v2594 = vadd.f32 %v2395, %v2509
      %v2595 = vadd.f32 %v2398, %v2509
      %v2596 = vadd.f32 %v2400, %v2509
      %v2597 = vadd.f32 %v2403, %v2509
      %v2598 = vadd.f32 %v2405, %v2509
      %v2599 = vadd.f32 %v2408, %v2509
      %v2600 = vadd.f32 %v2410, %v2509
      %v2601 = vadd.f32 %v2413, %v2509
      %v2602 = vadd.f32 %v2415, %v2509
      %v2603 = vadd.f32 %v2418, %v2509
      %v2604 = vadd.f32 %v2420, %v2509
      %v2605 = vadd.f32 %v2423, %v2509
      %v2606 = vadd.f32 %v2425, %v2509
      %v2607 = vadd.f32 %v2428, %v2509
      %v2608 = vadd.f32 %v2430, %v2509
      %v2609 = vadd.f32 %v2433, %v2509
      %v2610 = vadd.f32 %v2435, %v2509
      %v2611 = vadd.f32 %v2438, %v2509
      %v2612 = vadd.f32 %v2440, %v2509
      %v2613 = vadd.f32 %v2443, %v2509
      %v2614 = vadd.f32 %v2445, %v2509
      %v2615 = vadd.f32 %v2448, %v2509
      %v2616 = vadd.f32 %v2450, %v2509
      %v2617 = vadd.f32 %v2453, %v2509
      %v2618 = vadd.f32 %v2455, %v2509
      %v2619 = vadd.f32 %v2458, %v2509
      %v2620 = vadd.f32 %v2460, %v2509
      %v2621 = vadd.f32 %v2463, %v2509
      %v2622 = vadd.f32 %v2465, %v2509
      %v2623 = vadd.f32 %v2468, %v2509
      %v2624 = vadd.f32 %v2470, %v2509
      %v2625 = vadd.f32 %v2473, %v2509
      %v2626 = vadd.f32 %v2475, %v2509
      %v2627 = vadd.f32 %v2478, %v2509
      %v2628 = vadd.f32 %v2480, %v2509
      %v2629 = vadd.f32 %v2483, %v2509
      %v2630 = vadd.f32 %v2485, %v2509
      %v2631 = vadd.f32 %v2488, %v2509
      %v2632 = vadd.f32 %v2490, %v2509
      %v2633 = vadd.f32 %v2493, %v2509
      %v2634 = vadd.f32 %v2495, %v2509
      %v2635 = vadd.f32 %v2498, %v2509
      %v2636 = vadd.f32 %v2500, %v2509
      %v2637 = vadd.f32 %v2503, %v2509
      %v2638 = vadd.f32 %v2505, %v2509
      %v2639 = vmax.f32 %v2511, 0.0
      %v2640 = vmax.f32 %v2512, 0.0
      %v2641 = vmax.f32 %v2513, 0.0
      %v2642 = vmax.f32 %v2514, 0.0
      %v2643 = vmax.f32 %v2515, 0.0
      %v2644 = vmax.f32 %v2516, 0.0
      %v2645 = vmax.f32 %v2517, 0.0
      %v2646 = vmax.f32 %v2518, 0.0
      %v2647 = vmax.f32 %v2519, 0.0
      %v2648 = vmax.f32 %v2520, 0.0
      %v2649 = vmax.f32 %v2521, 0.0
      %v2650 = vmax.f32 %v2522, 0.0
      %v2651 = vmax.f32 %v2523, 0.0
      %v2652 = vmax.f32 %v2524, 0.0
      %v2653 = vmax.f32 %v2525, 0.0
      %v2654 = vmax.f32 %v2526, 0.0
      %v2655 = vmax.f32 %v2527, 0.0
      %v2656 = vmax.f32 %v2528, 0.0
      %v2657 = vmax.f32 %v2529, 0.0
      %v2658 = vmax.f32 %v2530, 0.0
      %v2659 = vmax.f32 %v2531, 0.0
      %v2660 = vmax.f32 %v2532, 0.0
      %v2661 = vmax.f32 %v2533, 0.0
      %v2662 = vmax.f32 %v2534, 0.0
      %v2663 = vmax.f32 %v2535, 0.0
      %v2664 = vmax.f32 %v2536, 0.0
      %v2665 = vmax.f32 %v2537, 0.0
      %v2666 = vmax.f32 %v2538, 0.0
      %v2667 = vmax.f32 %v2539, 0.0
      %v2668 = vmax.f32 %v2540, 0.0
      %v2669 = vmax.f32 %v2541, 0.0
      %v2670 = vmax.f32 %v2542, 0.0
      %v2671 = vmax.f32 %v2543, 0.0
      %v2672 = vmax.f32 %v2544, 0.0
      %v2673 = vmax.f32 %v2545, 0.0
      %v2674 = vmax.f32 %v2546, 0.0
      %v2675 = vmax.f32 %v2547, 0.0
      %v2676 = vmax.f32 %v2548, 0.0
      %v2677 = vmax.f32 %v2549, 0.0
      %v2678 = vmax.f32 %v2550, 0.0
      %v2679 = vmax.f32 %v2551, 0.0
      %v2680 = vmax.f32 %v2552, 0.0
      %v2681 = vmax.f32 %v2553, 0.0
      %v2682 = vmax.f32 %v2554, 0.0
      %v2683 = vmax.f32 %v2555, 0.0
      %v2684 = vmax.f32 %v2556, 0.0
      %v2685 = vmax.f32 %v2557, 0.0
      %v2686 = vmax.f32 %v2558, 0.0
      %v2687 = vmax.f32 %v2559, 0.0
      %v2688 = vmax.f32 %v2560, 0.0
      %v2689 = vmax.f32 %v2561, 0.0
      %v2690 = vmax.f32 %v2562, 0.0
      %v2691 = vmax.f32 %v2563, 0.0
      %v2692 = vmax.f32 %v2564, 0.0
      %v2693 = vmax.f32 %v2565, 0.0
      %v2694 = vmax.f32 %v2566, 0.0
      %v2695 = vmax.f32 %v2567, 0.0
      %v2696 = vmax.f32 %v2568, 0.0
      %v2697 = vmax.f32 %v2569, 0.0
      %v2698 = vmax.f32 %v2570, 0.0
      %v2699 = vmax.f32 %v2571, 0.0
      %v2700 = vmax.f32 %v2572, 0.0
      %v2701 = vmax.f32 %v2573, 0.0
      %v2702 = vmax.f32 %v2574, 0.0
      %v2703 = vmax.f32 %v2575, 0.0
      %v2704 = vmax.f32 %v2576, 0.0
      %v2705 = vmax.f32 %v2577, 0.0
      %v2706 = vmax.f32 %v2578, 0.0
      %v2707 = vmax.f32 %v2579, 0.0
      %v2708 = vmax.f32 %v2580, 0.0
      %v2709 = vmax.f32 %v2581, 0.0
      %v2710 = vmax.f32 %v2582, 0.0
      %v2711 = vmax.f32 %v2583, 0.0
      %v2712 = vmax.f32 %v2584, 0.0
      %v2713 = vmax.f32 %v2585, 0.0
      %v2714 = vmax.f32 %v2586, 0.0
      %v2715 = vmax.f32 %v2587, 0.0
      %v2716 = vmax.f32 %v2588, 0.0
      %v2717 = vmax.f32 %v2589, 0.0
      %v2718 = vmax.f32 %v2590, 0.0
      %v2719 = vmax.f32 %v2591, 0.0
      %v2720 = vmax.f32 %v2592, 0.0
      %v2721 = vmax.f32 %v2593, 0.0
      %v2722 = vmax.f32 %v2594, 0.0
      %v2723 = vmax.f32 %v2595, 0.0
      %v2724 = vmax.f32 %v2596, 0.0
      %v2725 = vmax.f32 %v2597, 0.0
      %v2726 = vmax.f32 %v2598, 0.0
      %v2727 = vmax.f32 %v2599, 0.0
      %v2728 = vmax.f32 %v2600, 0.0
      %v2729 = vmax.f32 %v2601, 0.0
      %v2730 = vmax.f32 %v2602, 0.0
      %v2731 = vmax.f32 %v2603, 0.0
      %v2732 = vmax.f32 %v2604, 0.0
      %v2733 = vmax.f32 %v2605, 0.0
      %v2734 = vmax.f32 %v2606, 0.0
      %v2735 = vmax.f32 %v2607, 0.0
      %v2736 = vmax.f32 %v2608, 0.0
      %v2737 = vmax.f32 %v2609, 0.0
      %v2738 = vmax.f32 %v2610, 0.0
      %v2739 = vmax.f32 %v2611, 0.0
      %v2740 = vmax.f32 %v2612, 0.0
      %v2741 = vmax.f32 %v2613, 0.0
      %v2742 = vmax.f32 %v2614, 0.0
      %v2743 = vmax.f32 %v2615, 0.0
      %v2744 = vmax.f32 %v2616, 0.0
      %v2745 = vmax.f32 %v2617, 0.0
      %v2746 = vmax.f32 %v2618, 0.0
      %v2747 = vmax.f32 %v2619, 0.0
      %v2748 = vmax.f32 %v2620, 0.0
      %v2749 = vmax.f32 %v2621, 0.0
      %v2750 = vmax.f32 %v2622, 0.0
      %v2751 = vmax.f32 %v2623, 0.0
      %v2752 = vmax.f32 %v2624, 0.0
      %v2753 = vmax.f32 %v2625, 0.0
      %v2754 = vmax.f32 %v2626, 0.0
      %v2755 = vmax.f32 %v2627, 0.0
      %v2756 = vmax.f32 %v2628, 0.0
      %v2757 = vmax.f32 %v2629, 0.0
      %v2758 = vmax.f32 %v2630, 0.0
      %v2759 = vmax.f32 %v2631, 0.0
      %v2760 = vmax.f32 %v2632, 0.0
      %v2761 = vmax.f32 %v2633, 0.0
      %v2762 = vmax.f32 %v2634, 0.0
      %v2763 = vmax.f32 %v2635, 0.0
      %v2764 = vmax.f32 %v2636, 0.0
      %v2765 = vmax.f32 %v2637, 0.0
      %v2766 = vmax.f32 %v2638, 0.0
      %v2767 = vpack.c.bf16 %v2640, %v2639
      %v2768 = vpack.c.bf16 %v2642, %v2641
      %v2769 = vpack.c.bf16 %v2644, %v2643
      %v2770 = vpack.c.bf16 %v2646, %v2645
      %v2771 = vpack.c.bf16 %v2648, %v2647
      %v2772 = vpack.c.bf16 %v2650, %v2649
      %v2773 = vpack.c.bf16 %v2652, %v2651
      %v2774 = vpack.c.bf16 %v2654, %v2653
      %v2775 = vpack.c.bf16 %v2656, %v2655
      %v2776 = vpack.c.bf16 %v2658, %v2657
      %v2777 = vpack.c.bf16 %v2660, %v2659
      %v2778 = vpack.c.bf16 %v2662, %v2661
      %v2779 = vpack.c.bf16 %v2664, %v2663
      %v2780 = vpack.c.bf16 %v2666, %v2665
      %v2781 = vpack.c.bf16 %v2668, %v2667
      %v2782 = vpack.c.bf16 %v2670, %v2669
      %v2783 = vpack.c.bf16 %v2672, %v2671
      %v2784 = vpack.c.bf16 %v2674, %v2673
      %v2785 = vpack.c.bf16 %v2676, %v2675
      %v2786 = vpack.c.bf16 %v2678, %v2677
      %v2787 = vpack.c.bf16 %v2680, %v2679
      %v2788 = vpack.c.bf16 %v2682, %v2681
      %v2789 = vpack.c.bf16 %v2684, %v2683
      %v2790 = vpack.c.bf16 %v2686, %v2685
      %v2791 = vpack.c.bf16 %v2688, %v2687
      %v2792 = vpack.c.bf16 %v2690, %v2689
      %v2793 = vpack.c.bf16 %v2692, %v2691
      %v2794 = vpack.c.bf16 %v2694, %v2693
      %v2795 = vpack.c.bf16 %v2696, %v2695
      %v2796 = vpack.c.bf16 %v2698, %v2697
      %v2797 = vpack.c.bf16 %v2700, %v2699
      %v2798 = vpack.c.bf16 %v2702, %v2701
      %v2799 = vpack.c.bf16 %v2704, %v2703
      %v2800 = vpack.c.bf16 %v2706, %v2705
      %v2801 = vpack.c.bf16 %v2708, %v2707
      %v2802 = vpack.c.bf16 %v2710, %v2709
      %v2803 = vpack.c.bf16 %v2712, %v2711
      %v2804 = vpack.c.bf16 %v2714, %v2713
      %v2805 = vpack.c.bf16 %v2716, %v2715
      %v2806 = vpack.c.bf16 %v2718, %v2717
      %v2807 = vpack.c.bf16 %v2720, %v2719
      %v2808 = vpack.c.bf16 %v2722, %v2721
      %v2809 = vpack.c.bf16 %v2724, %v2723
      %v2810 = vpack.c.bf16 %v2726, %v2725
      %v2811 = vpack.c.bf16 %v2728, %v2727
      %v2812 = vpack.c.bf16 %v2730, %v2729
      %v2813 = vpack.c.bf16 %v2732, %v2731
      %v2814 = vpack.c.bf16 %v2734, %v2733
      %v2815 = vpack.c.bf16 %v2736, %v2735
      %v2816 = vpack.c.bf16 %v2738, %v2737
      %v2817 = vpack.c.bf16 %v2740, %v2739
      %v2818 = vpack.c.bf16 %v2742, %v2741
      %v2819 = vpack.c.bf16 %v2744, %v2743
      %v2820 = vpack.c.bf16 %v2746, %v2745
      %v2821 = vpack.c.bf16 %v2748, %v2747
      %v2822 = vpack.c.bf16 %v2750, %v2749
      %v2823 = vpack.c.bf16 %v2752, %v2751
      %v2824 = vpack.c.bf16 %v2754, %v2753
      %v2825 = vpack.c.bf16 %v2756, %v2755
      %v2826 = vpack.c.bf16 %v2758, %v2757
      %v2827 = vpack.c.bf16 %v2760, %v2759
      %v2828 = vpack.c.bf16 %v2762, %v2761
      %v2829 = vpack.c.bf16 %v2764, %v2763
      %v2830 = vpack.c.bf16 %v2766, %v2765
      %v2831 = vld [vmem:[%s7] sm:$0xf]
      %v2832 = vld [vmem:[%s7 + $0x4] sm:$0xf]
      %v2833 = vld [vmem:[%s7 + $0x8] sm:$0xf]
      %v2834 = vld [vmem:[%s7 + $0xc] sm:$0xf]
      %v2839 = vunpack.c.l.b16 %v2831
      %v2840 = vunpack.c.l.b16 %v2832
      %v2841 = vunpack.c.l.b16 %v2833
      %v2842 = vunpack.c.l.b16 %v2834
      %v2843 = vpack.c.b16 %v2840, %v2839
      %v2844 = vpack.c.b16 %v2842, %v2841
      %v2848 = vsel %vm1139, %v2767, 0
      %v2851 = vsel %vm1139, %v2768, 0
      %v2854 = vsel %vm1139, %v2769, 0
      %v2857 = vsel %vm1139, %v2770, 0
      %v2860 = vsel %vm1139, %v2771, 0
      %v2863 = vsel %vm1139, %v2772, 0
      %v2866 = vsel %vm1139, %v2773, 0
      %v2869 = vsel %vm1139, %v2774, 0
      %v2872 = vsel %vm1139, %v2775, 0
      %v2875 = vsel %vm1139, %v2776, 0
      %v2878 = vsel %vm1139, %v2777, 0
      %v2881 = vsel %vm1139, %v2778, 0
      %v2884 = vsel %vm1139, %v2779, 0
      %v2887 = vsel %vm1139, %v2780, 0
      %v2890 = vsel %vm1139, %v2781, 0
      %v2893 = vsel %vm1139, %v2782, 0
      %v2896 = vsel %vm1139, %v2783, 0
      %v2899 = vsel %vm1139, %v2784, 0
      %v2902 = vsel %vm1139, %v2785, 0
      %v2905 = vsel %vm1139, %v2786, 0
      %v2908 = vsel %vm1139, %v2787, 0
      %v2911 = vsel %vm1139, %v2788, 0
      %v2914 = vsel %vm1139, %v2789, 0
      %v2917 = vsel %vm1139, %v2790, 0
      %v2920 = vsel %vm1139, %v2791, 0
      %v2923 = vsel %vm1139, %v2792, 0
      %v2926 = vsel %vm1139, %v2793, 0
      %v2929 = vsel %vm1139, %v2794, 0
      %v2932 = vsel %vm1139, %v2795, 0
      %v2935 = vsel %vm1139, %v2796, 0
      %v2938 = vsel %vm1139, %v2797, 0
      %v2941 = vsel %vm1139, %v2798, 0
      %v2944 = vsel %vm1139, %v2799, 0
      %v2947 = vsel %vm1139, %v2800, 0
      %v2950 = vsel %vm1139, %v2801, 0
      %v2953 = vsel %vm1139, %v2802, 0
      %v2956 = vsel %vm1139, %v2803, 0
      %v2959 = vsel %vm1139, %v2804, 0
      %v2962 = vsel %vm1139, %v2805, 0
      %v2965 = vsel %vm1139, %v2806, 0
      %v2968 = vsel %vm1139, %v2807, 0
      %v2971 = vsel %vm1139, %v2808, 0
      %v2974 = vsel %vm1139, %v2809, 0
      %v2977 = vsel %vm1139, %v2810, 0
      %v2980 = vsel %vm1139, %v2811, 0
      %v2983 = vsel %vm1139, %v2812, 0
      %v2986 = vsel %vm1139, %v2813, 0
      %v2989 = vsel %vm1139, %v2814, 0
      %v2992 = vsel %vm1139, %v2815, 0
      %v2995 = vsel %vm1139, %v2816, 0
      %v2998 = vsel %vm1139, %v2817, 0
      %v3001 = vsel %vm1139, %v2818, 0
      %v3004 = vsel %vm1139, %v2819, 0
      %v3007 = vsel %vm1139, %v2820, 0
      %v3010 = vsel %vm1139, %v2821, 0
      %v3013 = vsel %vm1139, %v2822, 0
      %v3016 = vsel %vm1139, %v2823, 0
      %v3019 = vsel %vm1139, %v2824, 0
      %v3022 = vsel %vm1139, %v2825, 0
      %v3025 = vsel %vm1139, %v2826, 0
      %v3028 = vsel %vm1139, %v2827, 0
      %v3031 = vsel %vm1139, %v2828, 0
      %v3034 = vsel %vm1139, %v2829, 0
      %v3037 = vsel %vm1139, %v2830, 0
      %3039 = vmatpush.bf16.msra.mxu0 0
      %3040 = vmatpush.bf16.msra.mxu0 0
      %3041 = vmatpush.bf16.msra.mxu0 0
      %3042 = vmatpush.bf16.msra.mxu0 0
      %3043 = vmatpush.bf16.msra.mxu0 0
      %3044 = vmatpush.bf16.msra.mxu0 0
      %3045 = vmatpush.bf16.msra.mxu0 %v2844
      %3046 = vmatpush.bf16.msra.mxu0 %v2843
      %3047 = vmatmul.bf16.gmra.mxu0 %v2848
      %v3048 = vpop.f32.mrf.mxu0
      %v3049 = vadd.f32 0.0, %v3048
      %v3050 = vpop.f32.mrf.mxu0
      %v3051 = vadd.f32 0.0, %v3050
      %3052 = vmatmul.bf16.gmra.mxu0 %v2851
      %v3053 = vpop.f32.mrf.mxu0
      %v3054 = vadd.f32 0.0, %v3053
      %v3055 = vpop.f32.mrf.mxu0
      %v3056 = vadd.f32 0.0, %v3055
      %3057 = vmatmul.bf16.gmra.mxu0 %v2854
      %v3058 = vpop.f32.mrf.mxu0
      %v3059 = vadd.f32 0.0, %v3058
      %v3060 = vpop.f32.mrf.mxu0
      %v3061 = vadd.f32 0.0, %v3060
      %3062 = vmatmul.bf16.gmra.mxu0 %v2857
      %v3063 = vpop.f32.mrf.mxu0
      %v3064 = vadd.f32 0.0, %v3063
      %v3065 = vpop.f32.mrf.mxu0
      %v3066 = vadd.f32 0.0, %v3065
      %3067 = vmatmul.bf16.gmra.mxu0 %v2860
      %v3068 = vpop.f32.mrf.mxu0
      %v3069 = vadd.f32 0.0, %v3068
      %v3070 = vpop.f32.mrf.mxu0
      %v3071 = vadd.f32 0.0, %v3070
      %3072 = vmatmul.bf16.gmra.mxu0 %v2863
      %v3073 = vpop.f32.mrf.mxu0
      %v3074 = vadd.f32 0.0, %v3073
      %v3075 = vpop.f32.mrf.mxu0
      %v3076 = vadd.f32 0.0, %v3075
      %3077 = vmatmul.bf16.gmra.mxu0 %v2866
      %v3078 = vpop.f32.mrf.mxu0
      %v3079 = vadd.f32 0.0, %v3078
      %v3080 = vpop.f32.mrf.mxu0
      %v3081 = vadd.f32 0.0, %v3080
      %3082 = vmatmul.bf16.gmra.mxu0 %v2869
      %v3083 = vpop.f32.mrf.mxu0
      %v3084 = vadd.f32 0.0, %v3083
      %v3085 = vpop.f32.mrf.mxu0
      %v3086 = vadd.f32 0.0, %v3085
      %3087 = vmatmul.bf16.gmra.mxu0 %v2872
      %v3088 = vpop.f32.mrf.mxu0
      %v3089 = vadd.f32 0.0, %v3088
      %v3090 = vpop.f32.mrf.mxu0
      %v3091 = vadd.f32 0.0, %v3090
      %3092 = vmatmul.bf16.gmra.mxu0 %v2875
      %v3093 = vpop.f32.mrf.mxu0
      %v3094 = vadd.f32 0.0, %v3093
      %v3095 = vpop.f32.mrf.mxu0
      %v3096 = vadd.f32 0.0, %v3095
      %3097 = vmatmul.bf16.gmra.mxu0 %v2878
      %v3098 = vpop.f32.mrf.mxu0
      %v3099 = vadd.f32 0.0, %v3098
      %v3100 = vpop.f32.mrf.mxu0
      %v3101 = vadd.f32 0.0, %v3100
      %3102 = vmatmul.bf16.gmra.mxu0 %v2881
      %v3103 = vpop.f32.mrf.mxu0
      %v3104 = vadd.f32 0.0, %v3103
      %v3105 = vpop.f32.mrf.mxu0
      %v3106 = vadd.f32 0.0, %v3105
      %3107 = vmatmul.bf16.gmra.mxu0 %v2884
      %v3108 = vpop.f32.mrf.mxu0
      %v3109 = vadd.f32 0.0, %v3108
      %v3110 = vpop.f32.mrf.mxu0
      %v3111 = vadd.f32 0.0, %v3110
      %3112 = vmatmul.bf16.gmra.mxu0 %v2887
      %v3113 = vpop.f32.mrf.mxu0
      %v3114 = vadd.f32 0.0, %v3113
      %v3115 = vpop.f32.mrf.mxu0
      %v3116 = vadd.f32 0.0, %v3115
      %3117 = vmatmul.bf16.gmra.mxu0 %v2890
      %v3118 = vpop.f32.mrf.mxu0
      %v3119 = vadd.f32 0.0, %v3118
      %v3120 = vpop.f32.mrf.mxu0
      %v3121 = vadd.f32 0.0, %v3120
      %3122 = vmatmul.bf16.gmra.mxu0 %v2893
      %v3123 = vpop.f32.mrf.mxu0
      %v3124 = vadd.f32 0.0, %v3123
      %v3125 = vpop.f32.mrf.mxu0
      %v3126 = vadd.f32 0.0, %v3125
      %3127 = vmatmul.bf16.gmra.mxu0 %v2896
      %v3128 = vpop.f32.mrf.mxu0
      %v3129 = vadd.f32 0.0, %v3128
      %v3130 = vpop.f32.mrf.mxu0
      %v3131 = vadd.f32 0.0, %v3130
      %3132 = vmatmul.bf16.gmra.mxu0 %v2899
      %v3133 = vpop.f32.mrf.mxu0
      %v3134 = vadd.f32 0.0, %v3133
      %v3135 = vpop.f32.mrf.mxu0
      %v3136 = vadd.f32 0.0, %v3135
      %3137 = vmatmul.bf16.gmra.mxu0 %v2902
      %v3138 = vpop.f32.mrf.mxu0
      %v3139 = vadd.f32 0.0, %v3138
      %v3140 = vpop.f32.mrf.mxu0
      %v3141 = vadd.f32 0.0, %v3140
      %3142 = vmatmul.bf16.gmra.mxu0 %v2905
      %v3143 = vpop.f32.mrf.mxu0
      %v3144 = vadd.f32 0.0, %v3143
      %v3145 = vpop.f32.mrf.mxu0
      %v3146 = vadd.f32 0.0, %v3145
      %3147 = vmatmul.bf16.gmra.mxu0 %v2908
      %v3148 = vpop.f32.mrf.mxu0
      %v3149 = vadd.f32 0.0, %v3148
      %v3150 = vpop.f32.mrf.mxu0
      %v3151 = vadd.f32 0.0, %v3150
      %3152 = vmatmul.bf16.gmra.mxu0 %v2911
      %v3153 = vpop.f32.mrf.mxu0
      %v3154 = vadd.f32 0.0, %v3153
      %v3155 = vpop.f32.mrf.mxu0
      %v3156 = vadd.f32 0.0, %v3155
      %3157 = vmatmul.bf16.gmra.mxu0 %v2914
      %v3158 = vpop.f32.mrf.mxu0
      %v3159 = vadd.f32 0.0, %v3158
      %v3160 = vpop.f32.mrf.mxu0
      %v3161 = vadd.f32 0.0, %v3160
      %3162 = vmatmul.bf16.gmra.mxu0 %v2917
      %v3163 = vpop.f32.mrf.mxu0
      %v3164 = vadd.f32 0.0, %v3163
      %v3165 = vpop.f32.mrf.mxu0
      %v3166 = vadd.f32 0.0, %v3165
      %3167 = vmatmul.bf16.gmra.mxu0 %v2920
      %v3168 = vpop.f32.mrf.mxu0
      %v3169 = vadd.f32 0.0, %v3168
      %v3170 = vpop.f32.mrf.mxu0
      %v3171 = vadd.f32 0.0, %v3170
      %3172 = vmatmul.bf16.gmra.mxu0 %v2923
      %v3173 = vpop.f32.mrf.mxu0
      %v3174 = vadd.f32 0.0, %v3173
      %v3175 = vpop.f32.mrf.mxu0
      %v3176 = vadd.f32 0.0, %v3175
      %3177 = vmatmul.bf16.gmra.mxu0 %v2926
      %v3178 = vpop.f32.mrf.mxu0
      %v3179 = vadd.f32 0.0, %v3178
      %v3180 = vpop.f32.mrf.mxu0
      %v3181 = vadd.f32 0.0, %v3180
      %3182 = vmatmul.bf16.gmra.mxu0 %v2929
      %v3183 = vpop.f32.mrf.mxu0
      %v3184 = vadd.f32 0.0, %v3183
      %v3185 = vpop.f32.mrf.mxu0
      %v3186 = vadd.f32 0.0, %v3185
      %3187 = vmatmul.bf16.gmra.mxu0 %v2932
      %v3188 = vpop.f32.mrf.mxu0
      %v3189 = vadd.f32 0.0, %v3188
      %v3190 = vpop.f32.mrf.mxu0
      %v3191 = vadd.f32 0.0, %v3190
      %3192 = vmatmul.bf16.gmra.mxu0 %v2935
      %v3193 = vpop.f32.mrf.mxu0
      %v3194 = vadd.f32 0.0, %v3193
      %v3195 = vpop.f32.mrf.mxu0
      %v3196 = vadd.f32 0.0, %v3195
      %3197 = vmatmul.bf16.gmra.mxu0 %v2938
      %v3198 = vpop.f32.mrf.mxu0
      %v3199 = vadd.f32 0.0, %v3198
      %v3200 = vpop.f32.mrf.mxu0
      %v3201 = vadd.f32 0.0, %v3200
      %3202 = vmatmul.bf16.gmra.mxu0 %v2941
      %v3203 = vpop.f32.mrf.mxu0
      %v3204 = vadd.f32 0.0, %v3203
      %v3205 = vpop.f32.mrf.mxu0
      %v3206 = vadd.f32 0.0, %v3205
      %3207 = vmatmul.bf16.gmra.mxu0 %v2944
      %v3208 = vpop.f32.mrf.mxu0
      %v3209 = vadd.f32 0.0, %v3208
      %v3210 = vpop.f32.mrf.mxu0
      %v3211 = vadd.f32 0.0, %v3210
      %3212 = vmatmul.bf16.gmra.mxu0 %v2947
      %v3213 = vpop.f32.mrf.mxu0
      %v3214 = vadd.f32 0.0, %v3213
      %v3215 = vpop.f32.mrf.mxu0
      %v3216 = vadd.f32 0.0, %v3215
      %3217 = vmatmul.bf16.gmra.mxu0 %v2950
      %v3218 = vpop.f32.mrf.mxu0
      %v3219 = vadd.f32 0.0, %v3218
      %v3220 = vpop.f32.mrf.mxu0
      %v3221 = vadd.f32 0.0, %v3220
      %3222 = vmatmul.bf16.gmra.mxu0 %v2953
      %v3223 = vpop.f32.mrf.mxu0
      %v3224 = vadd.f32 0.0, %v3223
      %v3225 = vpop.f32.mrf.mxu0
      %v3226 = vadd.f32 0.0, %v3225
      %3227 = vmatmul.bf16.gmra.mxu0 %v2956
      %v3228 = vpop.f32.mrf.mxu0
      %v3229 = vadd.f32 0.0, %v3228
      %v3230 = vpop.f32.mrf.mxu0
      %v3231 = vadd.f32 0.0, %v3230
      %3232 = vmatmul.bf16.gmra.mxu0 %v2959
      %v3233 = vpop.f32.mrf.mxu0
      %v3234 = vadd.f32 0.0, %v3233
      %v3235 = vpop.f32.mrf.mxu0
      %v3236 = vadd.f32 0.0, %v3235
      %3237 = vmatmul.bf16.gmra.mxu0 %v2962
      %v3238 = vpop.f32.mrf.mxu0
      %v3239 = vadd.f32 0.0, %v3238
      %v3240 = vpop.f32.mrf.mxu0
      %v3241 = vadd.f32 0.0, %v3240
      %3242 = vmatmul.bf16.gmra.mxu0 %v2965
      %v3243 = vpop.f32.mrf.mxu0
      %v3244 = vadd.f32 0.0, %v3243
      %v3245 = vpop.f32.mrf.mxu0
      %v3246 = vadd.f32 0.0, %v3245
      %3247 = vmatmul.bf16.gmra.mxu0 %v2968
      %v3248 = vpop.f32.mrf.mxu0
      %v3249 = vadd.f32 0.0, %v3248
      %v3250 = vpop.f32.mrf.mxu0
      %v3251 = vadd.f32 0.0, %v3250
      %3252 = vmatmul.bf16.gmra.mxu0 %v2971
      %v3253 = vpop.f32.mrf.mxu0
      %v3254 = vadd.f32 0.0, %v3253
      %v3255 = vpop.f32.mrf.mxu0
      %v3256 = vadd.f32 0.0, %v3255
      %3257 = vmatmul.bf16.gmra.mxu0 %v2974
      %v3258 = vpop.f32.mrf.mxu0
      %v3259 = vadd.f32 0.0, %v3258
      %v3260 = vpop.f32.mrf.mxu0
      %v3261 = vadd.f32 0.0, %v3260
      %3262 = vmatmul.bf16.gmra.mxu0 %v2977
      %v3263 = vpop.f32.mrf.mxu0
      %v3264 = vadd.f32 0.0, %v3263
      %v3265 = vpop.f32.mrf.mxu0
      %v3266 = vadd.f32 0.0, %v3265
      %3267 = vmatmul.bf16.gmra.mxu0 %v2980
      %v3268 = vpop.f32.mrf.mxu0
      %v3269 = vadd.f32 0.0, %v3268
      %v3270 = vpop.f32.mrf.mxu0
      %v3271 = vadd.f32 0.0, %v3270
      %3272 = vmatmul.bf16.gmra.mxu0 %v2983
      %v3273 = vpop.f32.mrf.mxu0
      %v3274 = vadd.f32 0.0, %v3273
      %v3275 = vpop.f32.mrf.mxu0
      %v3276 = vadd.f32 0.0, %v3275
      %3277 = vmatmul.bf16.gmra.mxu0 %v2986
      %v3278 = vpop.f32.mrf.mxu0
      %v3279 = vadd.f32 0.0, %v3278
      %v3280 = vpop.f32.mrf.mxu0
      %v3281 = vadd.f32 0.0, %v3280
      %3282 = vmatmul.bf16.gmra.mxu0 %v2989
      %v3283 = vpop.f32.mrf.mxu0
      %v3284 = vadd.f32 0.0, %v3283
      %v3285 = vpop.f32.mrf.mxu0
      %v3286 = vadd.f32 0.0, %v3285
      %3287 = vmatmul.bf16.gmra.mxu0 %v2992
      %v3288 = vpop.f32.mrf.mxu0
      %v3289 = vadd.f32 0.0, %v3288
      %v3290 = vpop.f32.mrf.mxu0
      %v3291 = vadd.f32 0.0, %v3290
      %3292 = vmatmul.bf16.gmra.mxu0 %v2995
      %v3293 = vpop.f32.mrf.mxu0
      %v3294 = vadd.f32 0.0, %v3293
      %v3295 = vpop.f32.mrf.mxu0
      %v3296 = vadd.f32 0.0, %v3295
      %3297 = vmatmul.bf16.gmra.mxu0 %v2998
      %v3298 = vpop.f32.mrf.mxu0
      %v3299 = vadd.f32 0.0, %v3298
      %v3300 = vpop.f32.mrf.mxu0
      %v3301 = vadd.f32 0.0, %v3300
      %3302 = vmatmul.bf16.gmra.mxu0 %v3001
      %v3303 = vpop.f32.mrf.mxu0
      %v3304 = vadd.f32 0.0, %v3303
      %v3305 = vpop.f32.mrf.mxu0
      %v3306 = vadd.f32 0.0, %v3305
      %3307 = vmatmul.bf16.gmra.mxu0 %v3004
      %v3308 = vpop.f32.mrf.mxu0
      %v3309 = vadd.f32 0.0, %v3308
      %v3310 = vpop.f32.mrf.mxu0
      %v3311 = vadd.f32 0.0, %v3310
      %3312 = vmatmul.bf16.gmra.mxu0 %v3007
      %v3313 = vpop.f32.mrf.mxu0
      %v3314 = vadd.f32 0.0, %v3313
      %v3315 = vpop.f32.mrf.mxu0
      %v3316 = vadd.f32 0.0, %v3315
      %3317 = vmatmul.bf16.gmra.mxu0 %v3010
      %v3318 = vpop.f32.mrf.mxu0
      %v3319 = vadd.f32 0.0, %v3318
      %v3320 = vpop.f32.mrf.mxu0
      %v3321 = vadd.f32 0.0, %v3320
      %3322 = vmatmul.bf16.gmra.mxu0 %v3013
      %v3323 = vpop.f32.mrf.mxu0
      %v3324 = vadd.f32 0.0, %v3323
      %v3325 = vpop.f32.mrf.mxu0
      %v3326 = vadd.f32 0.0, %v3325
      %3327 = vmatmul.bf16.gmra.mxu0 %v3016
      %v3328 = vpop.f32.mrf.mxu0
      %v3329 = vadd.f32 0.0, %v3328
      %v3330 = vpop.f32.mrf.mxu0
      %v3331 = vadd.f32 0.0, %v3330
      %3332 = vmatmul.bf16.gmra.mxu0 %v3019
      %v3333 = vpop.f32.mrf.mxu0
      %v3334 = vadd.f32 0.0, %v3333
      %v3335 = vpop.f32.mrf.mxu0
      %v3336 = vadd.f32 0.0, %v3335
      %3337 = vmatmul.bf16.gmra.mxu0 %v3022
      %v3338 = vpop.f32.mrf.mxu0
      %v3339 = vadd.f32 0.0, %v3338
      %v3340 = vpop.f32.mrf.mxu0
      %v3341 = vadd.f32 0.0, %v3340
      %3342 = vmatmul.bf16.gmra.mxu0 %v3025
      %v3343 = vpop.f32.mrf.mxu0
      %v3344 = vadd.f32 0.0, %v3343
      %v3345 = vpop.f32.mrf.mxu0
      %v3346 = vadd.f32 0.0, %v3345
      %3347 = vmatmul.bf16.gmra.mxu0 %v3028
      %v3348 = vpop.f32.mrf.mxu0
      %v3349 = vadd.f32 0.0, %v3348
      %v3350 = vpop.f32.mrf.mxu0
      %v3351 = vadd.f32 0.0, %v3350
      %3352 = vmatmul.bf16.gmra.mxu0 %v3031
      %v3353 = vpop.f32.mrf.mxu0
      %v3354 = vadd.f32 0.0, %v3353
      %v3355 = vpop.f32.mrf.mxu0
      %v3356 = vadd.f32 0.0, %v3355
      %3357 = vmatmul.bf16.gmra.mxu0 %v3034
      %v3358 = vpop.f32.mrf.mxu0
      %v3359 = vadd.f32 0.0, %v3358
      %v3360 = vpop.f32.mrf.mxu0
      %v3361 = vadd.f32 0.0, %v3360
      %3362 = vmatmul.bf16.gmra.mxu0 %v3037
      %v3363 = vpop.f32.mrf.mxu0
      %v3364 = vadd.f32 0.0, %v3363
      %v3365 = vpop.f32.mrf.mxu0
      %v3366 = vadd.f32 0.0, %v3365
      %3367 = vdwg.mxu0
      %v3368 = vlaneseq
      %v3369 = vshrl.u32 %v3368, 7
      %s3370 = smul.u32 %s29, 8
      %v3371 = vstv %s3370
      %v3372 = vadd.s32 %v3369, %v3371
      %v3373 = vld [vmem:[%s528] sm:$0xff]
      %v3374 = vperm.slane %v3373, 0
      %v3375 = vperm.slane %v3373, 1
      %v3376 = vperm.slane %v3373, 2
      %v3377 = vperm.slane %v3373, 3
      %v3378 = vperm.slane %v3373, 4
      %v3379 = vperm.slane %v3373, 5
      %v3380 = vperm.slane %v3373, 6
      %v3381 = vperm.slane %v3373, 7
      %vm3382 = vcmp.eq.s32.totalorder %v3374, %v3372
      %vm3383 = vcmp.eq.s32.totalorder %v3375, %v3372
      %vm3384 = vcmp.eq.s32.totalorder %v3376, %v3372
      %vm3385 = vcmp.eq.s32.totalorder %v3377, %v3372
      %vm3386 = vcmp.eq.s32.totalorder %v3378, %v3372
      %vm3387 = vcmp.eq.s32.totalorder %v3379, %v3372
      %vm3388 = vcmp.eq.s32.totalorder %v3380, %v3372
      %vm3389 = vcmp.eq.s32.totalorder %v3381, %v3372
      %v3390 = vsel %vm3382, 1, 0
      %v3391 = vsel %vm3383, 1, 0
      %v3392 = vsel %vm3384, 1, 0
      %v3393 = vsel %vm3385, 1, 0
      %v3394 = vsel %vm3386, 1, 0
      %v3395 = vsel %vm3387, 1, 0
      %v3396 = vsel %vm3388, 1, 0
      %v3397 = vsel %vm3389, 1, 0
      %v3398 = vcvt.s32.f32 %v3390
      %v3399 = vcvt.s32.f32 %v3391
      %v3400 = vcvt.s32.f32 %v3392
      %v3401 = vcvt.s32.f32 %v3393
      %v3402 = vcvt.s32.f32 %v3394
      %v3403 = vcvt.s32.f32 %v3395
      %v3404 = vcvt.s32.f32 %v3396
      %v3405 = vcvt.s32.f32 %v3397
      %v3406 = vpack.c.bf16 %v3398, %v3398
      %v3407 = vpack.c.bf16 %v3399, %v3399
      %v3408 = vpack.c.bf16 %v3400, %v3400
      %v3409 = vpack.c.bf16 %v3401, %v3401
      %v3410 = vpack.c.bf16 %v3402, %v3402
      %v3411 = vpack.c.bf16 %v3403, %v3403
      %v3412 = vpack.c.bf16 %v3404, %v3404
      %v3413 = vpack.c.bf16 %v3405, %v3405
      %v3414 = vpack.c.bf16 %v3049, %v3049
      %v3415 = vpack.c.bf16 %v3051, %v3051
      %v3416 = vpack.c.bf16 %v3054, %v3054
      %v3417 = vpack.c.bf16 %v3056, %v3056
      %v3418 = vpack.c.bf16 %v3059, %v3059
      %v3419 = vpack.c.bf16 %v3061, %v3061
      %v3420 = vpack.c.bf16 %v3064, %v3064
      %v3421 = vpack.c.bf16 %v3066, %v3066
      %v3422 = vpack.c.bf16 %v3069, %v3069
      %v3423 = vpack.c.bf16 %v3071, %v3071
      %v3424 = vpack.c.bf16 %v3074, %v3074
      %v3425 = vpack.c.bf16 %v3076, %v3076
      %v3426 = vpack.c.bf16 %v3079, %v3079
      %v3427 = vpack.c.bf16 %v3081, %v3081
      %v3428 = vpack.c.bf16 %v3084, %v3084
      %v3429 = vpack.c.bf16 %v3086, %v3086
      %v3430 = vpack.c.bf16 %v3089, %v3089
      %v3431 = vpack.c.bf16 %v3091, %v3091
      %v3432 = vpack.c.bf16 %v3094, %v3094
      %v3433 = vpack.c.bf16 %v3096, %v3096
      %v3434 = vpack.c.bf16 %v3099, %v3099
      %v3435 = vpack.c.bf16 %v3101, %v3101
      %v3436 = vpack.c.bf16 %v3104, %v3104
      %v3437 = vpack.c.bf16 %v3106, %v3106
      %v3438 = vpack.c.bf16 %v3109, %v3109
      %v3439 = vpack.c.bf16 %v3111, %v3111
      %v3440 = vpack.c.bf16 %v3114, %v3114
      %v3441 = vpack.c.bf16 %v3116, %v3116
      %v3442 = vpack.c.bf16 %v3119, %v3119
      %v3443 = vpack.c.bf16 %v3121, %v3121
      %v3444 = vpack.c.bf16 %v3124, %v3124
      %v3445 = vpack.c.bf16 %v3126, %v3126
      %v3446 = vpack.c.bf16 %v3129, %v3129
      %v3447 = vpack.c.bf16 %v3131, %v3131
      %v3448 = vpack.c.bf16 %v3134, %v3134
      %v3449 = vpack.c.bf16 %v3136, %v3136
      %v3450 = vpack.c.bf16 %v3139, %v3139
      %v3451 = vpack.c.bf16 %v3141, %v3141
      %v3452 = vpack.c.bf16 %v3144, %v3144
      %v3453 = vpack.c.bf16 %v3146, %v3146
      %v3454 = vpack.c.bf16 %v3149, %v3149
      %v3455 = vpack.c.bf16 %v3151, %v3151
      %v3456 = vpack.c.bf16 %v3154, %v3154
      %v3457 = vpack.c.bf16 %v3156, %v3156
      %v3458 = vpack.c.bf16 %v3159, %v3159
      %v3459 = vpack.c.bf16 %v3161, %v3161
      %v3460 = vpack.c.bf16 %v3164, %v3164
      %v3461 = vpack.c.bf16 %v3166, %v3166
      %v3462 = vpack.c.bf16 %v3169, %v3169
      %v3463 = vpack.c.bf16 %v3171, %v3171
      %v3464 = vpack.c.bf16 %v3174, %v3174
      %v3465 = vpack.c.bf16 %v3176, %v3176
      %v3466 = vpack.c.bf16 %v3179, %v3179
      %v3467 = vpack.c.bf16 %v3181, %v3181
      %v3468 = vpack.c.bf16 %v3184, %v3184
      %v3469 = vpack.c.bf16 %v3186, %v3186
      %v3470 = vpack.c.bf16 %v3189, %v3189
      %v3471 = vpack.c.bf16 %v3191, %v3191
      %v3472 = vpack.c.bf16 %v3194, %v3194
      %v3473 = vpack.c.bf16 %v3196, %v3196
      %v3474 = vpack.c.bf16 %v3199, %v3199
      %v3475 = vpack.c.bf16 %v3201, %v3201
      %v3476 = vpack.c.bf16 %v3204, %v3204
      %v3477 = vpack.c.bf16 %v3206, %v3206
      %v3478 = vpack.c.bf16 %v3209, %v3209
      %v3479 = vpack.c.bf16 %v3211, %v3211
      %v3480 = vpack.c.bf16 %v3214, %v3214
      %v3481 = vpack.c.bf16 %v3216, %v3216
      %v3482 = vpack.c.bf16 %v3219, %v3219
      %v3483 = vpack.c.bf16 %v3221, %v3221
      %v3484 = vpack.c.bf16 %v3224, %v3224
      %v3485 = vpack.c.bf16 %v3226, %v3226
      %v3486 = vpack.c.bf16 %v3229, %v3229
      %v3487 = vpack.c.bf16 %v3231, %v3231
      %v3488 = vpack.c.bf16 %v3234, %v3234
      %v3489 = vpack.c.bf16 %v3236, %v3236
      %v3490 = vpack.c.bf16 %v3239, %v3239
      %v3491 = vpack.c.bf16 %v3241, %v3241
      %v3492 = vpack.c.bf16 %v3244, %v3244
      %v3493 = vpack.c.bf16 %v3246, %v3246
      %v3494 = vpack.c.bf16 %v3249, %v3249
      %v3495 = vpack.c.bf16 %v3251, %v3251
      %v3496 = vpack.c.bf16 %v3254, %v3254
      %v3497 = vpack.c.bf16 %v3256, %v3256
      %v3498 = vpack.c.bf16 %v3259, %v3259
      %v3499 = vpack.c.bf16 %v3261, %v3261
      %v3500 = vpack.c.bf16 %v3264, %v3264
      %v3501 = vpack.c.bf16 %v3266, %v3266
      %v3502 = vpack.c.bf16 %v3269, %v3269
      %v3503 = vpack.c.bf16 %v3271, %v3271
      %v3504 = vpack.c.bf16 %v3274, %v3274
      %v3505 = vpack.c.bf16 %v3276, %v3276
      %v3506 = vpack.c.bf16 %v3279, %v3279
      %v3507 = vpack.c.bf16 %v3281, %v3281
      %v3508 = vpack.c.bf16 %v3284, %v3284
      %v3509 = vpack.c.bf16 %v3286, %v3286
      %v3510 = vpack.c.bf16 %v3289, %v3289
      %v3511 = vpack.c.bf16 %v3291, %v3291
      %v3512 = vpack.c.bf16 %v3294, %v3294
      %v3513 = vpack.c.bf16 %v3296, %v3296
      %v3514 = vpack.c.bf16 %v3299, %v3299
      %v3515 = vpack.c.bf16 %v3301, %v3301
      %v3516 = vpack.c.bf16 %v3304, %v3304
      %v3517 = vpack.c.bf16 %v3306, %v3306
      %v3518 = vpack.c.bf16 %v3309, %v3309
      %v3519 = vpack.c.bf16 %v3311, %v3311
      %v3520 = vpack.c.bf16 %v3314, %v3314
      %v3521 = vpack.c.bf16 %v3316, %v3316
      %v3522 = vpack.c.bf16 %v3319, %v3319
      %v3523 = vpack.c.bf16 %v3321, %v3321
      %v3524 = vpack.c.bf16 %v3324, %v3324
      %v3525 = vpack.c.bf16 %v3326, %v3326
      %v3526 = vpack.c.bf16 %v3329, %v3329
      %v3527 = vpack.c.bf16 %v3331, %v3331
      %v3528 = vpack.c.bf16 %v3334, %v3334
      %v3529 = vpack.c.bf16 %v3336, %v3336
      %v3530 = vpack.c.bf16 %v3339, %v3339
      %v3531 = vpack.c.bf16 %v3341, %v3341
      %v3532 = vpack.c.bf16 %v3344, %v3344
      %v3533 = vpack.c.bf16 %v3346, %v3346
      %v3534 = vpack.c.bf16 %v3349, %v3349
      %v3535 = vpack.c.bf16 %v3351, %v3351
      %v3536 = vpack.c.bf16 %v3354, %v3354
      %v3537 = vpack.c.bf16 %v3356, %v3356
      %v3538 = vpack.c.bf16 %v3359, %v3359
      %v3539 = vpack.c.bf16 %v3361, %v3361
      %v3540 = vpack.c.bf16 %v3364, %v3364
      %v3541 = vpack.c.bf16 %v3366, %v3366
      %v3670 = vunpack.c.l.b16 %v3414
      %v3671 = vunpack.c.l.b16 %v3415
      %v3672 = vunpack.c.l.b16 %v3416
      %v3673 = vunpack.c.l.b16 %v3417
      %v3674 = vunpack.c.l.b16 %v3418
      %v3675 = vunpack.c.l.b16 %v3419
      %v3676 = vunpack.c.l.b16 %v3420
      %v3677 = vunpack.c.l.b16 %v3421
      %v3678 = vunpack.c.l.b16 %v3422
      %v3679 = vunpack.c.l.b16 %v3423
      %v3680 = vunpack.c.l.b16 %v3424
      %v3681 = vunpack.c.l.b16 %v3425
      %v3682 = vunpack.c.l.b16 %v3426
      %v3683 = vunpack.c.l.b16 %v3427
      %v3684 = vunpack.c.l.b16 %v3428
      %v3685 = vunpack.c.l.b16 %v3429
      %v3686 = vunpack.c.l.b16 %v3430
      %v3687 = vunpack.c.l.b16 %v3431
      %v3688 = vunpack.c.l.b16 %v3432
      %v3689 = vunpack.c.l.b16 %v3433
      %v3690 = vunpack.c.l.b16 %v3434
      %v3691 = vunpack.c.l.b16 %v3435
      %v3692 = vunpack.c.l.b16 %v3436
      %v3693 = vunpack.c.l.b16 %v3437
      %v3694 = vunpack.c.l.b16 %v3438
      %v3695 = vunpack.c.l.b16 %v3439
      %v3696 = vunpack.c.l.b16 %v3440
      %v3697 = vunpack.c.l.b16 %v3441
      %v3698 = vunpack.c.l.b16 %v3442
      %v3699 = vunpack.c.l.b16 %v3443
      %v3700 = vunpack.c.l.b16 %v3444
      %v3701 = vunpack.c.l.b16 %v3445
      %v3702 = vunpack.c.l.b16 %v3446
      %v3703 = vunpack.c.l.b16 %v3447
      %v3704 = vunpack.c.l.b16 %v3448
      %v3705 = vunpack.c.l.b16 %v3449
      %v3706 = vunpack.c.l.b16 %v3450
      %v3707 = vunpack.c.l.b16 %v3451
      %v3708 = vunpack.c.l.b16 %v3452
      %v3709 = vunpack.c.l.b16 %v3453
      %v3710 = vunpack.c.l.b16 %v3454
      %v3711 = vunpack.c.l.b16 %v3455
      %v3712 = vunpack.c.l.b16 %v3456
      %v3713 = vunpack.c.l.b16 %v3457
      %v3714 = vunpack.c.l.b16 %v3458
      %v3715 = vunpack.c.l.b16 %v3459
      %v3716 = vunpack.c.l.b16 %v3460
      %v3717 = vunpack.c.l.b16 %v3461
      %v3718 = vunpack.c.l.b16 %v3462
      %v3719 = vunpack.c.l.b16 %v3463
      %v3720 = vunpack.c.l.b16 %v3464
      %v3721 = vunpack.c.l.b16 %v3465
      %v3722 = vunpack.c.l.b16 %v3466
      %v3723 = vunpack.c.l.b16 %v3467
      %v3724 = vunpack.c.l.b16 %v3468
      %v3725 = vunpack.c.l.b16 %v3469
      %v3726 = vunpack.c.l.b16 %v3470
      %v3727 = vunpack.c.l.b16 %v3471
      %v3728 = vunpack.c.l.b16 %v3472
      %v3729 = vunpack.c.l.b16 %v3473
      %v3730 = vunpack.c.l.b16 %v3474
      %v3731 = vunpack.c.l.b16 %v3475
      %v3732 = vunpack.c.l.b16 %v3476
      %v3733 = vunpack.c.l.b16 %v3477
      %v3734 = vunpack.c.l.b16 %v3478
      %v3735 = vunpack.c.l.b16 %v3479
      %v3736 = vunpack.c.l.b16 %v3480
      %v3737 = vunpack.c.l.b16 %v3481
      %v3738 = vunpack.c.l.b16 %v3482
      %v3739 = vunpack.c.l.b16 %v3483
      %v3740 = vunpack.c.l.b16 %v3484
      %v3741 = vunpack.c.l.b16 %v3485
      %v3742 = vunpack.c.l.b16 %v3486
      %v3743 = vunpack.c.l.b16 %v3487
      %v3744 = vunpack.c.l.b16 %v3488
      %v3745 = vunpack.c.l.b16 %v3489
      %v3746 = vunpack.c.l.b16 %v3490
      %v3747 = vunpack.c.l.b16 %v3491
      %v3748 = vunpack.c.l.b16 %v3492
      %v3749 = vunpack.c.l.b16 %v3493
      %v3750 = vunpack.c.l.b16 %v3494
      %v3751 = vunpack.c.l.b16 %v3495
      %v3752 = vunpack.c.l.b16 %v3496
      %v3753 = vunpack.c.l.b16 %v3497
      %v3754 = vunpack.c.l.b16 %v3498
      %v3755 = vunpack.c.l.b16 %v3499
      %v3756 = vunpack.c.l.b16 %v3500
      %v3757 = vunpack.c.l.b16 %v3501
      %v3758 = vunpack.c.l.b16 %v3502
      %v3759 = vunpack.c.l.b16 %v3503
      %v3760 = vunpack.c.l.b16 %v3504
      %v3761 = vunpack.c.l.b16 %v3505
      %v3762 = vunpack.c.l.b16 %v3506
      %v3763 = vunpack.c.l.b16 %v3507
      %v3764 = vunpack.c.l.b16 %v3508
      %v3765 = vunpack.c.l.b16 %v3509
      %v3766 = vunpack.c.l.b16 %v3510
      %v3767 = vunpack.c.l.b16 %v3511
      %v3768 = vunpack.c.l.b16 %v3512
      %v3769 = vunpack.c.l.b16 %v3513
      %v3770 = vunpack.c.l.b16 %v3514
      %v3771 = vunpack.c.l.b16 %v3515
      %v3772 = vunpack.c.l.b16 %v3516
      %v3773 = vunpack.c.l.b16 %v3517
      %v3774 = vunpack.c.l.b16 %v3518
      %v3775 = vunpack.c.l.b16 %v3519
      %v3776 = vunpack.c.l.b16 %v3520
      %v3777 = vunpack.c.l.b16 %v3521
      %v3778 = vunpack.c.l.b16 %v3522
      %v3779 = vunpack.c.l.b16 %v3523
      %v3780 = vunpack.c.l.b16 %v3524
      %v3781 = vunpack.c.l.b16 %v3525
      %v3782 = vunpack.c.l.b16 %v3526
      %v3783 = vunpack.c.l.b16 %v3527
      %v3784 = vunpack.c.l.b16 %v3528
      %v3785 = vunpack.c.l.b16 %v3529
      %v3786 = vunpack.c.l.b16 %v3530
      %v3787 = vunpack.c.l.b16 %v3531
      %v3788 = vunpack.c.l.b16 %v3532
      %v3789 = vunpack.c.l.b16 %v3533
      %v3790 = vunpack.c.l.b16 %v3534
      %v3791 = vunpack.c.l.b16 %v3535
      %v3792 = vunpack.c.l.b16 %v3536
      %v3793 = vunpack.c.l.b16 %v3537
      %v3794 = vunpack.c.l.b16 %v3538
      %v3795 = vunpack.c.l.b16 %v3539
      %v3796 = vunpack.c.l.b16 %v3540
      %v3797 = vunpack.c.l.b16 %v3541
      %v3798 = vpack.c.b16 %v3671, %v3670
      %v3799 = vpack.c.b16 %v3673, %v3672
      %v3800 = vpack.c.b16 %v3675, %v3674
      %v3801 = vpack.c.b16 %v3677, %v3676
      %v3802 = vpack.c.b16 %v3679, %v3678
      %v3803 = vpack.c.b16 %v3681, %v3680
      %v3804 = vpack.c.b16 %v3683, %v3682
      %v3805 = vpack.c.b16 %v3685, %v3684
      %v3806 = vpack.c.b16 %v3687, %v3686
      %v3807 = vpack.c.b16 %v3689, %v3688
      %v3808 = vpack.c.b16 %v3691, %v3690
      %v3809 = vpack.c.b16 %v3693, %v3692
      %v3810 = vpack.c.b16 %v3695, %v3694
      %v3811 = vpack.c.b16 %v3697, %v3696
      %v3812 = vpack.c.b16 %v3699, %v3698
      %v3813 = vpack.c.b16 %v3701, %v3700
      %v3814 = vpack.c.b16 %v3703, %v3702
      %v3815 = vpack.c.b16 %v3705, %v3704
      %v3816 = vpack.c.b16 %v3707, %v3706
      %v3817 = vpack.c.b16 %v3709, %v3708
      %v3818 = vpack.c.b16 %v3711, %v3710
      %v3819 = vpack.c.b16 %v3713, %v3712
      %v3820 = vpack.c.b16 %v3715, %v3714
      %v3821 = vpack.c.b16 %v3717, %v3716
      %v3822 = vpack.c.b16 %v3719, %v3718
      %v3823 = vpack.c.b16 %v3721, %v3720
      %v3824 = vpack.c.b16 %v3723, %v3722
      %v3825 = vpack.c.b16 %v3725, %v3724
      %v3826 = vpack.c.b16 %v3727, %v3726
      %v3827 = vpack.c.b16 %v3729, %v3728
      %v3828 = vpack.c.b16 %v3731, %v3730
      %v3829 = vpack.c.b16 %v3733, %v3732
      %v3830 = vpack.c.b16 %v3735, %v3734
      %v3831 = vpack.c.b16 %v3737, %v3736
      %v3832 = vpack.c.b16 %v3739, %v3738
      %v3833 = vpack.c.b16 %v3741, %v3740
      %v3834 = vpack.c.b16 %v3743, %v3742
      %v3835 = vpack.c.b16 %v3745, %v3744
      %v3836 = vpack.c.b16 %v3747, %v3746
      %v3837 = vpack.c.b16 %v3749, %v3748
      %v3838 = vpack.c.b16 %v3751, %v3750
      %v3839 = vpack.c.b16 %v3753, %v3752
      %v3840 = vpack.c.b16 %v3755, %v3754
      %v3841 = vpack.c.b16 %v3757, %v3756
      %v3842 = vpack.c.b16 %v3759, %v3758
      %v3843 = vpack.c.b16 %v3761, %v3760
      %v3844 = vpack.c.b16 %v3763, %v3762
      %v3845 = vpack.c.b16 %v3765, %v3764
      %v3846 = vpack.c.b16 %v3767, %v3766
      %v3847 = vpack.c.b16 %v3769, %v3768
      %v3848 = vpack.c.b16 %v3771, %v3770
      %v3849 = vpack.c.b16 %v3773, %v3772
      %v3850 = vpack.c.b16 %v3775, %v3774
      %v3851 = vpack.c.b16 %v3777, %v3776
      %v3852 = vpack.c.b16 %v3779, %v3778
      %v3853 = vpack.c.b16 %v3781, %v3780
      %v3854 = vpack.c.b16 %v3783, %v3782
      %v3855 = vpack.c.b16 %v3785, %v3784
      %v3856 = vpack.c.b16 %v3787, %v3786
      %v3857 = vpack.c.b16 %v3789, %v3788
      %v3858 = vpack.c.b16 %v3791, %v3790
      %v3859 = vpack.c.b16 %v3793, %v3792
      %v3860 = vpack.c.b16 %v3795, %v3794
      %v3861 = vpack.c.b16 %v3797, %v3796
      %v3864 = vsel %vm1139, %v3798, 1065369472
      %v3867 = vsel %vm1139, %v3799, 1065369472
      %v3870 = vsel %vm1139, %v3800, 1065369472
      %v3873 = vsel %vm1139, %v3801, 1065369472
      %v3876 = vsel %vm1139, %v3802, 1065369472
      %v3879 = vsel %vm1139, %v3803, 1065369472
      %v3882 = vsel %vm1139, %v3804, 1065369472
      %v3885 = vsel %vm1139, %v3805, 1065369472
      %v3888 = vsel %vm1139, %v3806, 1065369472
      %v3891 = vsel %vm1139, %v3807, 1065369472
      %v3894 = vsel %vm1139, %v3808, 1065369472
      %v3897 = vsel %vm1139, %v3809, 1065369472
      %v3900 = vsel %vm1139, %v3810, 1065369472
      %v3903 = vsel %vm1139, %v3811, 1065369472
      %v3906 = vsel %vm1139, %v3812, 1065369472
      %v3909 = vsel %vm1139, %v3813, 1065369472
      %v3912 = vsel %vm1139, %v3814, 1065369472
      %v3915 = vsel %vm1139, %v3815, 1065369472
      %v3918 = vsel %vm1139, %v3816, 1065369472
      %v3921 = vsel %vm1139, %v3817, 1065369472
      %v3924 = vsel %vm1139, %v3818, 1065369472
      %v3927 = vsel %vm1139, %v3819, 1065369472
      %v3930 = vsel %vm1139, %v3820, 1065369472
      %v3933 = vsel %vm1139, %v3821, 1065369472
      %v3936 = vsel %vm1139, %v3822, 1065369472
      %v3939 = vsel %vm1139, %v3823, 1065369472
      %v3942 = vsel %vm1139, %v3824, 1065369472
      %v3945 = vsel %vm1139, %v3825, 1065369472
      %v3948 = vsel %vm1139, %v3826, 1065369472
      %v3951 = vsel %vm1139, %v3827, 1065369472
      %v3954 = vsel %vm1139, %v3828, 1065369472
      %v3957 = vsel %vm1139, %v3829, 1065369472
      %v3960 = vsel %vm1139, %v3830, 1065369472
      %v3963 = vsel %vm1139, %v3831, 1065369472
      %v3966 = vsel %vm1139, %v3832, 1065369472
      %v3969 = vsel %vm1139, %v3833, 1065369472
      %v3972 = vsel %vm1139, %v3834, 1065369472
      %v3975 = vsel %vm1139, %v3835, 1065369472
      %v3978 = vsel %vm1139, %v3836, 1065369472
      %v3981 = vsel %vm1139, %v3837, 1065369472
      %v3984 = vsel %vm1139, %v3838, 1065369472
      %v3987 = vsel %vm1139, %v3839, 1065369472
      %v3990 = vsel %vm1139, %v3840, 1065369472
      %v3993 = vsel %vm1139, %v3841, 1065369472
      %v3996 = vsel %vm1139, %v3842, 1065369472
      %v3999 = vsel %vm1139, %v3843, 1065369472
      %v4002 = vsel %vm1139, %v3844, 1065369472
      %v4005 = vsel %vm1139, %v3845, 1065369472
      %v4008 = vsel %vm1139, %v3846, 1065369472
      %v4011 = vsel %vm1139, %v3847, 1065369472
      %v4014 = vsel %vm1139, %v3848, 1065369472
      %v4017 = vsel %vm1139, %v3849, 1065369472
      %v4020 = vsel %vm1139, %v3850, 1065369472
      %v4023 = vsel %vm1139, %v3851, 1065369472
      %v4026 = vsel %vm1139, %v3852, 1065369472
      %v4029 = vsel %vm1139, %v3853, 1065369472
      %v4032 = vsel %vm1139, %v3854, 1065369472
      %v4035 = vsel %vm1139, %v3855, 1065369472
      %v4038 = vsel %vm1139, %v3856, 1065369472
      %v4041 = vsel %vm1139, %v3857, 1065369472
      %v4044 = vsel %vm1139, %v3858, 1065369472
      %v4047 = vsel %vm1139, %v3859, 1065369472
      %v4050 = vsel %vm1139, %v3860, 1065369472
      %v4053 = vsel %vm1139, %v3861, 1065369472
      %v4055 = vld [vmem:[#allocation2] sm:$0xff]
      %4056 = vmatpush.bf16.msra.mxu0 %v3885
      %4057 = vmatpush.bf16.msra.mxu0 %v3882
      %4058 = vmatpush.bf16.msra.mxu0 %v3879
      %4059 = vmatpush.bf16.msra.mxu0 %v3876
      %4060 = vmatpush.bf16.msra.mxu0 %v3873
      %4061 = vmatpush.bf16.msra.mxu0 %v3870
      %4062 = vmatpush.bf16.msra.mxu0 %v3867
      %4063 = vmatpush.bf16.msra.mxu0 %v3864
      %4064 = vmatmul.bf16.gmra.mxu0 %v3406
      %v4065 = vpop.f32.mrf.mxu0
      %v4066 = vadd.f32 0.0, %v4065
      %v4067 = vpop.f32.mrf.mxu0
      %4068 = vdwg.mxu0
      %4069 = vmatpush.bf16.msra.mxu0 %v3909
      %4070 = vmatpush.bf16.msra.mxu0 %v3906
      %4071 = vmatpush.bf16.msra.mxu0 %v3903
      %4072 = vmatpush.bf16.msra.mxu0 %v3900
      %4073 = vmatpush.bf16.msra.mxu0 %v3897
      %4074 = vmatpush.bf16.msra.mxu0 %v3894
      %4075 = vmatpush.bf16.msra.mxu0 %v3891
      %4076 = vmatpush.bf16.msra.mxu0 %v3888
      %4077 = vmatmul.bf16.gmra.mxu0 %v3407
      %v4078 = vpop.f32.mrf.mxu0
      %v4079 = vadd.f32 %v4066, %v4078
      %v4080 = vpop.f32.mrf.mxu0
      %4081 = vdwg.mxu0
      %4082 = vmatpush.bf16.msra.mxu0 %v3933
      %4083 = vmatpush.bf16.msra.mxu0 %v3930
      %4084 = vmatpush.bf16.msra.mxu0 %v3927
      %4085 = vmatpush.bf16.msra.mxu0 %v3924
      %4086 = vmatpush.bf16.msra.mxu0 %v3921
      %4087 = vmatpush.bf16.msra.mxu0 %v3918
      %4088 = vmatpush.bf16.msra.mxu0 %v3915
      %4089 = vmatpush.bf16.msra.mxu0 %v3912
      %4090 = vmatmul.bf16.gmra.mxu0 %v3408
      %v4091 = vpop.f32.mrf.mxu0
      %v4092 = vadd.f32 %v4079, %v4091
      %v4093 = vpop.f32.mrf.mxu0
      %4094 = vdwg.mxu0
      %4095 = vmatpush.bf16.msra.mxu0 %v3957
      %4096 = vmatpush.bf16.msra.mxu0 %v3954
      %4097 = vmatpush.bf16.msra.mxu0 %v3951
      %4098 = vmatpush.bf16.msra.mxu0 %v3948
      %4099 = vmatpush.bf16.msra.mxu0 %v3945
      %4100 = vmatpush.bf16.msra.mxu0 %v3942
      %4101 = vmatpush.bf16.msra.mxu0 %v3939
      %4102 = vmatpush.bf16.msra.mxu0 %v3936
      %4103 = vmatmul.bf16.gmra.mxu0 %v3409
      %v4104 = vpop.f32.mrf.mxu0
      %v4105 = vadd.f32 %v4092, %v4104
      %v4106 = vpop.f32.mrf.mxu0
      %4107 = vdwg.mxu0
      %4108 = vmatpush.bf16.msra.mxu0 %v3981
      %4109 = vmatpush.bf16.msra.mxu0 %v3978
      %4110 = vmatpush.bf16.msra.mxu0 %v3975
      %4111 = vmatpush.bf16.msra.mxu0 %v3972
      %4112 = vmatpush.bf16.msra.mxu0 %v3969
      %4113 = vmatpush.bf16.msra.mxu0 %v3966
      %4114 = vmatpush.bf16.msra.mxu0 %v3963
      %4115 = vmatpush.bf16.msra.mxu0 %v3960
      %4116 = vmatmul.bf16.gmra.mxu0 %v3410
      %v4117 = vpop.f32.mrf.mxu0
      %v4118 = vadd.f32 %v4105, %v4117
      %v4119 = vpop.f32.mrf.mxu0
      %4120 = vdwg.mxu0
      %4121 = vmatpush.bf16.msra.mxu0 %v4005
      %4122 = vmatpush.bf16.msra.mxu0 %v4002
      %4123 = vmatpush.bf16.msra.mxu0 %v3999
      %4124 = vmatpush.bf16.msra.mxu0 %v3996
      %4125 = vmatpush.bf16.msra.mxu0 %v3993
      %4126 = vmatpush.bf16.msra.mxu0 %v3990
      %4127 = vmatpush.bf16.msra.mxu0 %v3987
      %4128 = vmatpush.bf16.msra.mxu0 %v3984
      %4129 = vmatmul.bf16.gmra.mxu0 %v3411
      %v4130 = vpop.f32.mrf.mxu0
      %v4131 = vadd.f32 %v4118, %v4130
      %v4132 = vpop.f32.mrf.mxu0
      %4133 = vdwg.mxu0
      %4134 = vmatpush.bf16.msra.mxu0 %v4029
      %4135 = vmatpush.bf16.msra.mxu0 %v4026
      %4136 = vmatpush.bf16.msra.mxu0 %v4023
      %4137 = vmatpush.bf16.msra.mxu0 %v4020
      %4138 = vmatpush.bf16.msra.mxu0 %v4017
      %4139 = vmatpush.bf16.msra.mxu0 %v4014
      %4140 = vmatpush.bf16.msra.mxu0 %v4011
      %4141 = vmatpush.bf16.msra.mxu0 %v4008
      %4142 = vmatmul.bf16.gmra.mxu0 %v3412
      %v4143 = vpop.f32.mrf.mxu0
      %v4144 = vadd.f32 %v4131, %v4143
      %v4145 = vpop.f32.mrf.mxu0
      %4146 = vdwg.mxu0
      %4147 = vmatpush.bf16.msra.mxu0 %v4053
      %4148 = vmatpush.bf16.msra.mxu0 %v4050
      %4149 = vmatpush.bf16.msra.mxu0 %v4047
      %4150 = vmatpush.bf16.msra.mxu0 %v4044
      %4151 = vmatpush.bf16.msra.mxu0 %v4041
      %4152 = vmatpush.bf16.msra.mxu0 %v4038
      %4153 = vmatpush.bf16.msra.mxu0 %v4035
      %4154 = vmatpush.bf16.msra.mxu0 %v4032
      %4155 = vmatmul.bf16.gmra.mxu0 %v3413
      %v4156 = vpop.f32.mrf.mxu0
      %v4157 = vadd.f32 %v4144, %v4156
      %v4158 = vpop.f32.mrf.mxu0
      %4159 = vdwg.mxu0
      %v4160 = vadd.f32 %v4055, %v4157
      %vm4161 = vcmask 269312
      %4162 = vst.msk [vmem:[#allocation2] sm:$0xff] %vm4161, %v4160
      // Predicated region
      $region81: #{node_encoder_forward.1} parent=75 // pred_check
        %p4163 = pneg %p540
      $region82: #{node_encoder_forward.1} parent=75 // pred_check_branch
        %4165 = sbr.rel (%p4163) target = $region84
      $region83: #{node_encoder_forward.1} parent=75 // pred_region
        %v4166 = vld [vmem:[#allocation2] sm:$0xff]
        %v4167 = vmax.f32 %v4166, 1.0
        %v4168 = vrcp.pop %v4167
        %4170 = vset.pattern.permute.xlu0 32
        %4171 = vperm.xlu0 %4170, %v4168
        %v4172 = vpop.permute.xlu0 %4171
        %v4174 = vmul.f32 %v4166, %v4172
        %vm4175 = vcmp.gt.f32.partialorder %v4166, 0.0
        %v4176 = vld [vmem:[%s8] sm:$0x1]
        %v4177 = vsel %vm4175, 1, 0
        %4178 = vset.pattern.permute.xlu0 32
        %4179 = vperm.xlu0 %4178, %v4177
        %v4180 = vpop.permute.xlu0 %4179
        %vm4181 = vcmp.eq.s32.totalorder %v4180, 1
        %v4183 = vperm.slane %v4176, 0
        %v4185 = vsel %vm4181, %v4183, 0.0
        %v4186 = vadd.f32 %v4174, %v4185
        %v4187 = vld [vmem:[%s533] sm:$0xff]
        %v4188 = vld [vmem:[%s9] sm:$0xf]
        %v4189 = vld [vmem:[%s10] sm:$0xff]
        %v4190 = vld [vmem:[%s10 + $0x8] sm:$0xff]
        %v4191 = vld [vmem:[%s10 + $0x10] sm:$0xff]
        %v4192 = vld [vmem:[%s10 + $0x18] sm:$0xff]
        %v4194 = vsel %vm1139, %v4186, 0
        %4196 = vmatpush.msra.mxu0 0.0
        %4197 = vmatpush.msra.mxu0 0.0
        %4198 = vmatpush.msra.mxu0 0.0
        %4199 = vmatpush.msra.mxu0 0.0
        %4200 = vmatpush.msra.mxu0 0.0
        %4201 = vmatpush.msra.mxu0 0.0
        %4202 = vmatpush.msra.mxu0 0.0
        %4203 = vmatpush.msra.mxu0 0.0
        %4204 = vmatpush.msra.mxu0 0.0
        %4205 = vmatpush.msra.mxu0 0.0
        %4206 = vmatpush.msra.mxu0 0.0
        %4207 = vmatpush.msra.mxu0 0.0
        %4208 = vmatpush.msra.mxu0 %v4192
        %4209 = vmatpush.msra.mxu0 %v4191
        %4210 = vmatpush.msra.mxu0 %v4190
        %4211 = vmatpush.msra.mxu0 %v4189
        %4212 = vmatmul.f32.gmra.mxu0 %v4194
        %v4213 = vpop.f32.mrf.mxu0
        %v4214 = vadd.f32 0.0, %v4213
        %4215 = vdwg.mxu0
        %v4217 = vsel %vm1981, %v4187, 0
        %vm4219 = vcmask 1043456
        %v4221 = vsel %vm4219, %v4188, 0
        %4223 = vmatpush.msra.mxu0 0.0
        %4224 = vmatpush.msra.mxu0 0.0
        %4225 = vmatpush.msra.mxu0 0.0
        %4226 = vmatpush.msra.mxu0 0.0
        %4227 = vmatpush.msra.mxu0 0.0
        %4228 = vmatpush.msra.mxu0 0.0
        %4229 = vmatpush.msra.mxu0 0.0
        %4230 = vmatpush.msra.mxu0 0.0
        %4231 = vmatpush.msra.mxu0 0.0
        %4232 = vmatpush.msra.mxu0 0.0
        %4233 = vmatpush.msra.mxu0 0.0
        %4234 = vmatpush.msra.mxu0 0.0
        %4235 = vmatpush.msra.mxu0 0.0
        %4236 = vmatpush.msra.mxu0 0.0
        %4237 = vmatpush.msra.mxu0 0.0
        %4238 = vmatpush.msra.mxu0 %v4221
        %4239 = vmatmul.f32.gmra.mxu0 %v4217
        %v4240 = vpop.f32.mrf.mxu0
        %v4241 = vadd.f32 %v4214, %v4240
        %4242 = vdwg.mxu0
        %v4243 = vld [vmem:[%s11] sm:$0x1]
        %v4245 = vperm.slane %v4243, 0
        %v4247 = vadd.f32 %v4241, %v4245
        %v4248 = vmax.f32 %v4247, 0.0
        %v4249 = vld [vmem:[%s12] sm:$0xff]
        %v4250 = vld [vmem:[%s12 + $0x8] sm:$0xff]
        %v4251 = vld [vmem:[%s12 + $0x10] sm:$0xff]
        %v4252 = vld [vmem:[%s12 + $0x18] sm:$0xff]
        %v4253 = vld [vmem:[%s13] sm:$0x1]
        %v4255 = vperm.slane %v4253, 0
        %v4258 = vsel %vm1139, %v4248, 0
        %4260 = vmatpush.msra.mxu0 0.0
        %4261 = vmatpush.msra.mxu0 0.0
        %4262 = vmatpush.msra.mxu0 0.0
        %4263 = vmatpush.msra.mxu0 0.0
        %4264 = vmatpush.msra.mxu0 0.0
        %4265 = vmatpush.msra.mxu0 0.0
        %4266 = vmatpush.msra.mxu0 0.0
        %4267 = vmatpush.msra.mxu0 0.0
        %4268 = vmatpush.msra.mxu0 0.0
        %4269 = vmatpush.msra.mxu0 0.0
        %4270 = vmatpush.msra.mxu0 0.0
        %4271 = vmatpush.msra.mxu0 0.0
        %4272 = vmatpush.msra.mxu0 %v4252
        %4273 = vmatpush.msra.mxu0 %v4251
        %4274 = vmatpush.msra.mxu0 %v4250
        %4275 = vmatpush.msra.mxu0 %v4249
        %4276 = vmatmul.f32.gmra.mxu0 %v4258
        %v4277 = vpop.f32.mrf.mxu0
        %v4278 = vadd.f32 %v4255, %v4277
        %4279 = vdwg.mxu0
        %vm4280 = vcmask 15360
        %4281 = vst.msk [vmem:[%s537] sm:$0xff] %vm4280, %v4278
      $region84: #{node_encoder_forward.1} parent=75 // pred_fallthru
        _
      %p4282 = scmp.lt.s32.totalorder %s29, 1
      %s4283 = scalar_select %p4282, %s29, 1
      %s4284 = smul.addr %s4283, 8
      %s4285 = scalar_lea.vmem %s14, %s4284
      // Predicated region
      $region85: #{node_encoder_forward.1} parent=75 // pred_check
        %p4286 = pneg %p369
      $region86: #{node_encoder_forward.1} parent=75 // pred_check_branch
        %4288 = sbr.rel (%p4286) target = $region88
      $region87: #{node_encoder_forward.1} parent=75 // pred_region
        _
      $region88: #{node_encoder_forward.1} parent=75 // pred_fallthru
        _
    $region76: #{node_encoder_forward.1} parent=5 // pred_fallthru
      _
    %p4289 = scmp.le.s32.totalorder 2, %s20
    // Predicated region
    $region89: #{node_encoder_forward.1} parent=5 // pred_check
      %p4290 = pneg %p4289
    $region90: #{node_encoder_forward.1} parent=5 // pred_check_branch
      %4292 = sbr.rel (%p4290) target = $region92
    $region91: #{node_encoder_forward.1} parent=5 // pred_region
      %s4293 = ssub.s32 %s20, 2
      // Predicated region
      $region93: #{node_encoder_forward.1} parent=91 // pred_check
        %p4294 = pneg %p375
      $region94: #{node_encoder_forward.1} parent=91 // pred_check_branch
        %4296 = sbr.rel (%p4294) target = $region96
      $region95: #{node_encoder_forward.1} parent=91 // pred_region
        %p4297 = scmp.lt.s32.totalorder %s31, 1
        %s4298 = scalar_select %p4297, %s31, 1
        %s4299 = smul.addr %s4298, 8
        %s4300 = scalar_lea.vmem %s14, %s4299
      $region96: #{node_encoder_forward.1} parent=91 // pred_fallthru
        _
    $region92: #{node_encoder_forward.1} parent=5 // pred_fallthru
      _
  $region6: #{node_encoder_forward.1} parent=0 // loop_footer
    %s24 = sadd.s32 1, %s20
  $region7: #{node_encoder_forward.1} parent=0 // loop_footer_branch
    %19 = sbr.rel target = $region3
  $region8: #{node_encoder_forward.1} parent=0 // loop_exit
    _

</llo_original>
